<compile_context>
chip_gen: v7x
topology: tpu7x:2x2x1
jax: 0.10.0
libtpu: 0.0.40
codegen_flags: <defaults>
</compile_context>

<pallas_src>
import functools
import math

import jax
import jax.numpy as jnp
from jax.experimental import pallas as pl
from jax.experimental.pallas import tpu as pltpu


# ----------------------------- helpers -----------------------------

def _layernorm_f32(y, gamma, beta, eps):
    mu = jnp.mean(y, axis=-1, keepdims=True)
    var = jnp.mean(jnp.square(y - mu), axis=-1, keepdims=True)
    y = (y - mu) * jax.lax.rsqrt(var + eps)
    return y * gamma + beta


def _vmem_limit_bytes():
    # Raise the scoped-VMEM limit above the 16/32 MiB defaults (double-buffered
    # layer weights + f32 GELU intermediates need it at BERT-base shapes), while
    # staying below physical VMEM (64 MiB on v7x).
    try:
        cap = int(pltpu.get_tpu_info().vmem_capacity_bytes)
    except Exception:
        cap = 64 * 1024 * 1024
    return int(min(cap - (8 << 20), 100 << 20))


# ----------------------------- fused encoder kernel -----------------------------

def _encoder_layer_kernel(x_ref, bias_ref, embg_ref, embb_ref,
                          wqkv_ref, bqkv_ref, wo_ref, bo_ref, g1_ref, b1_ref,
                          wi_ref, bi_ref, wo2_ref, bo2_ref, g2_ref, b2_ref,
                          o_ref, h_ref, ctx_ref, *, nh, eps):
    """One BERT layer per grid step l; activations resident in h_ref (VMEM)."""
    l = pl.program_id(0)
    n_layers = pl.num_programs(0)
    B, S, H = h_ref.shape
    d = H // nh

    # ---- layer-0 prologue: embedding LayerNorm, load activations into VMEM ----
    @pl.when(l == 0)
    def _():
        g = embg_ref[...].astype(jnp.float32)
        bt = embb_ref[...].astype(jnp.float32)
        for b in range(B):
            x = x_ref[b].astype(jnp.float32)
            h_ref[b] = _layernorm_f32(x, g, bt, eps).astype(h_ref.dtype)

    # Per-layer parameters (DMA'd per grid step; next layer's are prefetched
    # by the BlockSpec pipeline while this layer computes).
    wqkv = wqkv_ref[0]
    bqkv = bqkv_ref[0].astype(jnp.float32)
    wo = wo_ref[0]
    bo = bo_ref[0].astype(jnp.float32)
    g1 = g1_ref[0].astype(jnp.float32)
    b1 = b1_ref[0].astype(jnp.float32)
    wi = wi_ref[0]
    bi = bi_ref[0].astype(jnp.float32)
    wo2 = wo2_ref[0]
    bo2 = bo2_ref[0].astype(jnp.float32)
    g2 = g2_ref[0].astype(jnp.float32)
    b2 = b2_ref[0].astype(jnp.float32)

    for b in range(B):
        x_in = h_ref[b]                                   # (S, H) bf16, resident
        bias_b = bias_ref[b]                              # (1, S) additive mask

        # Fused QKV projection; 1/sqrt(d) already folded into the Q columns.
        qkv = jnp.dot(x_in, wqkv, preferred_element_type=jnp.float32)
        qkv = (qkv + bqkv).astype(jnp.bfloat16)           # (S, 3H)

        # All heads split with lane slices; contexts written into a VMEM scratch
        # slab (no jnp.concatenate -> no extra (S,H) f32 copy).
        for h_i in range(nh):
            q = qkv[:, h_i * d:(h_i + 1) * d]
            k = qkv[:, H + h_i * d:H + (h_i + 1) * d]
            v = qkv[:, 2 * H + h_i * d:2 * H + (h_i + 1) * d]
            s = jnp.dot(q, k.T, preferred_element_type=jnp.float32) + bias_b
            s = s - jnp.max(s, axis=-1, keepdims=True)
            p = jnp.exp(s)
            p = p * pl.reciprocal(jnp.sum(p, axis=-1, keepdims=True), approx=True)
            ctx = jnp.dot(p.astype(jnp.bfloat16), v,
                          preferred_element_type=jnp.float32)
            ctx_ref[:, h_i * d:(h_i + 1) * d] = ctx.astype(ctx_ref.dtype)

        # Attention output projection + residual + LayerNorm (f32 statistics).
        attn = jnp.dot(ctx_ref[...], wo, preferred_element_type=jnp.float32)
        attn = attn + bo + x_in.astype(jnp.float32)       # residual fused in
        h1 = _layernorm_f32(attn, g1, b1, eps)
        h1_bf = h1.astype(jnp.bfloat16)

        # FFN: GELU dense + down-proj + residual + LayerNorm.
        inter = jnp.dot(h1_bf, wi, preferred_element_type=jnp.float32) + bi
        # tanh GELU runs on the EUP slot and overlaps the MXU-bound down-proj;
        # use approximate=False for bit-level HF (erf) parity.
        inter = jax.nn.gelu(inter, approximate=True)
        y = jnp.dot(inter.astype(wo2.dtype), wo2,
                    preferred_element_type=jnp.float32)
        y = _layernorm_f32(y + bo2 + h1, g2, b2, eps)
        h_ref[b] = y.astype(h_ref.dtype)

    # ---- final-layer epilogue: single HBM writeback of the activation slab ----
    @pl.when(l == n_layers - 1)
    def _():
        o_ref[...] = h_ref[...]


def bert_encoder(emb, bias, emb_ln_g, emb_ln_b, stacked, *, nh, eps=1e-12):
    """emb: (B,S,H) bf16; bias: (B,1,S) f32 additive mask; stacked: per-layer
    weights stacked along a leading L axis.  Returns (B,S,H) bf16."""
    B, S, H = emb.shape
    L = stacked["wqkv"].shape[0]
    I = stacked["wi"].shape[-1]

    const3 = lambda l: (0, 0, 0)
    const2 = lambda l: (0, 0)
    layer3 = lambda l: (l, 0, 0)

    return pl.pallas_call(
        functools.partial(_encoder_layer_kernel, nh=nh, eps=eps),
        out_shape=jax.ShapeDtypeStruct((B, S, H), jnp.bfloat16),
        grid=(L,),
        in_specs=[
            pl.BlockSpec((B, S, H), const3),          # embeddings (read at l==0)
            pl.BlockSpec((B, 1, S), const3),          # additive attention mask
            pl.BlockSpec((1, H), const2),             # embedding LN gamma
            pl.BlockSpec((1, H), const2),             # embedding LN beta
            pl.BlockSpec((1, H, 3 * H), layer3),      # wqkv (l-indexed => prefetched)
            pl.BlockSpec((1, 1, 3 * H), layer3),      # bqkv
            pl.BlockSpec((1, H, H), layer3),          # wo
            pl.BlockSpec((1, 1, H), layer3),          # bo
            pl.BlockSpec((1, 1, H), layer3),          # ln1 gamma
            pl.BlockSpec((1, 1, H), layer3),          # ln1 beta
            pl.BlockSpec((1, H, I), layer3),          # wi
            pl.BlockSpec((1, 1, I), layer3),          # bi
            pl.BlockSpec((1, I, H), layer3),          # wo2
            pl.BlockSpec((1, 1, H), layer3),          # bo2
            pl.BlockSpec((1, 1, H), layer3),          # ln2 gamma
            pl.BlockSpec((1, 1, H), layer3),          # ln2 beta
        ],
        out_specs=pl.BlockSpec((B, S, H), const3),
        scratch_shapes=[
            pltpu.VMEM((B, S, H), jnp.bfloat16),      # resident activation slab
            pltpu.VMEM((S, H), jnp.bfloat16),         # per-head context scratch
        ],
        compiler_params=pltpu.CompilerParams(
            dimension_semantics=("arbitrary",),
            vmem_limit_bytes=_vmem_limit_bytes(),
        ),
    )(emb, bias, emb_ln_g.reshape(1, H), emb_ln_b.reshape(1, H),
      stacked["wqkv"], stacked["bqkv"], stacked["wo"], stacked["bo"],
      stacked["ln1_g"], stacked["ln1_b"], stacked["wi"], stacked["bi"],
      stacked["wo2"], stacked["bo2"], stacked["ln2_g"], stacked["ln2_b"])


# ----------------------------- parameters & glue -----------------------------

def init_params(key, cfg):
    H, I = cfg["hidden"], cfg["inter"]
    keys = iter(jax.random.split(key, 64))

    def nrm(shape):
        return (0.02 * jax.random.normal(next(keys), shape, dtype=jnp.float32)
                ).astype(jnp.bfloat16)

    def zeros(shape):
        return jnp.zeros(shape, jnp.bfloat16)

    def ones(shape):
        return jnp.ones(shape, jnp.bfloat16)

    params = dict(
        word_emb=nrm((cfg["vocab"], H)),
        pos_emb=nrm((cfg["max_pos"], H)),
        type_emb=nrm((cfg["type_vocab"], H)),
        emb_ln_g=ones((H,)), emb_ln_b=zeros((H,)),
        pool_w=nrm((H, H)), pool_b=zeros((H,)),
        layers=[],
    )
    for _ in range(cfg["n_layers"]):
        params["layers"].append(dict(
            wqkv=nrm((H, 3 * H)), bqkv=zeros((3 * H,)),      # fused Q/K/V
            wo=nrm((H, H)), bo=zeros((H,)),
            ln1_g=ones((H,)), ln1_b=zeros((H,)),
            wi=nrm((H, I)), bi=zeros((I,)),
            wo2=nrm((I, H)), bo2=zeros((H,)),
            ln2_g=ones((H,)), ln2_b=zeros((H,)),
        ))
    return params


def _stack_layer_params(layers, *, nh):
    """Stack per-layer weights along a leading L axis; fold 1/sqrt(d) into Q."""
    L = len(layers)
    H = layers[0]["wqkv"].shape[0]
    I = layers[0]["wi"].shape[1]
    scale = 1.0 / math.sqrt(H // nh)

    def stack(name):
        return jnp.stack([lp[name] for lp in layers])

    wqkv = stack("wqkv").astype(jnp.float32)
    bqkv = stack("bqkv").astype(jnp.float32)
    wqkv = wqkv.at[:, :, :H].multiply(scale).astype(jnp.bfloat16)
    bqkv = bqkv.at[:, :H].multiply(scale).astype(jnp.bfloat16)

    return dict(
        wqkv=wqkv,                                   # (L, H, 3H)
        bqkv=bqkv.reshape(L, 1, 3 * H),
        wo=stack("wo"),                              # (L, H, H)
        bo=stack("bo").reshape(L, 1, H),
        ln1_g=stack("ln1_g").reshape(L, 1, H),
        ln1_b=stack("ln1_b").reshape(L, 1, H),
        wi=stack("wi"),                              # (L, H, I)
        bi=stack("bi").reshape(L, 1, I),
        wo2=stack("wo2"),                            # (L, I, H)
        bo2=stack("bo2").reshape(L, 1, H),
        ln2_g=stack("ln2_g").reshape(L, 1, H),
        ln2_b=stack("ln2_b").reshape(L, 1, H),
    )


def sent_bert_forward(params, input_ids, attention_mask, token_type_ids, cfg):
    B, S = input_ids.shape
    H = cfg["hidden"]
    nh = cfg["n_heads"]

    # ---- embeddings: gathers (XLA glue), summed in f32, LN fused into layer 0 ----
    pos_ids = jnp.arange(S, dtype=jnp.int32)[None, :]
    emb = (jnp.take(params["word_emb"], input_ids, axis=0).astype(jnp.float32)
           + jnp.take(params["pos_emb"], pos_ids, axis=0).astype(jnp.float32)
           + jnp.take(params["type_emb"], token_type_ids, axis=0).astype(jnp.float32))
    emb = emb.astype(jnp.bfloat16)

    # ---- extended attention mask: single (B, 1, S) additive bias ----
    bias = ((1.0 - attention_mask.astype(jnp.float32)) * -10000.0)[:, None, :]

    # ---- full encoder in one pallas_call (layer index = grid axis) ----
    stacked = _stack_layer_params(params["layers"], nh=nh)
    h = bert_encoder(emb, bias, params["emb_ln_g"], params["emb_ln_b"],
                     stacked, nh=nh)

    # ---- pooler: tanh(dense([CLS])) — tiny matmul, plain XLA (no launch overhead) ----
    cls_tok = h[:, 0, :].astype(jnp.float32)
    pooled = jnp.tanh(cls_tok @ params["pool_w"].astype(jnp.float32)
                      + params["pool_b"].astype(jnp.float32))
    return pooled                                        # (B, H) f32 == pooler_output


# ----------------------------- main -----------------------------

if __name__ == "__main__":
    cfg = dict(vocab=100, hidden=32, n_layers=2, n_heads=4, inter=64,
               max_pos=16, type_vocab=2)
    B, S = 2, 8

    root = jax.random.PRNGKey(0)
    params = init_params(jax.random.fold_in(root, 0), cfg)

    # deterministic "tokenized" inputs (what text_to_batch_transformer produces)
    input_ids = jax.random.randint(jax.random.fold_in(root, 1), (B, S), 0,
                                   cfg["vocab"], dtype=jnp.int32)
    lengths = jnp.array([S, 5], dtype=jnp.int32)
    attention_mask = (jnp.arange(S)[None, :] < lengths[:, None]).astype(jnp.int32)
    token_type_ids = jnp.zeros((B, S), dtype=jnp.int32)
    # zero-out padded ids like the torch padding with [0]*(max_len - len)
    input_ids = input_ids * attention_mask

    fwd = jax.jit(functools.partial(sent_bert_forward, cfg=cfg))
    out = fwd(params, input_ids, attention_mask, token_type_ids)
    jax.block_until_ready(out)
    assert out.shape == (B, cfg["hidden"]) and out.dtype == jnp.float32
    assert bool(jnp.all(jnp.isfinite(out)))
    print("KERNEL_OK")
</pallas_src>

<mosaic_0001>
module attributes {stable_mosaic.version = 11 : i64} {
  func.func @_encoder_layer_kernel(%arg0: i32, %arg1: memref<2x8x32xbf16, #tpu.memory_space<vmem>>, %arg2: memref<2x1x8xf32, #tpu.memory_space<vmem>>, %arg3: memref<1x32xbf16, #tpu.memory_space<vmem>>, %arg4: memref<1x32xbf16, #tpu.memory_space<vmem>>, %arg5: memref<1x32x96xbf16, #tpu.memory_space<vmem>>, %arg6: memref<1x1x96xbf16, #tpu.memory_space<vmem>>, %arg7: memref<1x32x32xbf16, #tpu.memory_space<vmem>>, %arg8: memref<1x1x32xbf16, #tpu.memory_space<vmem>>, %arg9: memref<1x1x32xbf16, #tpu.memory_space<vmem>>, %arg10: memref<1x1x32xbf16, #tpu.memory_space<vmem>>, %arg11: memref<1x32x64xbf16, #tpu.memory_space<vmem>>, %arg12: memref<1x1x64xbf16, #tpu.memory_space<vmem>>, %arg13: memref<1x64x32xbf16, #tpu.memory_space<vmem>>, %arg14: memref<1x1x32xbf16, #tpu.memory_space<vmem>>, %arg15: memref<1x1x32xbf16, #tpu.memory_space<vmem>>, %arg16: memref<1x1x32xbf16, #tpu.memory_space<vmem>>, %arg17: memref<2x8x32xbf16, #tpu.memory_space<vmem>>, %arg18: memref<2x8x32xbf16, #tpu.memory_space<vmem>>, %arg19: memref<8x32xbf16, #tpu.memory_space<vmem>>) attributes {dimension_semantics = [#tpu.dimension_semantics<arbitrary>], iteration_bounds = array<i64: 2>, scalar_prefetch = 0 : i64, scratch_operands = 2 : i64, tpu.core_type = #tpu.core_type<tc>, window_params = [{pipeline_mode = #tpu.pipeline_mode<synchronous>, transform_indices = @transform_0, window_bounds = array<i64: 2, 8, 32>}, {pipeline_mode = #tpu.pipeline_mode<synchronous>, transform_indices = @transform_1, window_bounds = array<i64: 2, 1, 8>}, {pipeline_mode = #tpu.pipeline_mode<synchronous>, transform_indices = @transform_2, window_bounds = array<i64: 1, 32>}, {pipeline_mode = #tpu.pipeline_mode<synchronous>, transform_indices = @transform_3, window_bounds = array<i64: 1, 32>}, {transform_indices = @transform_4, window_bounds = array<i64: 1, 32, 96>}, {transform_indices = @transform_5, window_bounds = array<i64: 1, 1, 96>}, {transform_indices = @transform_6, window_bounds = array<i64: 1, 32, 32>}, {transform_indices = @transform_7, window_bounds = array<i64: 1, 1, 32>}, {transform_indices = @transform_8, window_bounds = array<i64: 1, 1, 32>}, {transform_indices = @transform_9, window_bounds = array<i64: 1, 1, 32>}, {transform_indices = @transform_10, window_bounds = array<i64: 1, 32, 64>}, {transform_indices = @transform_11, window_bounds = array<i64: 1, 1, 64>}, {transform_indices = @transform_12, window_bounds = array<i64: 1, 64, 32>}, {transform_indices = @transform_13, window_bounds = array<i64: 1, 1, 32>}, {transform_indices = @transform_14, window_bounds = array<i64: 1, 1, 32>}, {transform_indices = @transform_15, window_bounds = array<i64: 1, 1, 32>}, {pipeline_mode = #tpu.pipeline_mode<synchronous>, transform_indices = @transform_16, window_bounds = array<i64: 2, 8, 32>}]} {
    %c0_i32 = arith.constant 0 : i32
    %0 = arith.cmpi eq, %arg0, %c0_i32 : i32
    %1 = arith.extui %0 : i1 to i32
    %c0_i32_0 = arith.constant 0 : i32
    %2 = arith.cmpi ne, %1, %c0_i32_0 : i32
    scf.if %2 {
      %c0_138 = arith.constant 0 : index
      %c0_139 = arith.constant 0 : index
      %374 = vector.load %arg3[%c0_138, %c0_139] : memref<1x32xbf16, #tpu.memory_space<vmem>>, vector<1x32xbf16>
      %375 = arith.extf %374 : vector<1x32xbf16> to vector<1x32xf32>
      %c0_140 = arith.constant 0 : index
      %c0_141 = arith.constant 0 : index
      %376 = vector.load %arg4[%c0_140, %c0_141] : memref<1x32xbf16, #tpu.memory_space<vmem>>, vector<1x32xbf16>
      %377 = arith.extf %376 : vector<1x32xbf16> to vector<1x32xf32>
      %c0_142 = arith.constant 0 : index
      %c0_143 = arith.constant 0 : index
      %c0_144 = arith.constant 0 : index
      %378 = vector.load %arg1[%c0_142, %c0_143, %c0_144] : memref<2x8x32xbf16, #tpu.memory_space<vmem>>, vector<1x8x32xbf16>
      %379 = vector.shape_cast %378 : vector<1x8x32xbf16> to vector<8x32xbf16>
      %380 = arith.extf %379 : vector<8x32xbf16> to vector<8x32xf32>
      %cst_145 = arith.constant dense<0.000000e+00> : vector<8xf32>
      %381 = vector.multi_reduction <add>, %380, %cst_145 [1] : vector<8x32xf32> to vector<8xf32>
      %382 = vector.shape_cast %381 : vector<8xf32> to vector<8x1xf32>
      %cst_146 = arith.constant 3.200000e+01 : f32
      %383 = vector.broadcast %cst_146 : f32 to vector<8x1xf32>
      %384 = arith.divf %382, %383 : vector<8x1xf32>
      %385 = vector.broadcast %384 : vector<8x1xf32> to vector<8x32xf32>
      %386 = arith.subf %380, %385 : vector<8x32xf32>
      %387 = arith.mulf %386, %386 : vector<8x32xf32>
      %cst_147 = arith.constant dense<0.000000e+00> : vector<8xf32>
      %388 = vector.multi_reduction <add>, %387, %cst_147 [1] : vector<8x32xf32> to vector<8xf32>
      %389 = vector.shape_cast %388 : vector<8xf32> to vector<8x1xf32>
      %cst_148 = arith.constant 3.200000e+01 : f32
      %390 = vector.broadcast %cst_148 : f32 to vector<8x1xf32>
      %391 = arith.divf %389, %390 : vector<8x1xf32>
      %392 = vector.broadcast %384 : vector<8x1xf32> to vector<8x32xf32>
      %393 = arith.subf %380, %392 : vector<8x32xf32>
      %cst_149 = arith.constant 9.99999996E-13 : f32
      %394 = vector.broadcast %cst_149 : f32 to vector<8x1xf32>
      %395 = arith.addf %391, %394 : vector<8x1xf32>
      %396 = math.rsqrt %395 : vector<8x1xf32>
      %397 = vector.broadcast %396 : vector<8x1xf32> to vector<8x32xf32>
      %398 = arith.mulf %393, %397 : vector<8x32xf32>
      %399 = vector.broadcast %375 : vector<1x32xf32> to vector<8x32xf32>
      %400 = arith.mulf %398, %399 : vector<8x32xf32>
      %401 = vector.broadcast %377 : vector<1x32xf32> to vector<8x32xf32>
      %402 = arith.addf %400, %401 : vector<8x32xf32>
      %403 = arith.truncf %402 : vector<8x32xf32> to vector<8x32xbf16>
      %c0_150 = arith.constant 0 : index
      %c0_151 = arith.constant 0 : index
      %c0_152 = arith.constant 0 : index
      %404 = vector.load %arg18[%c0_150, %c0_151, %c0_152] : memref<2x8x32xbf16, #tpu.memory_space<vmem>>, vector<1x8x32xbf16>
      %405 = vector.shape_cast %404 : vector<1x8x32xbf16> to vector<8x32xbf16>
      %406 = vector.shape_cast %403 : vector<8x32xbf16> to vector<1x8x32xbf16>
      tpu.vector_store %arg18[%c0_150, %c0_151, %c0_152], %406 {strides = array<i32>} : memref<2x8x32xbf16, #tpu.memory_space<vmem>>, vector<1x8x32xbf16>,
      %c1_153 = arith.constant 1 : index
      %c0_154 = arith.constant 0 : index
      %c0_155 = arith.constant 0 : index
      %407 = vector.load %arg1[%c1_153, %c0_154, %c0_155] : memref<2x8x32xbf16, #tpu.memory_space<vmem>>, vector<1x8x32xbf16>
      %408 = vector.shape_cast %407 : vector<1x8x32xbf16> to vector<8x32xbf16>
      %409 = arith.extf %408 : vector<8x32xbf16> to vector<8x32xf32>
      %cst_156 = arith.constant dense<0.000000e+00> : vector<8xf32>
      %410 = vector.multi_reduction <add>, %409, %cst_156 [1] : vector<8x32xf32> to vector<8xf32>
      %411 = vector.shape_cast %410 : vector<8xf32> to vector<8x1xf32>
      %cst_157 = arith.constant 3.200000e+01 : f32
      %412 = vector.broadcast %cst_157 : f32 to vector<8x1xf32>
      %413 = arith.divf %411, %412 : vector<8x1xf32>
      %414 = vector.broadcast %413 : vector<8x1xf32> to vector<8x32xf32>
      %415 = arith.subf %409, %414 : vector<8x32xf32>
      %416 = arith.mulf %415, %415 : vector<8x32xf32>
      %cst_158 = arith.constant dense<0.000000e+00> : vector<8xf32>
      %417 = vector.multi_reduction <add>, %416, %cst_158 [1] : vector<8x32xf32> to vector<8xf32>
      %418 = vector.shape_cast %417 : vector<8xf32> to vector<8x1xf32>
      %cst_159 = arith.constant 3.200000e+01 : f32
      %419 = vector.broadcast %cst_159 : f32 to vector<8x1xf32>
      %420 = arith.divf %418, %419 : vector<8x1xf32>
      %421 = vector.broadcast %413 : vector<8x1xf32> to vector<8x32xf32>
      %422 = arith.subf %409, %421 : vector<8x32xf32>
      %cst_160 = arith.constant 9.99999996E-13 : f32
      %423 = vector.broadcast %cst_160 : f32 to vector<8x1xf32>
      %424 = arith.addf %420, %423 : vector<8x1xf32>
      %425 = math.rsqrt %424 : vector<8x1xf32>
      %426 = vector.broadcast %425 : vector<8x1xf32> to vector<8x32xf32>
      %427 = arith.mulf %422, %426 : vector<8x32xf32>
      %428 = vector.broadcast %375 : vector<1x32xf32> to vector<8x32xf32>
      %429 = arith.mulf %427, %428 : vector<8x32xf32>
      %430 = vector.broadcast %377 : vector<1x32xf32> to vector<8x32xf32>
      %431 = arith.addf %429, %430 : vector<8x32xf32>
      %432 = arith.truncf %431 : vector<8x32xf32> to vector<8x32xbf16>
      %c1_161 = arith.constant 1 : index
      %c0_162 = arith.constant 0 : index
      %c0_163 = arith.constant 0 : index
      %433 = vector.load %arg18[%c1_161, %c0_162, %c0_163] : memref<2x8x32xbf16, #tpu.memory_space<vmem>>, vector<1x8x32xbf16>
      %434 = vector.shape_cast %433 : vector<1x8x32xbf16> to vector<8x32xbf16>
      %435 = vector.shape_cast %432 : vector<8x32xbf16> to vector<1x8x32xbf16>
      tpu.vector_store %arg18[%c1_161, %c0_162, %c0_163], %435 {strides = array<i32>} : memref<2x8x32xbf16, #tpu.memory_space<vmem>>, vector<1x8x32xbf16>,
    } else {
    }
    %c0 = arith.constant 0 : index
    %c0_1 = arith.constant 0 : index
    %c0_2 = arith.constant 0 : index
    %3 = vector.load %arg5[%c0, %c0_1, %c0_2] : memref<1x32x96xbf16, #tpu.memory_space<vmem>>, vector<1x32x96xbf16>
    %4 = vector.shape_cast %3 : vector<1x32x96xbf16> to vector<32x96xbf16>
    %c0_3 = arith.constant 0 : index
    %c0_4 = arith.constant 0 : index
    %c0_5 = arith.constant 0 : index
    %5 = vector.load %arg6[%c0_3, %c0_4, %c0_5] : memref<1x1x96xbf16, #tpu.memory_space<vmem>>, vector<1x1x96xbf16>
    %6 = vector.shape_cast %5 : vector<1x1x96xbf16> to vector<1x96xbf16>
    %7 = arith.extf %6 : vector<1x96xbf16> to vector<1x96xf32>
    %c0_6 = arith.constant 0 : index
    %c0_7 = arith.constant 0 : index
    %c0_8 = arith.constant 0 : index
    %8 = vector.load %arg7[%c0_6, %c0_7, %c0_8] : memref<1x32x32xbf16, #tpu.memory_space<vmem>>, vector<1x32x32xbf16>
    %9 = vector.shape_cast %8 : vector<1x32x32xbf16> to vector<32x32xbf16>
    %c0_9 = arith.constant 0 : index
    %c0_10 = arith.constant 0 : index
    %c0_11 = arith.constant 0 : index
    %10 = vector.load %arg8[%c0_9, %c0_10, %c0_11] : memref<1x1x32xbf16, #tpu.memory_space<vmem>>, vector<1x1x32xbf16>
    %11 = vector.shape_cast %10 : vector<1x1x32xbf16> to vector<1x32xbf16>
    %12 = arith.extf %11 : vector<1x32xbf16> to vector<1x32xf32>
    %c0_12 = arith.constant 0 : index
    %c0_13 = arith.constant 0 : index
    %c0_14 = arith.constant 0 : index
    %13 = vector.load %arg9[%c0_12, %c0_13, %c0_14] : memref<1x1x32xbf16, #tpu.memory_space<vmem>>, vector<1x1x32xbf16>
    %14 = vector.shape_cast %13 : vector<1x1x32xbf16> to vector<1x32xbf16>
    %15 = arith.extf %14 : vector<1x32xbf16> to vector<1x32xf32>
    %c0_15 = arith.constant 0 : index
    %c0_16 = arith.constant 0 : index
    %c0_17 = arith.constant 0 : index
    %16 = vector.load %arg10[%c0_15, %c0_16, %c0_17] : memref<1x1x32xbf16, #tpu.memory_space<vmem>>, vector<1x1x32xbf16>
    %17 = vector.shape_cast %16 : vector<1x1x32xbf16> to vector<1x32xbf16>
    %18 = arith.extf %17 : vector<1x32xbf16> to vector<1x32xf32>
    %c0_18 = arith.constant 0 : index
    %c0_19 = arith.constant 0 : index
    %c0_20 = arith.constant 0 : index
    %19 = vector.load %arg11[%c0_18, %c0_19, %c0_20] : memref<1x32x64xbf16, #tpu.memory_space<vmem>>, vector<1x32x64xbf16>
    %20 = vector.shape_cast %19 : vector<1x32x64xbf16> to vector<32x64xbf16>
    %c0_21 = arith.constant 0 : index
    %c0_22 = arith.constant 0 : index
    %c0_23 = arith.constant 0 : index
    %21 = vector.load %arg12[%c0_21, %c0_22, %c0_23] : memref<1x1x64xbf16, #tpu.memory_space<vmem>>, vector<1x1x64xbf16>
    %22 = vector.shape_cast %21 : vector<1x1x64xbf16> to vector<1x64xbf16>
    %23 = arith.extf %22 : vector<1x64xbf16> to vector<1x64xf32>
    %c0_24 = arith.constant 0 : index
    %c0_25 = arith.constant 0 : index
    %c0_26 = arith.constant 0 : index
    %24 = vector.load %arg13[%c0_24, %c0_25, %c0_26] : memref<1x64x32xbf16, #tpu.memory_space<vmem>>, vector<1x64x32xbf16>
    %25 = vector.shape_cast %24 : vector<1x64x32xbf16> to vector<64x32xbf16>
    %c0_27 = arith.constant 0 : index
    %c0_28 = arith.constant 0 : index
    %c0_29 = arith.constant 0 : index
    %26 = vector.load %arg14[%c0_27, %c0_28, %c0_29] : memref<1x1x32xbf16, #tpu.memory_space<vmem>>, vector<1x1x32xbf16>
    %27 = vector.shape_cast %26 : vector<1x1x32xbf16> to vector<1x32xbf16>
    %28 = arith.extf %27 : vector<1x32xbf16> to vector<1x32xf32>
    %c0_30 = arith.constant 0 : index
    %c0_31 = arith.constant 0 : index
    %c0_32 = arith.constant 0 : index
    %29 = vector.load %arg15[%c0_30, %c0_31, %c0_32] : memref<1x1x32xbf16, #tpu.memory_space<vmem>>, vector<1x1x32xbf16>
    %30 = vector.shape_cast %29 : vector<1x1x32xbf16> to vector<1x32xbf16>
    %31 = arith.extf %30 : vector<1x32xbf16> to vector<1x32xf32>
    %c0_33 = arith.constant 0 : index
    %c0_34 = arith.constant 0 : index
    %c0_35 = arith.constant 0 : index
    %32 = vector.load %arg16[%c0_33, %c0_34, %c0_35] : memref<1x1x32xbf16, #tpu.memory_space<vmem>>, vector<1x1x32xbf16>
    %33 = vector.shape_cast %32 : vector<1x1x32xbf16> to vector<1x32xbf16>
    %34 = arith.extf %33 : vector<1x32xbf16> to vector<1x32xf32>
    %c0_36 = arith.constant 0 : index
    %c0_37 = arith.constant 0 : index
    %c0_38 = arith.constant 0 : index
    %35 = vector.load %arg18[%c0_36, %c0_37, %c0_38] : memref<2x8x32xbf16, #tpu.memory_space<vmem>>, vector<1x8x32xbf16>
    %36 = vector.shape_cast %35 : vector<1x8x32xbf16> to vector<8x32xbf16>
    %c0_39 = arith.constant 0 : index
    %c0_40 = arith.constant 0 : index
    %c0_41 = arith.constant 0 : index
    %37 = vector.load %arg2[%c0_39, %c0_40, %c0_41] : memref<2x1x8xf32, #tpu.memory_space<vmem>>, vector<1x1x8xf32>
    %38 = vector.shape_cast %37 : vector<1x1x8xf32> to vector<1x8xf32>
    %cst = arith.constant dense<0.000000e+00> : vector<8x96xf32>
    %39 = tpu.matmul %36, %4, %cst {dimension_numbers = #tpu.dot_dimension_numbers<[1], [0], [0], [1], [0, 0, 1, 1], [], []>} : vector<8x32xbf16>, vector<32x96xbf16>, vector<8x96xf32> -> vector<8x96xf32>
    %40 = vector.broadcast %7 : vector<1x96xf32> to vector<8x96xf32>
    %41 = arith.addf %39, %40 : vector<8x96xf32>
    %42 = arith.truncf %41 : vector<8x96xf32> to vector<8x96xbf16>
    %43 = vector.extract_strided_slice %42 {offsets = [0, 0], sizes = [8, 8], strides = [1, 1]} : vector<8x96xbf16> to vector<8x8xbf16>
    %44 = vector.extract_strided_slice %42 {offsets = [0, 32], sizes = [8, 8], strides = [1, 1]} : vector<8x96xbf16> to vector<8x8xbf16>
    %45 = vector.extract_strided_slice %42 {offsets = [0, 64], sizes = [8, 8], strides = [1, 1]} : vector<8x96xbf16> to vector<8x8xbf16>
    %46 = tpu.transpose %44, [1, 0] : vector<8x8xbf16> -> vector<8x8xbf16>
    %cst_42 = arith.constant dense<0.000000e+00> : vector<8x8xf32>
    %47 = tpu.matmul %43, %46, %cst_42 {dimension_numbers = #tpu.dot_dimension_numbers<[1], [0], [0], [1], [0, 0, 1, 1], [], []>} : vector<8x8xbf16>, vector<8x8xbf16>, vector<8x8xf32> -> vector<8x8xf32>
    %48 = vector.broadcast %38 : vector<1x8xf32> to vector<8x8xf32>
    %49 = arith.addf %47, %48 : vector<8x8xf32>
    %cst_43 = arith.constant dense<0xFF800000> : vector<8xf32>
    %50 = vector.multi_reduction <maximumf>, %49, %cst_43 [1] : vector<8x8xf32> to vector<8xf32>
    %51 = vector.shape_cast %50 : vector<8xf32> to vector<8x1xf32>
    %52 = vector.broadcast %51 : vector<8x1xf32> to vector<8x8xf32>
    %53 = arith.subf %49, %52 : vector<8x8xf32>
    %54 = math.exp %53 : vector<8x8xf32>
    %cst_44 = arith.constant dense<0.000000e+00> : vector<8xf32>
    %55 = vector.multi_reduction <add>, %54, %cst_44 [1] : vector<8x8xf32> to vector<8xf32>
    %56 = vector.shape_cast %55 : vector<8xf32> to vector<8x1xf32>
    %57 = tpu.reciprocal %56 {approx = true} : vector<8x1xf32> -> vector<8x1xf32>
    %58 = vector.broadcast %57 : vector<8x1xf32> to vector<8x8xf32>
    %59 = arith.mulf %54, %58 : vector<8x8xf32>
    %60 = arith.truncf %59 : vector<8x8xf32> to vector<8x8xbf16>
    %cst_45 = arith.constant dense<0.000000e+00> : vector<8x8xf32>
    %61 = tpu.matmul %60, %45, %cst_45 {dimension_numbers = #tpu.dot_dimension_numbers<[1], [0], [0], [1], [0, 0, 1, 1], [], []>} : vector<8x8xbf16>, vector<8x8xbf16>, vector<8x8xf32> -> vector<8x8xf32>
    %62 = arith.truncf %61 : vector<8x8xf32> to vector<8x8xbf16>
    %c0_46 = arith.constant 0 : index
    %c0_47 = arith.constant 0 : index
    %63 = vector.load %arg19[%c0_46, %c0_47] : memref<8x32xbf16, #tpu.memory_space<vmem>>, vector<8x8xbf16>
    tpu.vector_store %arg19[%c0_46, %c0_47], %62 {strides = array<i32>} : memref<8x32xbf16, #tpu.memory_space<vmem>>, vector<8x8xbf16>,
    %64 = vector.extract_strided_slice %42 {offsets = [0, 8], sizes = [8, 8], strides = [1, 1]} : vector<8x96xbf16> to vector<8x8xbf16>
    %65 = vector.extract_strided_slice %42 {offsets = [0, 40], sizes = [8, 8], strides = [1, 1]} : vector<8x96xbf16> to vector<8x8xbf16>
    %66 = vector.extract_strided_slice %42 {offsets = [0, 72], sizes = [8, 8], strides = [1, 1]} : vector<8x96xbf16> to vector<8x8xbf16>
    %67 = tpu.transpose %65, [1, 0] : vector<8x8xbf16> -> vector<8x8xbf16>
    %cst_48 = arith.constant dense<0.000000e+00> : vector<8x8xf32>
    %68 = tpu.matmul %64, %67, %cst_48 {dimension_numbers = #tpu.dot_dimension_numbers<[1], [0], [0], [1], [0, 0, 1, 1], [], []>} : vector<8x8xbf16>, vector<8x8xbf16>, vector<8x8xf32> -> vector<8x8xf32>
    %69 = vector.broadcast %38 : vector<1x8xf32> to vector<8x8xf32>
    %70 = arith.addf %68, %69 : vector<8x8xf32>
    %cst_49 = arith.constant dense<0xFF800000> : vector<8xf32>
    %71 = vector.multi_reduction <maximumf>, %70, %cst_49 [1] : vector<8x8xf32> to vector<8xf32>
    %72 = vector.shape_cast %71 : vector<8xf32> to vector<8x1xf32>
    %73 = vector.broadcast %72 : vector<8x1xf32> to vector<8x8xf32>
    %74 = arith.subf %70, %73 : vector<8x8xf32>
    %75 = math.exp %74 : vector<8x8xf32>
    %cst_50 = arith.constant dense<0.000000e+00> : vector<8xf32>
    %76 = vector.multi_reduction <add>, %75, %cst_50 [1] : vector<8x8xf32> to vector<8xf32>
    %77 = vector.shape_cast %76 : vector<8xf32> to vector<8x1xf32>
    %78 = tpu.reciprocal %77 {approx = true} : vector<8x1xf32> -> vector<8x1xf32>
    %79 = vector.broadcast %78 : vector<8x1xf32> to vector<8x8xf32>
    %80 = arith.mulf %75, %79 : vector<8x8xf32>
    %81 = arith.truncf %80 : vector<8x8xf32> to vector<8x8xbf16>
    %cst_51 = arith.constant dense<0.000000e+00> : vector<8x8xf32>
    %82 = tpu.matmul %81, %66, %cst_51 {dimension_numbers = #tpu.dot_dimension_numbers<[1], [0], [0], [1], [0, 0, 1, 1], [], []>} : vector<8x8xbf16>, vector<8x8xbf16>, vector<8x8xf32> -> vector<8x8xf32>
    %83 = arith.truncf %82 : vector<8x8xf32> to vector<8x8xbf16>
    %c0_52 = arith.constant 0 : index
    %c8 = arith.constant 8 : index
    %84 = vector.load %arg19[%c0_52, %c8] : memref<8x32xbf16, #tpu.memory_space<vmem>>, vector<8x8xbf16>
    tpu.vector_store %arg19[%c0_52, %c8], %83 {strides = array<i32>} : memref<8x32xbf16, #tpu.memory_space<vmem>>, vector<8x8xbf16>,
    %85 = vector.extract_strided_slice %42 {offsets = [0, 16], sizes = [8, 8], strides = [1, 1]} : vector<8x96xbf16> to vector<8x8xbf16>
    %86 = vector.extract_strided_slice %42 {offsets = [0, 48], sizes = [8, 8], strides = [1, 1]} : vector<8x96xbf16> to vector<8x8xbf16>
    %87 = vector.extract_strided_slice %42 {offsets = [0, 80], sizes = [8, 8], strides = [1, 1]} : vector<8x96xbf16> to vector<8x8xbf16>
    %88 = tpu.transpose %86, [1, 0] : vector<8x8xbf16> -> vector<8x8xbf16>
    %cst_53 = arith.constant dense<0.000000e+00> : vector<8x8xf32>
    %89 = tpu.matmul %85, %88, %cst_53 {dimension_numbers = #tpu.dot_dimension_numbers<[1], [0], [0], [1], [0, 0, 1, 1], [], []>} : vector<8x8xbf16>, vector<8x8xbf16>, vector<8x8xf32> -> vector<8x8xf32>
    %90 = vector.broadcast %38 : vector<1x8xf32> to vector<8x8xf32>
    %91 = arith.addf %89, %90 : vector<8x8xf32>
    %cst_54 = arith.constant dense<0xFF800000> : vector<8xf32>
    %92 = vector.multi_reduction <maximumf>, %91, %cst_54 [1] : vector<8x8xf32> to vector<8xf32>
    %93 = vector.shape_cast %92 : vector<8xf32> to vector<8x1xf32>
    %94 = vector.broadcast %93 : vector<8x1xf32> to vector<8x8xf32>
    %95 = arith.subf %91, %94 : vector<8x8xf32>
    %96 = math.exp %95 : vector<8x8xf32>
    %cst_55 = arith.constant dense<0.000000e+00> : vector<8xf32>
    %97 = vector.multi_reduction <add>, %96, %cst_55 [1] : vector<8x8xf32> to vector<8xf32>
    %98 = vector.shape_cast %97 : vector<8xf32> to vector<8x1xf32>
    %99 = tpu.reciprocal %98 {approx = true} : vector<8x1xf32> -> vector<8x1xf32>
    %100 = vector.broadcast %99 : vector<8x1xf32> to vector<8x8xf32>
    %101 = arith.mulf %96, %100 : vector<8x8xf32>
    %102 = arith.truncf %101 : vector<8x8xf32> to vector<8x8xbf16>
    %cst_56 = arith.constant dense<0.000000e+00> : vector<8x8xf32>
    %103 = tpu.matmul %102, %87, %cst_56 {dimension_numbers = #tpu.dot_dimension_numbers<[1], [0], [0], [1], [0, 0, 1, 1], [], []>} : vector<8x8xbf16>, vector<8x8xbf16>, vector<8x8xf32> -> vector<8x8xf32>
    %104 = arith.truncf %103 : vector<8x8xf32> to vector<8x8xbf16>
    %c0_57 = arith.constant 0 : index
    %c16 = arith.constant 16 : index
    %105 = vector.load %arg19[%c0_57, %c16] : memref<8x32xbf16, #tpu.memory_space<vmem>>, vector<8x8xbf16>
    tpu.vector_store %arg19[%c0_57, %c16], %104 {strides = array<i32>} : memref<8x32xbf16, #tpu.memory_space<vmem>>, vector<8x8xbf16>,
    %106 = vector.extract_strided_slice %42 {offsets = [0, 24], sizes = [8, 8], strides = [1, 1]} : vector<8x96xbf16> to vector<8x8xbf16>
    %107 = vector.extract_strided_slice %42 {offsets = [0, 56], sizes = [8, 8], strides = [1, 1]} : vector<8x96xbf16> to vector<8x8xbf16>
    %108 = vector.extract_strided_slice %42 {offsets = [0, 88], sizes = [8, 8], strides = [1, 1]} : vector<8x96xbf16> to vector<8x8xbf16>
    %109 = tpu.transpose %107, [1, 0] : vector<8x8xbf16> -> vector<8x8xbf16>
    %cst_58 = arith.constant dense<0.000000e+00> : vector<8x8xf32>
    %110 = tpu.matmul %106, %109, %cst_58 {dimension_numbers = #tpu.dot_dimension_numbers<[1], [0], [0], [1], [0, 0, 1, 1], [], []>} : vector<8x8xbf16>, vector<8x8xbf16>, vector<8x8xf32> -> vector<8x8xf32>
    %111 = vector.broadcast %38 : vector<1x8xf32> to vector<8x8xf32>
    %112 = arith.addf %110, %111 : vector<8x8xf32>
    %cst_59 = arith.constant dense<0xFF800000> : vector<8xf32>
    %113 = vector.multi_reduction <maximumf>, %112, %cst_59 [1] : vector<8x8xf32> to vector<8xf32>
    %114 = vector.shape_cast %113 : vector<8xf32> to vector<8x1xf32>
    %115 = vector.broadcast %114 : vector<8x1xf32> to vector<8x8xf32>
    %116 = arith.subf %112, %115 : vector<8x8xf32>
    %117 = math.exp %116 : vector<8x8xf32>
    %cst_60 = arith.constant dense<0.000000e+00> : vector<8xf32>
    %118 = vector.multi_reduction <add>, %117, %cst_60 [1] : vector<8x8xf32> to vector<8xf32>
    %119 = vector.shape_cast %118 : vector<8xf32> to vector<8x1xf32>
    %120 = tpu.reciprocal %119 {approx = true} : vector<8x1xf32> -> vector<8x1xf32>
    %121 = vector.broadcast %120 : vector<8x1xf32> to vector<8x8xf32>
    %122 = arith.mulf %117, %121 : vector<8x8xf32>
    %123 = arith.truncf %122 : vector<8x8xf32> to vector<8x8xbf16>
    %cst_61 = arith.constant dense<0.000000e+00> : vector<8x8xf32>
    %124 = tpu.matmul %123, %108, %cst_61 {dimension_numbers = #tpu.dot_dimension_numbers<[1], [0], [0], [1], [0, 0, 1, 1], [], []>} : vector<8x8xbf16>, vector<8x8xbf16>, vector<8x8xf32> -> vector<8x8xf32>
    %125 = arith.truncf %124 : vector<8x8xf32> to vector<8x8xbf16>
    %c0_62 = arith.constant 0 : index
    %c24 = arith.constant 24 : index
    %126 = vector.load %arg19[%c0_62, %c24] : memref<8x32xbf16, #tpu.memory_space<vmem>>, vector<8x8xbf16>
    tpu.vector_store %arg19[%c0_62, %c24], %125 {strides = array<i32>} : memref<8x32xbf16, #tpu.memory_space<vmem>>, vector<8x8xbf16>,
    %c0_63 = arith.constant 0 : index
    %c0_64 = arith.constant 0 : index
    %127 = vector.load %arg19[%c0_63, %c0_64] : memref<8x32xbf16, #tpu.memory_space<vmem>>, vector<8x32xbf16>
    %cst_65 = arith.constant dense<0.000000e+00> : vector<8x32xf32>
    %128 = tpu.matmul %127, %9, %cst_65 {dimension_numbers = #tpu.dot_dimension_numbers<[1], [0], [0], [1], [0, 0, 1, 1], [], []>} : vector<8x32xbf16>, vector<32x32xbf16>, vector<8x32xf32> -> vector<8x32xf32>
    %129 = vector.broadcast %12 : vector<1x32xf32> to vector<8x32xf32>
    %130 = arith.addf %128, %129 : vector<8x32xf32>
    %131 = arith.extf %36 : vector<8x32xbf16> to vector<8x32xf32>
    %132 = arith.addf %130, %131 : vector<8x32xf32>
    %cst_66 = arith.constant dense<0.000000e+00> : vector<8xf32>
    %133 = vector.multi_reduction <add>, %132, %cst_66 [1] : vector<8x32xf32> to vector<8xf32>
    %134 = vector.shape_cast %133 : vector<8xf32> to vector<8x1xf32>
    %cst_67 = arith.constant 3.200000e+01 : f32
    %135 = vector.broadcast %cst_67 : f32 to vector<8x1xf32>
    %136 = arith.divf %134, %135 : vector<8x1xf32>
    %137 = vector.broadcast %136 : vector<8x1xf32> to vector<8x32xf32>
    %138 = arith.subf %132, %137 : vector<8x32xf32>
    %139 = arith.mulf %138, %138 : vector<8x32xf32>
    %cst_68 = arith.constant dense<0.000000e+00> : vector<8xf32>
    %140 = vector.multi_reduction <add>, %139, %cst_68 [1] : vector<8x32xf32> to vector<8xf32>
    %141 = vector.shape_cast %140 : vector<8xf32> to vector<8x1xf32>
    %cst_69 = arith.constant 3.200000e+01 : f32
    %142 = vector.broadcast %cst_69 : f32 to vector<8x1xf32>
    %143 = arith.divf %141, %142 : vector<8x1xf32>
    %144 = vector.broadcast %136 : vector<8x1xf32> to vector<8x32xf32>
    %145 = arith.subf %132, %144 : vector<8x32xf32>
    %cst_70 = arith.constant 9.99999996E-13 : f32
    %146 = vector.broadcast %cst_70 : f32 to vector<8x1xf32>
    %147 = arith.addf %143, %146 : vector<8x1xf32>
    %148 = math.rsqrt %147 : vector<8x1xf32>
    %149 = vector.broadcast %148 : vector<8x1xf32> to vector<8x32xf32>
    %150 = arith.mulf %145, %149 : vector<8x32xf32>
    %151 = vector.broadcast %15 : vector<1x32xf32> to vector<8x32xf32>
    %152 = arith.mulf %150, %151 : vector<8x32xf32>
    %153 = vector.broadcast %18 : vector<1x32xf32> to vector<8x32xf32>
    %154 = arith.addf %152, %153 : vector<8x32xf32>
    %155 = arith.truncf %154 : vector<8x32xf32> to vector<8x32xbf16>
    %cst_71 = arith.constant dense<0.000000e+00> : vector<8x64xf32>
    %156 = tpu.matmul %155, %20, %cst_71 {dimension_numbers = #tpu.dot_dimension_numbers<[1], [0], [0], [1], [0, 0, 1, 1], [], []>} : vector<8x32xbf16>, vector<32x64xbf16>, vector<8x64xf32> -> vector<8x64xf32>
    %157 = vector.broadcast %23 : vector<1x64xf32> to vector<8x64xf32>
    %158 = arith.addf %156, %157 : vector<8x64xf32>
    %159 = arith.mulf %158, %158 : vector<8x64xf32>
    %160 = arith.mulf %158, %159 : vector<8x64xf32>
    %cst_72 = arith.constant 4.471500e-02 : f32
    %161 = vector.broadcast %cst_72 : f32 to vector<8x64xf32>
    %162 = arith.mulf %161, %160 : vector<8x64xf32>
    %163 = arith.addf %158, %162 : vector<8x64xf32>
    %cst_73 = arith.constant 0.797884583 : f32
    %164 = vector.broadcast %cst_73 : f32 to vector<8x64xf32>
    %165 = arith.mulf %164, %163 : vector<8x64xf32>
    %166 = math.tanh %165 : vector<8x64xf32>
    %cst_74 = arith.constant 1.000000e+00 : f32
    %167 = vector.broadcast %cst_74 : f32 to vector<8x64xf32>
    %168 = arith.addf %167, %166 : vector<8x64xf32>
    %cst_75 = arith.constant 5.000000e-01 : f32
    %169 = vector.broadcast %cst_75 : f32 to vector<8x64xf32>
    %170 = arith.mulf %169, %168 : vector<8x64xf32>
    %171 = arith.mulf %158, %170 : vector<8x64xf32>
    %172 = arith.truncf %171 : vector<8x64xf32> to vector<8x64xbf16>
    %cst_76 = arith.constant dense<0.000000e+00> : vector<8x32xf32>
    %173 = tpu.matmul %172, %25, %cst_76 {dimension_numbers = #tpu.dot_dimension_numbers<[1], [0], [0], [1], [0, 0, 1, 1], [], []>} : vector<8x64xbf16>, vector<64x32xbf16>, vector<8x32xf32> -> vector<8x32xf32>
    %174 = vector.broadcast %28 : vector<1x32xf32> to vector<8x32xf32>
    %175 = arith.addf %173, %174 : vector<8x32xf32>
    %176 = arith.addf %175, %154 : vector<8x32xf32>
    %cst_77 = arith.constant dense<0.000000e+00> : vector<8xf32>
    %177 = vector.multi_reduction <add>, %176, %cst_77 [1] : vector<8x32xf32> to vector<8xf32>
    %178 = vector.shape_cast %177 : vector<8xf32> to vector<8x1xf32>
    %cst_78 = arith.constant 3.200000e+01 : f32
    %179 = vector.broadcast %cst_78 : f32 to vector<8x1xf32>
    %180 = arith.divf %178, %179 : vector<8x1xf32>
    %181 = vector.broadcast %180 : vector<8x1xf32> to vector<8x32xf32>
    %182 = arith.subf %176, %181 : vector<8x32xf32>
    %183 = arith.mulf %182, %182 : vector<8x32xf32>
    %cst_79 = arith.constant dense<0.000000e+00> : vector<8xf32>
    %184 = vector.multi_reduction <add>, %183, %cst_79 [1] : vector<8x32xf32> to vector<8xf32>
    %185 = vector.shape_cast %184 : vector<8xf32> to vector<8x1xf32>
    %cst_80 = arith.constant 3.200000e+01 : f32
    %186 = vector.broadcast %cst_80 : f32 to vector<8x1xf32>
    %187 = arith.divf %185, %186 : vector<8x1xf32>
    %188 = vector.broadcast %180 : vector<8x1xf32> to vector<8x32xf32>
    %189 = arith.subf %176, %188 : vector<8x32xf32>
    %cst_81 = arith.constant 9.99999996E-13 : f32
    %190 = vector.broadcast %cst_81 : f32 to vector<8x1xf32>
    %191 = arith.addf %187, %190 : vector<8x1xf32>
    %192 = math.rsqrt %191 : vector<8x1xf32>
    %193 = vector.broadcast %192 : vector<8x1xf32> to vector<8x32xf32>
    %194 = arith.mulf %189, %193 : vector<8x32xf32>
    %195 = vector.broadcast %31 : vector<1x32xf32> to vector<8x32xf32>
    %196 = arith.mulf %194, %195 : vector<8x32xf32>
    %197 = vector.broadcast %34 : vector<1x32xf32> to vector<8x32xf32>
    %198 = arith.addf %196, %197 : vector<8x32xf32>
    %199 = arith.truncf %198 : vector<8x32xf32> to vector<8x32xbf16>
    %c0_82 = arith.constant 0 : index
    %c0_83 = arith.constant 0 : index
    %c0_84 = arith.constant 0 : index
    %200 = vector.load %arg18[%c0_82, %c0_83, %c0_84] : memref<2x8x32xbf16, #tpu.memory_space<vmem>>, vector<1x8x32xbf16>
    %201 = vector.shape_cast %200 : vector<1x8x32xbf16> to vector<8x32xbf16>
    %202 = vector.shape_cast %199 : vector<8x32xbf16> to vector<1x8x32xbf16>
    tpu.vector_store %arg18[%c0_82, %c0_83, %c0_84], %202 {strides = array<i32>} : memref<2x8x32xbf16, #tpu.memory_space<vmem>>, vector<1x8x32xbf16>,
    %c1 = arith.constant 1 : index
    %c0_85 = arith.constant 0 : index
    %c0_86 = arith.constant 0 : index
    %203 = vector.load %arg18[%c1, %c0_85, %c0_86] : memref<2x8x32xbf16, #tpu.memory_space<vmem>>, vector<1x8x32xbf16>
    %204 = vector.shape_cast %203 : vector<1x8x32xbf16> to vector<8x32xbf16>
    %c1_87 = arith.constant 1 : index
    %c0_88 = arith.constant 0 : index
    %c0_89 = arith.constant 0 : index
    %205 = vector.load %arg2[%c1_87, %c0_88, %c0_89] : memref<2x1x8xf32, #tpu.memory_space<vmem>>, vector<1x1x8xf32>
    %206 = vector.shape_cast %205 : vector<1x1x8xf32> to vector<1x8xf32>
    %cst_90 = arith.constant dense<0.000000e+00> : vector<8x96xf32>
    %207 = tpu.matmul %204, %4, %cst_90 {dimension_numbers = #tpu.dot_dimension_numbers<[1], [0], [0], [1], [0, 0, 1, 1], [], []>} : vector<8x32xbf16>, vector<32x96xbf16>, vector<8x96xf32> -> vector<8x96xf32>
    %208 = vector.broadcast %7 : vector<1x96xf32> to vector<8x96xf32>
    %209 = arith.addf %207, %208 : vector<8x96xf32>
    %210 = arith.truncf %209 : vector<8x96xf32> to vector<8x96xbf16>
    %211 = vector.extract_strided_slice %210 {offsets = [0, 0], sizes = [8, 8], strides = [1, 1]} : vector<8x96xbf16> to vector<8x8xbf16>
    %212 = vector.extract_strided_slice %210 {offsets = [0, 32], sizes = [8, 8], strides = [1, 1]} : vector<8x96xbf16> to vector<8x8xbf16>
    %213 = vector.extract_strided_slice %210 {offsets = [0, 64], sizes = [8, 8], strides = [1, 1]} : vector<8x96xbf16> to vector<8x8xbf16>
    %214 = tpu.transpose %212, [1, 0] : vector<8x8xbf16> -> vector<8x8xbf16>
    %cst_91 = arith.constant dense<0.000000e+00> : vector<8x8xf32>
    %215 = tpu.matmul %211, %214, %cst_91 {dimension_numbers = #tpu.dot_dimension_numbers<[1], [0], [0], [1], [0, 0, 1, 1], [], []>} : vector<8x8xbf16>, vector<8x8xbf16>, vector<8x8xf32> -> vector<8x8xf32>
    %216 = vector.broadcast %206 : vector<1x8xf32> to vector<8x8xf32>
    %217 = arith.addf %215, %216 : vector<8x8xf32>
    %cst_92 = arith.constant dense<0xFF800000> : vector<8xf32>
    %218 = vector.multi_reduction <maximumf>, %217, %cst_92 [1] : vector<8x8xf32> to vector<8xf32>
    %219 = vector.shape_cast %218 : vector<8xf32> to vector<8x1xf32>
    %220 = vector.broadcast %219 : vector<8x1xf32> to vector<8x8xf32>
    %221 = arith.subf %217, %220 : vector<8x8xf32>
    %222 = math.exp %221 : vector<8x8xf32>
    %cst_93 = arith.constant dense<0.000000e+00> : vector<8xf32>
    %223 = vector.multi_reduction <add>, %222, %cst_93 [1] : vector<8x8xf32> to vector<8xf32>
    %224 = vector.shape_cast %223 : vector<8xf32> to vector<8x1xf32>
    %225 = tpu.reciprocal %224 {approx = true} : vector<8x1xf32> -> vector<8x1xf32>
    %226 = vector.broadcast %225 : vector<8x1xf32> to vector<8x8xf32>
    %227 = arith.mulf %222, %226 : vector<8x8xf32>
    %228 = arith.truncf %227 : vector<8x8xf32> to vector<8x8xbf16>
    %cst_94 = arith.constant dense<0.000000e+00> : vector<8x8xf32>
    %229 = tpu.matmul %228, %213, %cst_94 {dimension_numbers = #tpu.dot_dimension_numbers<[1], [0], [0], [1], [0, 0, 1, 1], [], []>} : vector<8x8xbf16>, vector<8x8xbf16>, vector<8x8xf32> -> vector<8x8xf32>
    %230 = arith.truncf %229 : vector<8x8xf32> to vector<8x8xbf16>
    %c0_95 = arith.constant 0 : index
    %c0_96 = arith.constant 0 : index
    %231 = vector.load %arg19[%c0_95, %c0_96] : memref<8x32xbf16, #tpu.memory_space<vmem>>, vector<8x8xbf16>
    tpu.vector_store %arg19[%c0_95, %c0_96], %230 {strides = array<i32>} : memref<8x32xbf16, #tpu.memory_space<vmem>>, vector<8x8xbf16>,
    %232 = vector.extract_strided_slice %210 {offsets = [0, 8], sizes = [8, 8], strides = [1, 1]} : vector<8x96xbf16> to vector<8x8xbf16>
    %233 = vector.extract_strided_slice %210 {offsets = [0, 40], sizes = [8, 8], strides = [1, 1]} : vector<8x96xbf16> to vector<8x8xbf16>
    %234 = vector.extract_strided_slice %210 {offsets = [0, 72], sizes = [8, 8], strides = [1, 1]} : vector<8x96xbf16> to vector<8x8xbf16>
    %235 = tpu.transpose %233, [1, 0] : vector<8x8xbf16> -> vector<8x8xbf16>
    %cst_97 = arith.constant dense<0.000000e+00> : vector<8x8xf32>
    %236 = tpu.matmul %232, %235, %cst_97 {dimension_numbers = #tpu.dot_dimension_numbers<[1], [0], [0], [1], [0, 0, 1, 1], [], []>} : vector<8x8xbf16>, vector<8x8xbf16>, vector<8x8xf32> -> vector<8x8xf32>
    %237 = vector.broadcast %206 : vector<1x8xf32> to vector<8x8xf32>
    %238 = arith.addf %236, %237 : vector<8x8xf32>
    %cst_98 = arith.constant dense<0xFF800000> : vector<8xf32>
    %239 = vector.multi_reduction <maximumf>, %238, %cst_98 [1] : vector<8x8xf32> to vector<8xf32>
    %240 = vector.shape_cast %239 : vector<8xf32> to vector<8x1xf32>
    %241 = vector.broadcast %240 : vector<8x1xf32> to vector<8x8xf32>
    %242 = arith.subf %238, %241 : vector<8x8xf32>
    %243 = math.exp %242 : vector<8x8xf32>
    %cst_99 = arith.constant dense<0.000000e+00> : vector<8xf32>
    %244 = vector.multi_reduction <add>, %243, %cst_99 [1] : vector<8x8xf32> to vector<8xf32>
    %245 = vector.shape_cast %244 : vector<8xf32> to vector<8x1xf32>
    %246 = tpu.reciprocal %245 {approx = true} : vector<8x1xf32> -> vector<8x1xf32>
    %247 = vector.broadcast %246 : vector<8x1xf32> to vector<8x8xf32>
    %248 = arith.mulf %243, %247 : vector<8x8xf32>
    %249 = arith.truncf %248 : vector<8x8xf32> to vector<8x8xbf16>
    %cst_100 = arith.constant dense<0.000000e+00> : vector<8x8xf32>
    %250 = tpu.matmul %249, %234, %cst_100 {dimension_numbers = #tpu.dot_dimension_numbers<[1], [0], [0], [1], [0, 0, 1, 1], [], []>} : vector<8x8xbf16>, vector<8x8xbf16>, vector<8x8xf32> -> vector<8x8xf32>
    %251 = arith.truncf %250 : vector<8x8xf32> to vector<8x8xbf16>
    %c0_101 = arith.constant 0 : index
    %c8_102 = arith.constant 8 : index
    %252 = vector.load %arg19[%c0_101, %c8_102] : memref<8x32xbf16, #tpu.memory_space<vmem>>, vector<8x8xbf16>
    tpu.vector_store %arg19[%c0_101, %c8_102], %251 {strides = array<i32>} : memref<8x32xbf16, #tpu.memory_space<vmem>>, vector<8x8xbf16>,
    %253 = vector.extract_strided_slice %210 {offsets = [0, 16], sizes = [8, 8], strides = [1, 1]} : vector<8x96xbf16> to vector<8x8xbf16>
    %254 = vector.extract_strided_slice %210 {offsets = [0, 48], sizes = [8, 8], strides = [1, 1]} : vector<8x96xbf16> to vector<8x8xbf16>
    %255 = vector.extract_strided_slice %210 {offsets = [0, 80], sizes = [8, 8], strides = [1, 1]} : vector<8x96xbf16> to vector<8x8xbf16>
    %256 = tpu.transpose %254, [1, 0] : vector<8x8xbf16> -> vector<8x8xbf16>
    %cst_103 = arith.constant dense<0.000000e+00> : vector<8x8xf32>
    %257 = tpu.matmul %253, %256, %cst_103 {dimension_numbers = #tpu.dot_dimension_numbers<[1], [0], [0], [1], [0, 0, 1, 1], [], []>} : vector<8x8xbf16>, vector<8x8xbf16>, vector<8x8xf32> -> vector<8x8xf32>
    %258 = vector.broadcast %206 : vector<1x8xf32> to vector<8x8xf32>
    %259 = arith.addf %257, %258 : vector<8x8xf32>
    %cst_104 = arith.constant dense<0xFF800000> : vector<8xf32>
    %260 = vector.multi_reduction <maximumf>, %259, %cst_104 [1] : vector<8x8xf32> to vector<8xf32>
    %261 = vector.shape_cast %260 : vector<8xf32> to vector<8x1xf32>
    %262 = vector.broadcast %261 : vector<8x1xf32> to vector<8x8xf32>
    %263 = arith.subf %259, %262 : vector<8x8xf32>
    %264 = math.exp %263 : vector<8x8xf32>
    %cst_105 = arith.constant dense<0.000000e+00> : vector<8xf32>
    %265 = vector.multi_reduction <add>, %264, %cst_105 [1] : vector<8x8xf32> to vector<8xf32>
    %266 = vector.shape_cast %265 : vector<8xf32> to vector<8x1xf32>
    %267 = tpu.reciprocal %266 {approx = true} : vector<8x1xf32> -> vector<8x1xf32>
    %268 = vector.broadcast %267 : vector<8x1xf32> to vector<8x8xf32>
    %269 = arith.mulf %264, %268 : vector<8x8xf32>
    %270 = arith.truncf %269 : vector<8x8xf32> to vector<8x8xbf16>
    %cst_106 = arith.constant dense<0.000000e+00> : vector<8x8xf32>
    %271 = tpu.matmul %270, %255, %cst_106 {dimension_numbers = #tpu.dot_dimension_numbers<[1], [0], [0], [1], [0, 0, 1, 1], [], []>} : vector<8x8xbf16>, vector<8x8xbf16>, vector<8x8xf32> -> vector<8x8xf32>
    %272 = arith.truncf %271 : vector<8x8xf32> to vector<8x8xbf16>
    %c0_107 = arith.constant 0 : index
    %c16_108 = arith.constant 16 : index
    %273 = vector.load %arg19[%c0_107, %c16_108] : memref<8x32xbf16, #tpu.memory_space<vmem>>, vector<8x8xbf16>
    tpu.vector_store %arg19[%c0_107, %c16_108], %272 {strides = array<i32>} : memref<8x32xbf16, #tpu.memory_space<vmem>>, vector<8x8xbf16>,
    %274 = vector.extract_strided_slice %210 {offsets = [0, 24], sizes = [8, 8], strides = [1, 1]} : vector<8x96xbf16> to vector<8x8xbf16>
    %275 = vector.extract_strided_slice %210 {offsets = [0, 56], sizes = [8, 8], strides = [1, 1]} : vector<8x96xbf16> to vector<8x8xbf16>
    %276 = vector.extract_strided_slice %210 {offsets = [0, 88], sizes = [8, 8], strides = [1, 1]} : vector<8x96xbf16> to vector<8x8xbf16>
    %277 = tpu.transpose %275, [1, 0] : vector<8x8xbf16> -> vector<8x8xbf16>
    %cst_109 = arith.constant dense<0.000000e+00> : vector<8x8xf32>
    %278 = tpu.matmul %274, %277, %cst_109 {dimension_numbers = #tpu.dot_dimension_numbers<[1], [0], [0], [1], [0, 0, 1, 1], [], []>} : vector<8x8xbf16>, vector<8x8xbf16>, vector<8x8xf32> -> vector<8x8xf32>
    %279 = vector.broadcast %206 : vector<1x8xf32> to vector<8x8xf32>
    %280 = arith.addf %278, %279 : vector<8x8xf32>
    %cst_110 = arith.constant dense<0xFF800000> : vector<8xf32>
    %281 = vector.multi_reduction <maximumf>, %280, %cst_110 [1] : vector<8x8xf32> to vector<8xf32>
    %282 = vector.shape_cast %281 : vector<8xf32> to vector<8x1xf32>
    %283 = vector.broadcast %282 : vector<8x1xf32> to vector<8x8xf32>
    %284 = arith.subf %280, %283 : vector<8x8xf32>
    %285 = math.exp %284 : vector<8x8xf32>
    %cst_111 = arith.constant dense<0.000000e+00> : vector<8xf32>
    %286 = vector.multi_reduction <add>, %285, %cst_111 [1] : vector<8x8xf32> to vector<8xf32>
    %287 = vector.shape_cast %286 : vector<8xf32> to vector<8x1xf32>
    %288 = tpu.reciprocal %287 {approx = true} : vector<8x1xf32> -> vector<8x1xf32>
    %289 = vector.broadcast %288 : vector<8x1xf32> to vector<8x8xf32>
    %290 = arith.mulf %285, %289 : vector<8x8xf32>
    %291 = arith.truncf %290 : vector<8x8xf32> to vector<8x8xbf16>
    %cst_112 = arith.constant dense<0.000000e+00> : vector<8x8xf32>
    %292 = tpu.matmul %291, %276, %cst_112 {dimension_numbers = #tpu.dot_dimension_numbers<[1], [0], [0], [1], [0, 0, 1, 1], [], []>} : vector<8x8xbf16>, vector<8x8xbf16>, vector<8x8xf32> -> vector<8x8xf32>
    %293 = arith.truncf %292 : vector<8x8xf32> to vector<8x8xbf16>
    %c0_113 = arith.constant 0 : index
    %c24_114 = arith.constant 24 : index
    %294 = vector.load %arg19[%c0_113, %c24_114] : memref<8x32xbf16, #tpu.memory_space<vmem>>, vector<8x8xbf16>
    tpu.vector_store %arg19[%c0_113, %c24_114], %293 {strides = array<i32>} : memref<8x32xbf16, #tpu.memory_space<vmem>>, vector<8x8xbf16>,
    %c0_115 = arith.constant 0 : index
    %c0_116 = arith.constant 0 : index
    %295 = vector.load %arg19[%c0_115, %c0_116] : memref<8x32xbf16, #tpu.memory_space<vmem>>, vector<8x32xbf16>
    %cst_117 = arith.constant dense<0.000000e+00> : vector<8x32xf32>
    %296 = tpu.matmul %295, %9, %cst_117 {dimension_numbers = #tpu.dot_dimension_numbers<[1], [0], [0], [1], [0, 0, 1, 1], [], []>} : vector<8x32xbf16>, vector<32x32xbf16>, vector<8x32xf32> -> vector<8x32xf32>
    %297 = vector.broadcast %12 : vector<1x32xf32> to vector<8x32xf32>
    %298 = arith.addf %296, %297 : vector<8x32xf32>
    %299 = arith.extf %204 : vector<8x32xbf16> to vector<8x32xf32>
    %300 = arith.addf %298, %299 : vector<8x32xf32>
    %cst_118 = arith.constant dense<0.000000e+00> : vector<8xf32>
    %301 = vector.multi_reduction <add>, %300, %cst_118 [1] : vector<8x32xf32> to vector<8xf32>
    %302 = vector.shape_cast %301 : vector<8xf32> to vector<8x1xf32>
    %cst_119 = arith.constant 3.200000e+01 : f32
    %303 = vector.broadcast %cst_119 : f32 to vector<8x1xf32>
    %304 = arith.divf %302, %303 : vector<8x1xf32>
    %305 = vector.broadcast %304 : vector<8x1xf32> to vector<8x32xf32>
    %306 = arith.subf %300, %305 : vector<8x32xf32>
    %307 = arith.mulf %306, %306 : vector<8x32xf32>
    %cst_120 = arith.constant dense<0.000000e+00> : vector<8xf32>
    %308 = vector.multi_reduction <add>, %307, %cst_120 [1] : vector<8x32xf32> to vector<8xf32>
    %309 = vector.shape_cast %308 : vector<8xf32> to vector<8x1xf32>
    %cst_121 = arith.constant 3.200000e+01 : f32
    %310 = vector.broadcast %cst_121 : f32 to vector<8x1xf32>
    %311 = arith.divf %309, %310 : vector<8x1xf32>
    %312 = vector.broadcast %304 : vector<8x1xf32> to vector<8x32xf32>
    %313 = arith.subf %300, %312 : vector<8x32xf32>
    %cst_122 = arith.constant 9.99999996E-13 : f32
    %314 = vector.broadcast %cst_122 : f32 to vector<8x1xf32>
    %315 = arith.addf %311, %314 : vector<8x1xf32>
    %316 = math.rsqrt %315 : vector<8x1xf32>
    %317 = vector.broadcast %316 : vector<8x1xf32> to vector<8x32xf32>
    %318 = arith.mulf %313, %317 : vector<8x32xf32>
    %319 = vector.broadcast %15 : vector<1x32xf32> to vector<8x32xf32>
    %320 = arith.mulf %318, %319 : vector<8x32xf32>
    %321 = vector.broadcast %18 : vector<1x32xf32> to vector<8x32xf32>
    %322 = arith.addf %320, %321 : vector<8x32xf32>
    %323 = arith.truncf %322 : vector<8x32xf32> to vector<8x32xbf16>
    %cst_123 = arith.constant dense<0.000000e+00> : vector<8x64xf32>
    %324 = tpu.matmul %323, %20, %cst_123 {dimension_numbers = #tpu.dot_dimension_numbers<[1], [0], [0], [1], [0, 0, 1, 1], [], []>} : vector<8x32xbf16>, vector<32x64xbf16>, vector<8x64xf32> -> vector<8x64xf32>
    %325 = vector.broadcast %23 : vector<1x64xf32> to vector<8x64xf32>
    %326 = arith.addf %324, %325 : vector<8x64xf32>
    %327 = arith.mulf %326, %326 : vector<8x64xf32>
    %328 = arith.mulf %326, %327 : vector<8x64xf32>
    %cst_124 = arith.constant 4.471500e-02 : f32
    %329 = vector.broadcast %cst_124 : f32 to vector<8x64xf32>
    %330 = arith.mulf %329, %328 : vector<8x64xf32>
    %331 = arith.addf %326, %330 : vector<8x64xf32>
    %cst_125 = arith.constant 0.797884583 : f32
    %332 = vector.broadcast %cst_125 : f32 to vector<8x64xf32>
    %333 = arith.mulf %332, %331 : vector<8x64xf32>
    %334 = math.tanh %333 : vector<8x64xf32>
    %cst_126 = arith.constant 1.000000e+00 : f32
    %335 = vector.broadcast %cst_126 : f32 to vector<8x64xf32>
    %336 = arith.addf %335, %334 : vector<8x64xf32>
    %cst_127 = arith.constant 5.000000e-01 : f32
    %337 = vector.broadcast %cst_127 : f32 to vector<8x64xf32>
    %338 = arith.mulf %337, %336 : vector<8x64xf32>
    %339 = arith.mulf %326, %338 : vector<8x64xf32>
    %340 = arith.truncf %339 : vector<8x64xf32> to vector<8x64xbf16>
    %cst_128 = arith.constant dense<0.000000e+00> : vector<8x32xf32>
    %341 = tpu.matmul %340, %25, %cst_128 {dimension_numbers = #tpu.dot_dimension_numbers<[1], [0], [0], [1], [0, 0, 1, 1], [], []>} : vector<8x64xbf16>, vector<64x32xbf16>, vector<8x32xf32> -> vector<8x32xf32>
    %342 = vector.broadcast %28 : vector<1x32xf32> to vector<8x32xf32>
    %343 = arith.addf %341, %342 : vector<8x32xf32>
    %344 = arith.addf %343, %322 : vector<8x32xf32>
    %cst_129 = arith.constant dense<0.000000e+00> : vector<8xf32>
    %345 = vector.multi_reduction <add>, %344, %cst_129 [1] : vector<8x32xf32> to vector<8xf32>
    %346 = vector.shape_cast %345 : vector<8xf32> to vector<8x1xf32>
    %cst_130 = arith.constant 3.200000e+01 : f32
    %347 = vector.broadcast %cst_130 : f32 to vector<8x1xf32>
    %348 = arith.divf %346, %347 : vector<8x1xf32>
    %349 = vector.broadcast %348 : vector<8x1xf32> to vector<8x32xf32>
    %350 = arith.subf %344, %349 : vector<8x32xf32>
    %351 = arith.mulf %350, %350 : vector<8x32xf32>
    %cst_131 = arith.constant dense<0.000000e+00> : vector<8xf32>
    %352 = vector.multi_reduction <add>, %351, %cst_131 [1] : vector<8x32xf32> to vector<8xf32>
    %353 = vector.shape_cast %352 : vector<8xf32> to vector<8x1xf32>
    %cst_132 = arith.constant 3.200000e+01 : f32
    %354 = vector.broadcast %cst_132 : f32 to vector<8x1xf32>
    %355 = arith.divf %353, %354 : vector<8x1xf32>
    %356 = vector.broadcast %348 : vector<8x1xf32> to vector<8x32xf32>
    %357 = arith.subf %344, %356 : vector<8x32xf32>
    %cst_133 = arith.constant 9.99999996E-13 : f32
    %358 = vector.broadcast %cst_133 : f32 to vector<8x1xf32>
    %359 = arith.addf %355, %358 : vector<8x1xf32>
    %360 = math.rsqrt %359 : vector<8x1xf32>
    %361 = vector.broadcast %360 : vector<8x1xf32> to vector<8x32xf32>
    %362 = arith.mulf %357, %361 : vector<8x32xf32>
    %363 = vector.broadcast %31 : vector<1x32xf32> to vector<8x32xf32>
    %364 = arith.mulf %362, %363 : vector<8x32xf32>
    %365 = vector.broadcast %34 : vector<1x32xf32> to vector<8x32xf32>
    %366 = arith.addf %364, %365 : vector<8x32xf32>
    %367 = arith.truncf %366 : vector<8x32xf32> to vector<8x32xbf16>
    %c1_134 = arith.constant 1 : index
    %c0_135 = arith.constant 0 : index
    %c0_136 = arith.constant 0 : index
    %368 = vector.load %arg18[%c1_134, %c0_135, %c0_136] : memref<2x8x32xbf16, #tpu.memory_space<vmem>>, vector<1x8x32xbf16>
    %369 = vector.shape_cast %368 : vector<1x8x32xbf16> to vector<8x32xbf16>
    %370 = vector.shape_cast %367 : vector<8x32xbf16> to vector<1x8x32xbf16>
    tpu.vector_store %arg18[%c1_134, %c0_135, %c0_136], %370 {strides = array<i32>} : memref<2x8x32xbf16, #tpu.memory_space<vmem>>, vector<1x8x32xbf16>,
    %c1_i32 = arith.constant 1 : i32
    %371 = arith.cmpi eq, %arg0, %c1_i32 : i32
    %372 = arith.extui %371 : i1 to i32
    %c0_i32_137 = arith.constant 0 : i32
    %373 = arith.cmpi ne, %372, %c0_i32_137 : i32
    scf.if %373 {
      %c0_138 = arith.constant 0 : index
      %c0_139 = arith.constant 0 : index
      %c0_140 = arith.constant 0 : index
      %374 = vector.load %arg18[%c0_138, %c0_139, %c0_140] : memref<2x8x32xbf16, #tpu.memory_space<vmem>>, vector<2x8x32xbf16>
      %c0_141 = arith.constant 0 : index
      %c0_142 = arith.constant 0 : index
      %c0_143 = arith.constant 0 : index
      %375 = vector.load %arg17[%c0_141, %c0_142, %c0_143] : memref<2x8x32xbf16, #tpu.memory_space<vmem>>, vector<2x8x32xbf16>
      tpu.vector_store %arg17[%c0_141, %c0_142, %c0_143], %374 {strides = array<i32>} : memref<2x8x32xbf16, #tpu.memory_space<vmem>>, vector<2x8x32xbf16>,
    } else {
    }
    return
  }
  func.func @transform_0(%arg0: i32) -> (i32, i32, i32) {
    %c0_i32 = arith.constant 0 : i32
    %c0_i32_0 = arith.constant 0 : i32
    %c0_i32_1 = arith.constant 0 : i32
    %c0_i32_2 = arith.constant 0 : i32
    return %c0_i32, %c0_i32_0, %c0_i32_1 : i32, i32, i32
  }
  func.func @transform_1(%arg0: i32) -> (i32, i32, i32) {
    %c0_i32 = arith.constant 0 : i32
    %c0_i32_0 = arith.constant 0 : i32
    %c0_i32_1 = arith.constant 0 : i32
    %c0_i32_2 = arith.constant 0 : i32
    return %c0_i32, %c0_i32_0, %c0_i32_1 : i32, i32, i32
  }
  func.func @transform_2(%arg0: i32) -> (i32, i32) {
    %c0_i32 = arith.constant 0 : i32
    %c0_i32_0 = arith.constant 0 : i32
    %c0_i32_1 = arith.constant 0 : i32
    return %c0_i32, %c0_i32_0 : i32, i32
  }
  func.func @transform_3(%arg0: i32) -> (i32, i32) {
    %c0_i32 = arith.constant 0 : i32
    %c0_i32_0 = arith.constant 0 : i32
    %c0_i32_1 = arith.constant 0 : i32
    return %c0_i32, %c0_i32_0 : i32, i32
  }
  func.func @transform_4(%arg0: i32) -> (i32, i32, i32) {
    %c0_i32 = arith.constant 0 : i32
    %c0_i32_0 = arith.constant 0 : i32
    %c0_i32_1 = arith.constant 0 : i32
    return %arg0, %c0_i32, %c0_i32_0 : i32, i32, i32
  }
  func.func @transform_5(%arg0: i32) -> (i32, i32, i32) {
    %c0_i32 = arith.constant 0 : i32
    %c0_i32_0 = arith.constant 0 : i32
    %c0_i32_1 = arith.constant 0 : i32
    return %arg0, %c0_i32, %c0_i32_0 : i32, i32, i32
  }
  func.func @transform_6(%arg0: i32) -> (i32, i32, i32) {
    %c0_i32 = arith.constant 0 : i32
    %c0_i32_0 = arith.constant 0 : i32
    %c0_i32_1 = arith.constant 0 : i32
    return %arg0, %c0_i32, %c0_i32_0 : i32, i32, i32
  }
  func.func @transform_7(%arg0: i32) -> (i32, i32, i32) {
    %c0_i32 = arith.constant 0 : i32
    %c0_i32_0 = arith.constant 0 : i32
    %c0_i32_1 = arith.constant 0 : i32
    return %arg0, %c0_i32, %c0_i32_0 : i32, i32, i32
  }
  func.func @transform_8(%arg0: i32) -> (i32, i32, i32) {
    %c0_i32 = arith.constant 0 : i32
    %c0_i32_0 = arith.constant 0 : i32
    %c0_i32_1 = arith.constant 0 : i32
    return %arg0, %c0_i32, %c0_i32_0 : i32, i32, i32
  }
  func.func @transform_9(%arg0: i32) -> (i32, i32, i32) {
    %c0_i32 = arith.constant 0 : i32
    %c0_i32_0 = arith.constant 0 : i32
    %c0_i32_1 = arith.constant 0 : i32
    return %arg0, %c0_i32, %c0_i32_0 : i32, i32, i32
  }
  func.func @transform_10(%arg0: i32) -> (i32, i32, i32) {
    %c0_i32 = arith.constant 0 : i32
    %c0_i32_0 = arith.constant 0 : i32
    %c0_i32_1 = arith.constant 0 : i32
    return %arg0, %c0_i32, %c0_i32_0 : i32, i32, i32
  }
  func.func @transform_11(%arg0: i32) -> (i32, i32, i32) {
    %c0_i32 = arith.constant 0 : i32
    %c0_i32_0 = arith.constant 0 : i32
    %c0_i32_1 = arith.constant 0 : i32
    return %arg0, %c0_i32, %c0_i32_0 : i32, i32, i32
  }
  func.func @transform_12(%arg0: i32) -> (i32, i32, i32) {
    %c0_i32 = arith.constant 0 : i32
    %c0_i32_0 = arith.constant 0 : i32
    %c0_i32_1 = arith.constant 0 : i32
    return %arg0, %c0_i32, %c0_i32_0 : i32, i32, i32
  }
  func.func @transform_13(%arg0: i32) -> (i32, i32, i32) {
    %c0_i32 = arith.constant 0 : i32
    %c0_i32_0 = arith.constant 0 : i32
    %c0_i32_1 = arith.constant 0 : i32
    return %arg0, %c0_i32, %c0_i32_0 : i32, i32, i32
  }
  func.func @transform_14(%arg0: i32) -> (i32, i32, i32) {
    %c0_i32 = arith.constant 0 : i32
    %c0_i32_0 = arith.constant 0 : i32
    %c0_i32_1 = arith.constant 0 : i32
    return %arg0, %c0_i32, %c0_i32_0 : i32, i32, i32
  }
  func.func @transform_15(%arg0: i32) -> (i32, i32, i32) {
    %c0_i32 = arith.constant 0 : i32
    %c0_i32_0 = arith.constant 0 : i32
    %c0_i32_1 = arith.constant 0 : i32
    return %arg0, %c0_i32, %c0_i32_0 : i32, i32, i32
  }
  func.func @transform_16(%arg0: i32) -> (i32, i32, i32) {
    %c0_i32 = arith.constant 0 : i32
    %c0_i32_0 = arith.constant 0 : i32
    %c0_i32_1 = arith.constant 0 : i32
    %c0_i32_2 = arith.constant 0 : i32
    return %c0_i32, %c0_i32_0, %c0_i32_1 : i32, i32, i32
  }
}

</mosaic_0001>

<llo_original>
// kernel: sent_bert_forward.1
$region0: #{sent_bert_forward.1}
  #allocation0 [shape = 'u32[]', space=smem, size = 0x4, offset = 0x4, fixed_abs, tag = 'smem constant byte address 0x4 - core index']
  #allocation1 [shape = 'u32[144,128]{1,0:T(1,128)}', space=vmem, size = 0x12000, scoped, tag = 'internal scratch']
  #allocation2 [shape = 'bf16[2,8,32]{2,1,0:T(8,128)(2,1)}', space=vmem, size = 0x1000, scoped, tag = 'scratch operand']
  #allocation3 [shape = 'bf16[8,32]{1,0:T(8,128)(2,1)}', space=vmem, size = 0x800, scoped, tag = 'scratch operand']
  %s0 = inlined_call_operand.vmem [shape: bf16[2,8,32], index: 0, kind: input, shape index: {}]
  %s1 = inlined_call_operand.vmem [shape: f32[2,1,8], index: 1, kind: input, shape index: {}]
  %s2 = inlined_call_operand.vmem [shape: bf16[1,32], index: 2, kind: input, shape index: {}]
  %s3 = inlined_call_operand.vmem [shape: bf16[1,32], index: 3, kind: input, shape index: {}]
  %s4 = inlined_call_operand.vmem [shape: bf16[2,32,96], index: 4, kind: input, shape index: {}]
  %s5 = inlined_call_operand.vmem [shape: bf16[2,1,96], index: 5, kind: input, shape index: {}]
  %s6 = inlined_call_operand.vmem [shape: bf16[2,32,32], index: 6, kind: input, shape index: {}]
  %s7 = inlined_call_operand.vmem [shape: bf16[2,1,32], index: 7, kind: input, shape index: {}]
  %s8 = inlined_call_operand.vmem [shape: bf16[2,1,32], index: 8, kind: input, shape index: {}]
  %s9 = inlined_call_operand.vmem [shape: bf16[2,1,32], index: 9, kind: input, shape index: {}]
  %s10 = inlined_call_operand.vmem [shape: bf16[2,32,64], index: 10, kind: input, shape index: {}]
  %s11 = inlined_call_operand.vmem [shape: bf16[2,1,64], index: 11, kind: input, shape index: {}]
  %s12 = inlined_call_operand.vmem [shape: bf16[2,64,32], index: 12, kind: input, shape index: {}]
  %s13 = inlined_call_operand.vmem [shape: bf16[2,1,32], index: 13, kind: input, shape index: {}]
  %s14 = inlined_call_operand.vmem [shape: bf16[2,1,32], index: 14, kind: input, shape index: {}]
  %s15 = inlined_call_operand.vmem [shape: bf16[2,1,32], index: 15, kind: input, shape index: {}]
  %s16 = inlined_call_operand.vmem [shape: bf16[2,8,32], index: 16, kind: output, shape index: {}]
  %s17 = sld [smem:[#allocation0]]
  $region105: #{sent_bert_forward.1} parent=0
    _
  %s19 = ssub.s32 1, %s17
  %s20 = scalar_select 0, %s19, %s17
  loop: start=0, step=1, limit=4
  $region2: #{sent_bert_forward.1} parent=0 // loop_pre_header
    _
  $region3: #{sent_bert_forward.1} parent=0 // loop_header
    %s22 = sphi 0, %s26
    %p23 = scmp.ge.s32.totalorder %s22, 4
    %s30 = sphi 0, %s30
    %s32 = sphi 0, %s30
    %s33 = sphi 0, %s32
    %s47 = sphi 0, %s33
    %s51 = sphi 0, %s51
    %s53 = sphi 0, %s51
    %s54 = sphi 0, %s53
    %s68 = sphi 0, %s54
    %s72 = sphi 0, %s72
    %s74 = sphi 0, %s72
    %s75 = sphi 0, %s74
    %s89 = sphi 0, %s75
    %s93 = sphi 0, %s93
    %s95 = sphi 0, %s93
    %s96 = sphi 0, %s95
    %s110 = sphi 0, %s96
    %s116 = sphi 0, %s118
    %s119 = sphi 0, %s116
    %s120 = sphi 0, %s119
    %s136 = sphi 0, %s120
    %s142 = sphi 0, %s144
    %s145 = sphi 0, %s142
    %s146 = sphi 0, %s145
    %s162 = sphi 0, %s146
    %s168 = sphi 0, %s170
    %s171 = sphi 0, %s168
    %s172 = sphi 0, %s171
    %s188 = sphi 0, %s172
    %s194 = sphi 0, %s196
    %s197 = sphi 0, %s194
    %s198 = sphi 0, %s197
    %s214 = sphi 0, %s198
    %s220 = sphi 0, %s222
    %s223 = sphi 0, %s220
    %s224 = sphi 0, %s223
    %s240 = sphi 0, %s224
    %s246 = sphi 0, %s248
    %s249 = sphi 0, %s246
    %s250 = sphi 0, %s249
    %s266 = sphi 0, %s250
    %s272 = sphi 0, %s274
    %s275 = sphi 0, %s272
    %s276 = sphi 0, %s275
    %s292 = sphi 0, %s276
    %s298 = sphi 0, %s300
    %s301 = sphi 0, %s298
    %s302 = sphi 0, %s301
    %s318 = sphi 0, %s302
    %s324 = sphi 0, %s326
    %s327 = sphi 0, %s324
    %s328 = sphi 0, %s327
    %s344 = sphi 0, %s328
    %s350 = sphi 0, %s352
    %s353 = sphi 0, %s350
    %s354 = sphi 0, %s353
    %s370 = sphi 0, %s354
    %s376 = sphi 0, %s378
    %s379 = sphi 0, %s376
    %s380 = sphi 0, %s379
    %s396 = sphi 0, %s380
    %s402 = sphi 0, %s404
    %s405 = sphi 0, %s402
    %s406 = sphi 0, %s405
    %s422 = sphi 0, %s406
    %s426 = sphi 0, %s426
    %s428 = sphi 0, %s426
    %s429 = sphi 0, %s428
    %s443 = sphi 0, %s429
  $region4: #{sent_bert_forward.1} parent=0 // loop_header_branch
    %25 = sbr.rel (%p23) target = $region8
  $region5: #{sent_bert_forward.1} parent=0 // loop_body
    %s27 = ssub.s32 %s22, 1
    %s28 = ssub.s32 %s22, 2
    %s29 = sadd.s32 %s22, 1
    %s31 = sadd.s32 %s30, 1
    %p34 = scmp.eq.s32.totalorder %s22, 1
    %p35 = scmp.ne.s32.totalorder %s30, %s32
    %p36 = scmp.eq.s32.totalorder %s22, 0
    %p37 = por %p35, %p36
    %p38 = scmp.ne.s32.totalorder %s30, %s32
    %p39 = scmp.eq.s32.totalorder %s27, 1
    %p40 = por %p38, %p39
    %p41 = scmp.ne.s32.totalorder %s32, %s33
    %p42 = scmp.eq.s32.totalorder %s27, 0
    %p43 = por %p41, %p42
    %p44 = scmp.ne.s32.totalorder %s32, %s33
    %p45 = scmp.eq.s32.totalorder %s28, 1
    %p46 = por %p44, %p45
    %p48 = scmp.ne.s32.totalorder %s33, %s47
    %p49 = scmp.eq.s32.totalorder %s28, 0
    %p50 = por %p48, %p49
    %s52 = sadd.s32 %s51, 1
    %p55 = scmp.eq.s32.totalorder %s22, 1
    %p56 = scmp.ne.s32.totalorder %s51, %s53
    %p57 = scmp.eq.s32.totalorder %s22, 0
    %p58 = por %p56, %p57
    %p59 = scmp.ne.s32.totalorder %s51, %s53
    %p60 = scmp.eq.s32.totalorder %s27, 1
    %p61 = por %p59, %p60
    %p62 = scmp.ne.s32.totalorder %s53, %s54
    %p63 = scmp.eq.s32.totalorder %s27, 0
    %p64 = por %p62, %p63
    %p65 = scmp.ne.s32.totalorder %s53, %s54
    %p66 = scmp.eq.s32.totalorder %s28, 1
    %p67 = por %p65, %p66
    %p69 = scmp.ne.s32.totalorder %s54, %s68
    %p70 = scmp.eq.s32.totalorder %s28, 0
    %p71 = por %p69, %p70
    %s73 = sadd.s32 %s72, 1
    %p76 = scmp.eq.s32.totalorder %s22, 1
    %p77 = scmp.ne.s32.totalorder %s72, %s74
    %p78 = scmp.eq.s32.totalorder %s22, 0
    %p79 = por %p77, %p78
    %p80 = scmp.ne.s32.totalorder %s72, %s74
    %p81 = scmp.eq.s32.totalorder %s27, 1
    %p82 = por %p80, %p81
    %p83 = scmp.ne.s32.totalorder %s74, %s75
    %p84 = scmp.eq.s32.totalorder %s27, 0
    %p85 = por %p83, %p84
    %p86 = scmp.ne.s32.totalorder %s74, %s75
    %p87 = scmp.eq.s32.totalorder %s28, 1
    %p88 = por %p86, %p87
    %p90 = scmp.ne.s32.totalorder %s75, %s89
    %p91 = scmp.eq.s32.totalorder %s28, 0
    %p92 = por %p90, %p91
    %s94 = sadd.s32 %s93, 1
    %p97 = scmp.eq.s32.totalorder %s22, 1
    %p98 = scmp.ne.s32.totalorder %s93, %s95
    %p99 = scmp.eq.s32.totalorder %s22, 0
    %p100 = por %p98, %p99
    %p101 = scmp.ne.s32.totalorder %s93, %s95
    %p102 = scmp.eq.s32.totalorder %s27, 1
    %p103 = por %p101, %p102
    %p104 = scmp.ne.s32.totalorder %s95, %s96
    %p105 = scmp.eq.s32.totalorder %s27, 0
    %p106 = por %p104, %p105
    %p107 = scmp.ne.s32.totalorder %s95, %s96
    %p108 = scmp.eq.s32.totalorder %s28, 1
    %p109 = por %p107, %p108
    %p111 = scmp.ne.s32.totalorder %s96, %s110
    %p112 = scmp.eq.s32.totalorder %s28, 0
    %p113 = por %p111, %p112
    %s114 = ssub.s32 %s22, %s29
    %p115 = scmp.eq.s32.totalorder %s114, 0
    %s117 = sadd.s32 %s116, 1
    %s118 = scalar_select %p115, %s116, %s117
    %p121 = pneg %p115
    %p122 = scmp.eq.s32.totalorder %s22, 1
    %p123 = por %p121, %p122
    %p124 = scmp.ne.s32.totalorder %s116, %s119
    %p125 = scmp.eq.s32.totalorder %s22, 0
    %p126 = por %p124, %p125
    %p127 = scmp.ne.s32.totalorder %s116, %s119
    %p128 = scmp.eq.s32.totalorder %s27, 1
    %p129 = por %p127, %p128
    %p130 = scmp.ne.s32.totalorder %s119, %s120
    %p131 = scmp.eq.s32.totalorder %s27, 0
    %p132 = por %p130, %p131
    %p133 = scmp.ne.s32.totalorder %s119, %s120
    %p134 = scmp.eq.s32.totalorder %s28, 1
    %p135 = por %p133, %p134
    %p137 = scmp.ne.s32.totalorder %s120, %s136
    %p138 = scmp.eq.s32.totalorder %s28, 0
    %p139 = por %p137, %p138
    %s140 = ssub.s32 %s22, %s29
    %p141 = scmp.eq.s32.totalorder %s140, 0
    %s143 = sadd.s32 %s142, 1
    %s144 = scalar_select %p141, %s142, %s143
    %p147 = pneg %p141
    %p148 = scmp.eq.s32.totalorder %s22, 1
    %p149 = por %p147, %p148
    %p150 = scmp.ne.s32.totalorder %s142, %s145
    %p151 = scmp.eq.s32.totalorder %s22, 0
    %p152 = por %p150, %p151
    %p153 = scmp.ne.s32.totalorder %s142, %s145
    %p154 = scmp.eq.s32.totalorder %s27, 1
    %p155 = por %p153, %p154
    %p156 = scmp.ne.s32.totalorder %s145, %s146
    %p157 = scmp.eq.s32.totalorder %s27, 0
    %p158 = por %p156, %p157
    %p159 = scmp.ne.s32.totalorder %s145, %s146
    %p160 = scmp.eq.s32.totalorder %s28, 1
    %p161 = por %p159, %p160
    %p163 = scmp.ne.s32.totalorder %s146, %s162
    %p164 = scmp.eq.s32.totalorder %s28, 0
    %p165 = por %p163, %p164
    %s166 = ssub.s32 %s22, %s29
    %p167 = scmp.eq.s32.totalorder %s166, 0
    %s169 = sadd.s32 %s168, 1
    %s170 = scalar_select %p167, %s168, %s169
    %p173 = pneg %p167
    %p174 = scmp.eq.s32.totalorder %s22, 1
    %p175 = por %p173, %p174
    %p176 = scmp.ne.s32.totalorder %s168, %s171
    %p177 = scmp.eq.s32.totalorder %s22, 0
    %p178 = por %p176, %p177
    %p179 = scmp.ne.s32.totalorder %s168, %s171
    %p180 = scmp.eq.s32.totalorder %s27, 1
    %p181 = por %p179, %p180
    %p182 = scmp.ne.s32.totalorder %s171, %s172
    %p183 = scmp.eq.s32.totalorder %s27, 0
    %p184 = por %p182, %p183
    %p185 = scmp.ne.s32.totalorder %s171, %s172
    %p186 = scmp.eq.s32.totalorder %s28, 1
    %p187 = por %p185, %p186
    %p189 = scmp.ne.s32.totalorder %s172, %s188
    %p190 = scmp.eq.s32.totalorder %s28, 0
    %p191 = por %p189, %p190
    %s192 = ssub.s32 %s22, %s29
    %p193 = scmp.eq.s32.totalorder %s192, 0
    %s195 = sadd.s32 %s194, 1
    %s196 = scalar_select %p193, %s194, %s195
    %p199 = pneg %p193
    %p200 = scmp.eq.s32.totalorder %s22, 1
    %p201 = por %p199, %p200
    %p202 = scmp.ne.s32.totalorder %s194, %s197
    %p203 = scmp.eq.s32.totalorder %s22, 0
    %p204 = por %p202, %p203
    %p205 = scmp.ne.s32.totalorder %s194, %s197
    %p206 = scmp.eq.s32.totalorder %s27, 1
    %p207 = por %p205, %p206
    %p208 = scmp.ne.s32.totalorder %s197, %s198
    %p209 = scmp.eq.s32.totalorder %s27, 0
    %p210 = por %p208, %p209
    %p211 = scmp.ne.s32.totalorder %s197, %s198
    %p212 = scmp.eq.s32.totalorder %s28, 1
    %p213 = por %p211, %p212
    %p215 = scmp.ne.s32.totalorder %s198, %s214
    %p216 = scmp.eq.s32.totalorder %s28, 0
    %p217 = por %p215, %p216
    %s218 = ssub.s32 %s22, %s29
    %p219 = scmp.eq.s32.totalorder %s218, 0
    %s221 = sadd.s32 %s220, 1
    %s222 = scalar_select %p219, %s220, %s221
    %p225 = pneg %p219
    %p226 = scmp.eq.s32.totalorder %s22, 1
    %p227 = por %p225, %p226
    %p228 = scmp.ne.s32.totalorder %s220, %s223
    %p229 = scmp.eq.s32.totalorder %s22, 0
    %p230 = por %p228, %p229
    %p231 = scmp.ne.s32.totalorder %s220, %s223
    %p232 = scmp.eq.s32.totalorder %s27, 1
    %p233 = por %p231, %p232
    %p234 = scmp.ne.s32.totalorder %s223, %s224
    %p235 = scmp.eq.s32.totalorder %s27, 0
    %p236 = por %p234, %p235
    %p237 = scmp.ne.s32.totalorder %s223, %s224
    %p238 = scmp.eq.s32.totalorder %s28, 1
    %p239 = por %p237, %p238
    %p241 = scmp.ne.s32.totalorder %s224, %s240
    %p242 = scmp.eq.s32.totalorder %s28, 0
    %p243 = por %p241, %p242
    %s244 = ssub.s32 %s22, %s29
    %p245 = scmp.eq.s32.totalorder %s244, 0
    %s247 = sadd.s32 %s246, 1
    %s248 = scalar_select %p245, %s246, %s247
    %p251 = pneg %p245
    %p252 = scmp.eq.s32.totalorder %s22, 1
    %p253 = por %p251, %p252
    %p254 = scmp.ne.s32.totalorder %s246, %s249
    %p255 = scmp.eq.s32.totalorder %s22, 0
    %p256 = por %p254, %p255
    %p257 = scmp.ne.s32.totalorder %s246, %s249
    %p258 = scmp.eq.s32.totalorder %s27, 1
    %p259 = por %p257, %p258
    %p260 = scmp.ne.s32.totalorder %s249, %s250
    %p261 = scmp.eq.s32.totalorder %s27, 0
    %p262 = por %p260, %p261
    %p263 = scmp.ne.s32.totalorder %s249, %s250
    %p264 = scmp.eq.s32.totalorder %s28, 1
    %p265 = por %p263, %p264
    %p267 = scmp.ne.s32.totalorder %s250, %s266
    %p268 = scmp.eq.s32.totalorder %s28, 0
    %p269 = por %p267, %p268
    %s270 = ssub.s32 %s22, %s29
    %p271 = scmp.eq.s32.totalorder %s270, 0
    %s273 = sadd.s32 %s272, 1
    %s274 = scalar_select %p271, %s272, %s273
    %p277 = pneg %p271
    %p278 = scmp.eq.s32.totalorder %s22, 1
    %p279 = por %p277, %p278
    %p280 = scmp.ne.s32.totalorder %s272, %s275
    %p281 = scmp.eq.s32.totalorder %s22, 0
    %p282 = por %p280, %p281
    %p283 = scmp.ne.s32.totalorder %s272, %s275
    %p284 = scmp.eq.s32.totalorder %s27, 1
    %p285 = por %p283, %p284
    %p286 = scmp.ne.s32.totalorder %s275, %s276
    %p287 = scmp.eq.s32.totalorder %s27, 0
    %p288 = por %p286, %p287
    %p289 = scmp.ne.s32.totalorder %s275, %s276
    %p290 = scmp.eq.s32.totalorder %s28, 1
    %p291 = por %p289, %p290
    %p293 = scmp.ne.s32.totalorder %s276, %s292
    %p294 = scmp.eq.s32.totalorder %s28, 0
    %p295 = por %p293, %p294
    %s296 = ssub.s32 %s22, %s29
    %p297 = scmp.eq.s32.totalorder %s296, 0
    %s299 = sadd.s32 %s298, 1
    %s300 = scalar_select %p297, %s298, %s299
    %p303 = pneg %p297
    %p304 = scmp.eq.s32.totalorder %s22, 1
    %p305 = por %p303, %p304
    %p306 = scmp.ne.s32.totalorder %s298, %s301
    %p307 = scmp.eq.s32.totalorder %s22, 0
    %p308 = por %p306, %p307
    %p309 = scmp.ne.s32.totalorder %s298, %s301
    %p310 = scmp.eq.s32.totalorder %s27, 1
    %p311 = por %p309, %p310
    %p312 = scmp.ne.s32.totalorder %s301, %s302
    %p313 = scmp.eq.s32.totalorder %s27, 0
    %p314 = por %p312, %p313
    %p315 = scmp.ne.s32.totalorder %s301, %s302
    %p316 = scmp.eq.s32.totalorder %s28, 1
    %p317 = por %p315, %p316
    %p319 = scmp.ne.s32.totalorder %s302, %s318
    %p320 = scmp.eq.s32.totalorder %s28, 0
    %p321 = por %p319, %p320
    %s322 = ssub.s32 %s22, %s29
    %p323 = scmp.eq.s32.totalorder %s322, 0
    %s325 = sadd.s32 %s324, 1
    %s326 = scalar_select %p323, %s324, %s325
    %p329 = pneg %p323
    %p330 = scmp.eq.s32.totalorder %s22, 1
    %p331 = por %p329, %p330
    %p332 = scmp.ne.s32.totalorder %s324, %s327
    %p333 = scmp.eq.s32.totalorder %s22, 0
    %p334 = por %p332, %p333
    %p335 = scmp.ne.s32.totalorder %s324, %s327
    %p336 = scmp.eq.s32.totalorder %s27, 1
    %p337 = por %p335, %p336
    %p338 = scmp.ne.s32.totalorder %s327, %s328
    %p339 = scmp.eq.s32.totalorder %s27, 0
    %p340 = por %p338, %p339
    %p341 = scmp.ne.s32.totalorder %s327, %s328
    %p342 = scmp.eq.s32.totalorder %s28, 1
    %p343 = por %p341, %p342
    %p345 = scmp.ne.s32.totalorder %s328, %s344
    %p346 = scmp.eq.s32.totalorder %s28, 0
    %p347 = por %p345, %p346
    %s348 = ssub.s32 %s22, %s29
    %p349 = scmp.eq.s32.totalorder %s348, 0
    %s351 = sadd.s32 %s350, 1
    %s352 = scalar_select %p349, %s350, %s351
    %p355 = pneg %p349
    %p356 = scmp.eq.s32.totalorder %s22, 1
    %p357 = por %p355, %p356
    %p358 = scmp.ne.s32.totalorder %s350, %s353
    %p359 = scmp.eq.s32.totalorder %s22, 0
    %p360 = por %p358, %p359
    %p361 = scmp.ne.s32.totalorder %s350, %s353
    %p362 = scmp.eq.s32.totalorder %s27, 1
    %p363 = por %p361, %p362
    %p364 = scmp.ne.s32.totalorder %s353, %s354
    %p365 = scmp.eq.s32.totalorder %s27, 0
    %p366 = por %p364, %p365
    %p367 = scmp.ne.s32.totalorder %s353, %s354
    %p368 = scmp.eq.s32.totalorder %s28, 1
    %p369 = por %p367, %p368
    %p371 = scmp.ne.s32.totalorder %s354, %s370
    %p372 = scmp.eq.s32.totalorder %s28, 0
    %p373 = por %p371, %p372
    %s374 = ssub.s32 %s22, %s29
    %p375 = scmp.eq.s32.totalorder %s374, 0
    %s377 = sadd.s32 %s376, 1
    %s378 = scalar_select %p375, %s376, %s377
    %p381 = pneg %p375
    %p382 = scmp.eq.s32.totalorder %s22, 1
    %p383 = por %p381, %p382
    %p384 = scmp.ne.s32.totalorder %s376, %s379
    %p385 = scmp.eq.s32.totalorder %s22, 0
    %p386 = por %p384, %p385
    %p387 = scmp.ne.s32.totalorder %s376, %s379
    %p388 = scmp.eq.s32.totalorder %s27, 1
    %p389 = por %p387, %p388
    %p390 = scmp.ne.s32.totalorder %s379, %s380
    %p391 = scmp.eq.s32.totalorder %s27, 0
    %p392 = por %p390, %p391
    %p393 = scmp.ne.s32.totalorder %s379, %s380
    %p394 = scmp.eq.s32.totalorder %s28, 1
    %p395 = por %p393, %p394
    %p397 = scmp.ne.s32.totalorder %s380, %s396
    %p398 = scmp.eq.s32.totalorder %s28, 0
    %p399 = por %p397, %p398
    %s400 = ssub.s32 %s22, %s29
    %p401 = scmp.eq.s32.totalorder %s400, 0
    %s403 = sadd.s32 %s402, 1
    %s404 = scalar_select %p401, %s402, %s403
    %p407 = pneg %p401
    %p408 = scmp.eq.s32.totalorder %s22, 1
    %p409 = por %p407, %p408
    %p410 = scmp.ne.s32.totalorder %s402, %s405
    %p411 = scmp.eq.s32.totalorder %s22, 0
    %p412 = por %p410, %p411
    %p413 = scmp.ne.s32.totalorder %s402, %s405
    %p414 = scmp.eq.s32.totalorder %s27, 1
    %p415 = por %p413, %p414
    %p416 = scmp.ne.s32.totalorder %s405, %s406
    %p417 = scmp.eq.s32.totalorder %s27, 0
    %p418 = por %p416, %p417
    %p419 = scmp.ne.s32.totalorder %s405, %s406
    %p420 = scmp.eq.s32.totalorder %s28, 1
    %p421 = por %p419, %p420
    %p423 = scmp.ne.s32.totalorder %s406, %s422
    %p424 = scmp.eq.s32.totalorder %s28, 0
    %p425 = por %p423, %p424
    %s427 = sadd.s32 %s426, 1
    %p430 = scmp.eq.s32.totalorder %s22, 1
    %p431 = scmp.ne.s32.totalorder %s426, %s428
    %p432 = scmp.eq.s32.totalorder %s22, 0
    %p433 = por %p431, %p432
    %p434 = scmp.ne.s32.totalorder %s426, %s428
    %p435 = scmp.eq.s32.totalorder %s27, 1
    %p436 = por %p434, %p435
    %p437 = scmp.ne.s32.totalorder %s428, %s429
    %p438 = scmp.eq.s32.totalorder %s27, 0
    %p439 = por %p437, %p438
    %p440 = scmp.ne.s32.totalorder %s428, %s429
    %p441 = scmp.eq.s32.totalorder %s28, 1
    %p442 = por %p440, %p441
    %p444 = scmp.ne.s32.totalorder %s429, %s443
    %p445 = scmp.eq.s32.totalorder %s28, 0
    %p446 = por %p444, %p445
    %p447 = scmp.le.s32.totalorder 1, %s22
    %p448 = scmp.lt.s32.totalorder %s22, 3
    %p449 = pnand %p447, %p448
    %p450 = pneg %p449
    // Predicated region
    $region9: #{sent_bert_forward.1} parent=5 // pred_check
      _
    $region10: #{sent_bert_forward.1} parent=5 // pred_check_branch
      %452 = sbr.rel (%p449) target = $region12
    $region11: #{sent_bert_forward.1} parent=5 // pred_region
      %s453 = ssub.s32 %s22, 1
      // Predicated region
      $region13: #{sent_bert_forward.1} parent=11 // pred_check
        %p454 = pneg %p43
      $region14: #{sent_bert_forward.1} parent=11 // pred_check_branch
        %456 = sbr.rel (%p454) target = $region16
      $region15: #{sent_bert_forward.1} parent=11 // pred_region
        _
      $region16: #{sent_bert_forward.1} parent=11 // pred_fallthru
        _
      // Predicated region
      $region17: #{sent_bert_forward.1} parent=11 // pred_check
        %p457 = pneg %p64
      $region18: #{sent_bert_forward.1} parent=11 // pred_check_branch
        %459 = sbr.rel (%p457) target = $region20
      $region19: #{sent_bert_forward.1} parent=11 // pred_region
        _
      $region20: #{sent_bert_forward.1} parent=11 // pred_fallthru
        _
      // Predicated region
      $region21: #{sent_bert_forward.1} parent=11 // pred_check
        %p460 = pneg %p85
      $region22: #{sent_bert_forward.1} parent=11 // pred_check_branch
        %462 = sbr.rel (%p460) target = $region24
      $region23: #{sent_bert_forward.1} parent=11 // pred_region
        _
      $region24: #{sent_bert_forward.1} parent=11 // pred_fallthru
        _
      // Predicated region
      $region25: #{sent_bert_forward.1} parent=11 // pred_check
        %p463 = pneg %p106
      $region26: #{sent_bert_forward.1} parent=11 // pred_check_branch
        %465 = sbr.rel (%p463) target = $region28
      $region27: #{sent_bert_forward.1} parent=11 // pred_region
        _
      $region28: #{sent_bert_forward.1} parent=11 // pred_fallthru
        _
    $region12: #{sent_bert_forward.1} parent=5 // pred_fallthru
      _
    %p466 = scmp.lt.s32.totalorder %s22, 2
    // Predicated region
    $region29: #{sent_bert_forward.1} parent=5 // pred_check
      %p467 = pneg %p466
    $region30: #{sent_bert_forward.1} parent=5 // pred_check_branch
      %469 = sbr.rel (%p467) target = $region32
    $region31: #{sent_bert_forward.1} parent=5 // pred_region
      // Predicated region
      $region33: #{sent_bert_forward.1} parent=31 // pred_check
        %p470 = pneg %p126
      $region34: #{sent_bert_forward.1} parent=31 // pred_check_branch
        %472 = sbr.rel (%p470) target = $region36
      $region35: #{sent_bert_forward.1} parent=31 // pred_region
        %p473 = scmp.lt.s32.totalorder %s22, 1
        %s474 = scalar_select %p473, %s22, 1
        %s475 = smul.addr %s474, 4
        %s476 = smul.addr %s475, 4
        %s477 = scalar_lea.vmem %s4, %s476
      $region36: #{sent_bert_forward.1} parent=31 // pred_fallthru
        _
      // Predicated region
      $region37: #{sent_bert_forward.1} parent=31 // pred_check
        %p478 = pneg %p152
      $region38: #{sent_bert_forward.1} parent=31 // pred_check_branch
        %480 = sbr.rel (%p478) target = $region40
      $region39: #{sent_bert_forward.1} parent=31 // pred_region
        %p481 = scmp.lt.s32.totalorder %s22, 1
        %s482 = scalar_select %p481, %s22, 1
        %s483 = scalar_lea.vmem %s5, %s482
      $region40: #{sent_bert_forward.1} parent=31 // pred_fallthru
        _
      // Predicated region
      $region41: #{sent_bert_forward.1} parent=31 // pred_check
        %p484 = pneg %p178
      $region42: #{sent_bert_forward.1} parent=31 // pred_check_branch
        %486 = sbr.rel (%p484) target = $region44
      $region43: #{sent_bert_forward.1} parent=31 // pred_region
        %p487 = scmp.lt.s32.totalorder %s22, 1
        %s488 = scalar_select %p487, %s22, 1
        %s489 = smul.addr %s488, 4
        %s490 = smul.addr %s489, 4
        %s491 = scalar_lea.vmem %s6, %s490
      $region44: #{sent_bert_forward.1} parent=31 // pred_fallthru
        _
      // Predicated region
      $region45: #{sent_bert_forward.1} parent=31 // pred_check
        %p492 = pneg %p204
      $region46: #{sent_bert_forward.1} parent=31 // pred_check_branch
        %494 = sbr.rel (%p492) target = $region48
      $region47: #{sent_bert_forward.1} parent=31 // pred_region
        %p495 = scmp.lt.s32.totalorder %s22, 1
        %s496 = scalar_select %p495, %s22, 1
        %s497 = scalar_lea.vmem %s7, %s496
      $region48: #{sent_bert_forward.1} parent=31 // pred_fallthru
        _
      // Predicated region
      $region49: #{sent_bert_forward.1} parent=31 // pred_check
        %p498 = pneg %p230
      $region50: #{sent_bert_forward.1} parent=31 // pred_check_branch
        %500 = sbr.rel (%p498) target = $region52
      $region51: #{sent_bert_forward.1} parent=31 // pred_region
        %p501 = scmp.lt.s32.totalorder %s22, 1
        %s502 = scalar_select %p501, %s22, 1
        %s503 = scalar_lea.vmem %s8, %s502
      $region52: #{sent_bert_forward.1} parent=31 // pred_fallthru
        _
      // Predicated region
      $region53: #{sent_bert_forward.1} parent=31 // pred_check
        %p504 = pneg %p256
      $region54: #{sent_bert_forward.1} parent=31 // pred_check_branch
        %506 = sbr.rel (%p504) target = $region56
      $region55: #{sent_bert_forward.1} parent=31 // pred_region
        %p507 = scmp.lt.s32.totalorder %s22, 1
        %s508 = scalar_select %p507, %s22, 1
        %s509 = scalar_lea.vmem %s9, %s508
      $region56: #{sent_bert_forward.1} parent=31 // pred_fallthru
        _
      // Predicated region
      $region57: #{sent_bert_forward.1} parent=31 // pred_check
        %p510 = pneg %p282
      $region58: #{sent_bert_forward.1} parent=31 // pred_check_branch
        %512 = sbr.rel (%p510) target = $region60
      $region59: #{sent_bert_forward.1} parent=31 // pred_region
        %p513 = scmp.lt.s32.totalorder %s22, 1
        %s514 = scalar_select %p513, %s22, 1
        %s515 = smul.addr %s514, 4
        %s516 = smul.addr %s515, 4
        %s517 = scalar_lea.vmem %s10, %s516
      $region60: #{sent_bert_forward.1} parent=31 // pred_fallthru
        _
      // Predicated region
      $region61: #{sent_bert_forward.1} parent=31 // pred_check
        %p518 = pneg %p308
      $region62: #{sent_bert_forward.1} parent=31 // pred_check_branch
        %520 = sbr.rel (%p518) target = $region64
      $region63: #{sent_bert_forward.1} parent=31 // pred_region
        %p521 = scmp.lt.s32.totalorder %s22, 1
        %s522 = scalar_select %p521, %s22, 1
        %s523 = scalar_lea.vmem %s11, %s522
      $region64: #{sent_bert_forward.1} parent=31 // pred_fallthru
        _
      // Predicated region
      $region65: #{sent_bert_forward.1} parent=31 // pred_check
        %p524 = pneg %p334
      $region66: #{sent_bert_forward.1} parent=31 // pred_check_branch
        %526 = sbr.rel (%p524) target = $region68
      $region67: #{sent_bert_forward.1} parent=31 // pred_region
        %p527 = scmp.lt.s32.totalorder %s22, 1
        %s528 = scalar_select %p527, %s22, 1
        %s529 = smul.addr %s528, 8
        %s530 = smul.addr %s529, 4
        %s531 = scalar_lea.vmem %s12, %s530
      $region68: #{sent_bert_forward.1} parent=31 // pred_fallthru
        _
      // Predicated region
      $region69: #{sent_bert_forward.1} parent=31 // pred_check
        %p532 = pneg %p360
      $region70: #{sent_bert_forward.1} parent=31 // pred_check_branch
        %534 = sbr.rel (%p532) target = $region72
      $region71: #{sent_bert_forward.1} parent=31 // pred_region
        %p535 = scmp.lt.s32.totalorder %s22, 1
        %s536 = scalar_select %p535, %s22, 1
        %s537 = scalar_lea.vmem %s13, %s536
      $region72: #{sent_bert_forward.1} parent=31 // pred_fallthru
        _
      // Predicated region
      $region73: #{sent_bert_forward.1} parent=31 // pred_check
        %p538 = pneg %p386
      $region74: #{sent_bert_forward.1} parent=31 // pred_check_branch
        %540 = sbr.rel (%p538) target = $region76
      $region75: #{sent_bert_forward.1} parent=31 // pred_region
        %p541 = scmp.lt.s32.totalorder %s22, 1
        %s542 = scalar_select %p541, %s22, 1
        %s543 = scalar_lea.vmem %s14, %s542
      $region76: #{sent_bert_forward.1} parent=31 // pred_fallthru
        _
      // Predicated region
      $region77: #{sent_bert_forward.1} parent=31 // pred_check
        %p544 = pneg %p412
      $region78: #{sent_bert_forward.1} parent=31 // pred_check_branch
        %546 = sbr.rel (%p544) target = $region80
      $region79: #{sent_bert_forward.1} parent=31 // pred_region
        %p547 = scmp.lt.s32.totalorder %s22, 1
        %s548 = scalar_select %p547, %s22, 1
        %s549 = scalar_lea.vmem %s15, %s548
      $region80: #{sent_bert_forward.1} parent=31 // pred_fallthru
        _
    $region32: #{sent_bert_forward.1} parent=5 // pred_fallthru
      _
    %p550 = scmp.le.s32.totalorder 1, %s22
    %p551 = scmp.lt.s32.totalorder %s22, 3
    %p552 = pnand %p550, %p551
    %p553 = pneg %p552
    // Predicated region
    $region81: #{sent_bert_forward.1} parent=5 // pred_check
      _
    $region82: #{sent_bert_forward.1} parent=5 // pred_check_branch
      %555 = sbr.rel (%p552) target = $region84
    $region83: #{sent_bert_forward.1} parent=5 // pred_region
      %s556 = ssub.s32 %s22, 1
      %p557 = pneg %p43
      %p558 = pneg %p40
      %p559 = pneg %p64
      %p560 = pneg %p61
      %p561 = pneg %p85
      %p562 = pneg %p82
      %p563 = pneg %p106
      %p564 = pneg %p103
      %p565 = scmp.lt.s32.totalorder %s27, 1
      %s566 = scalar_select %p565, %s27, 1
      %s567 = smul.addr %s566, 4
      %s568 = smul.addr %s567, 4
      %s569 = scalar_lea.vmem %s4, %s568
      %p570 = pneg %p132
      %p571 = pneg %p129
      %p572 = scmp.lt.s32.totalorder %s27, 1
      %s573 = scalar_select %p572, %s27, 1
      %s574 = scalar_lea.vmem %s5, %s573
      %p575 = pneg %p158
      %p576 = pneg %p155
      %p577 = scmp.lt.s32.totalorder %s27, 1
      %s578 = scalar_select %p577, %s27, 1
      %s579 = smul.addr %s578, 4
      %s580 = smul.addr %s579, 4
      %s581 = scalar_lea.vmem %s6, %s580
      %p582 = pneg %p184
      %p583 = pneg %p181
      %p584 = scmp.lt.s32.totalorder %s27, 1
      %s585 = scalar_select %p584, %s27, 1
      %s586 = scalar_lea.vmem %s7, %s585
      %p587 = pneg %p210
      %p588 = pneg %p207
      %p589 = scmp.lt.s32.totalorder %s27, 1
      %s590 = scalar_select %p589, %s27, 1
      %s591 = scalar_lea.vmem %s8, %s590
      %p592 = pneg %p236
      %p593 = pneg %p233
      %p594 = scmp.lt.s32.totalorder %s27, 1
      %s595 = scalar_select %p594, %s27, 1
      %s596 = scalar_lea.vmem %s9, %s595
      %p597 = pneg %p262
      %p598 = pneg %p259
      %p599 = scmp.lt.s32.totalorder %s27, 1
      %s600 = scalar_select %p599, %s27, 1
      %s601 = smul.addr %s600, 4
      %s602 = smul.addr %s601, 4
      %s603 = scalar_lea.vmem %s10, %s602
      %p604 = pneg %p288
      %p605 = pneg %p285
      %p606 = scmp.lt.s32.totalorder %s27, 1
      %s607 = scalar_select %p606, %s27, 1
      %s608 = scalar_lea.vmem %s11, %s607
      %p609 = pneg %p314
      %p610 = pneg %p311
      %p611 = scmp.lt.s32.totalorder %s27, 1
      %s612 = scalar_select %p611, %s27, 1
      %s613 = smul.addr %s612, 8
      %s614 = smul.addr %s613, 4
      %s615 = scalar_lea.vmem %s12, %s614
      %p616 = pneg %p340
      %p617 = pneg %p337
      %p618 = scmp.lt.s32.totalorder %s27, 1
      %s619 = scalar_select %p618, %s27, 1
      %s620 = scalar_lea.vmem %s13, %s619
      %p621 = pneg %p366
      %p622 = pneg %p363
      %p623 = scmp.lt.s32.totalorder %s27, 1
      %s624 = scalar_select %p623, %s27, 1
      %s625 = scalar_lea.vmem %s14, %s624
      %p626 = pneg %p392
      %p627 = pneg %p389
      %p628 = scmp.lt.s32.totalorder %s27, 1
      %s629 = scalar_select %p628, %s27, 1
      %s630 = scalar_lea.vmem %s15, %s629
      %p631 = pneg %p418
      %p632 = pneg %p415
      %p633 = pneg %p439
      %p634 = pneg %p436
      %p635 = scmp.lt.s32.totalorder %s27, 1
      %s636 = scalar_select %p635, %s27, 1
      %s637 = smul.addr %s636, 4
      %s638 = smul.addr %s637, 4
      %s639 = scalar_lea.vmem %s4, %s638
      %p640 = scmp.lt.s32.totalorder %s27, 1
      %s641 = scalar_select %p640, %s27, 1
      %s642 = scalar_lea.vmem %s5, %s641
      %p643 = scmp.lt.s32.totalorder %s27, 1
      %s644 = scalar_select %p643, %s27, 1
      %s645 = smul.addr %s644, 4
      %s646 = smul.addr %s645, 4
      %s647 = scalar_lea.vmem %s6, %s646
      %p648 = scmp.lt.s32.totalorder %s27, 1
      %s649 = scalar_select %p648, %s27, 1
      %s650 = scalar_lea.vmem %s7, %s649
      %p651 = scmp.lt.s32.totalorder %s27, 1
      %s652 = scalar_select %p651, %s27, 1
      %s653 = scalar_lea.vmem %s8, %s652
      %p654 = scmp.lt.s32.totalorder %s27, 1
      %s655 = scalar_select %p654, %s27, 1
      %s656 = scalar_lea.vmem %s9, %s655
      %p657 = scmp.lt.s32.totalorder %s27, 1
      %s658 = scalar_select %p657, %s27, 1
      %s659 = smul.addr %s658, 4
      %s660 = smul.addr %s659, 4
      %s661 = scalar_lea.vmem %s10, %s660
      %p662 = scmp.lt.s32.totalorder %s27, 1
      %s663 = scalar_select %p662, %s27, 1
      %s664 = scalar_lea.vmem %s11, %s663
      %p665 = scmp.lt.s32.totalorder %s27, 1
      %s666 = scalar_select %p665, %s27, 1
      %s667 = smul.addr %s666, 8
      %s668 = smul.addr %s667, 4
      %s669 = scalar_lea.vmem %s12, %s668
      %p670 = scmp.lt.s32.totalorder %s27, 1
      %s671 = scalar_select %p670, %s27, 1
      %s672 = scalar_lea.vmem %s13, %s671
      %p673 = scmp.lt.s32.totalorder %s27, 1
      %s674 = scalar_select %p673, %s27, 1
      %s675 = scalar_lea.vmem %s14, %s674
      %p676 = scmp.lt.s32.totalorder %s27, 1
      %s677 = scalar_select %p676, %s27, 1
      %s678 = scalar_lea.vmem %s15, %s677
      %p680 = scmp.eq.s32.totalorder %s27, 0
      // Predicated region
      $region85: #{sent_bert_forward.1} parent=83 // pred_check
        %p681 = pneg %p680
      $region86: #{sent_bert_forward.1} parent=83 // pred_check_branch
        %683 = sbr.rel (%p681) target = $region88
      $region87: #{sent_bert_forward.1} parent=83 // pred_region
        %v684 = vld [vmem:[%s2] sm:$0x1]
        %v685 = vunpack.c.l.bf16 %v684
        %v686 = vld [vmem:[%s3] sm:$0x1]
        %v687 = vunpack.c.l.bf16 %v686
        %v688 = vld [vmem:[%s0] sm:$0xf]
        %v689 = vunpack.c.l.bf16 %v688
        %vm690 = vcmask 261120
        %v691 = vsel %vm690, %v689, 0.0
        %692 = vadd.xlane.f32.xlu0 %v691
        %v693 = vpop.xlane.xlu0 %692
        %v694 = vrcp.pop 32.0
        %v695 = vmul.f32 %v693, %v694
        %v696 = vsub.f32 %v689, %v695
        %v697 = vmul.f32 %v696, %v696
        %v698 = vsel %vm690, %v697, 0.0
        %699 = vadd.xlane.f32.xlu0 %v698
        %v700 = vpop.xlane.xlu0 %699
        %v701 = vmul.f32 %v700, %v694
        %v702 = vadd.f32 %v701, 1e-12
        %v703 = vrsqrt.pop %v702
        %v704 = vmul.f32 %v696, %v703
        %v705 = vlaneseq
        %v706 = vshrl.u32 %v705, 7
        %v707 = vsub.s32 0, %v706
        %v708 = vrot.slane %v685, %v707
        %v709 = vmul.f32 %v704, %v708
        %v710 = vlaneseq
        %v711 = vshrl.u32 %v710, 7
        %v712 = vsub.s32 0, %v711
        %v713 = vrot.slane %v687, %v712
        %v714 = vadd.f32 %v709, %v713
        %v715 = vpack.c.bf16 %v714, %v714
        %vm716 = vcmask 257024
        %717 = vst.msk [vmem:[#allocation2] sm:$0xf] %vm716, %v715
        %s718 = scalar_lea.vmem %s0, 4
        %v719 = vld [vmem:[%s718] sm:$0xf]
        %v720 = vunpack.c.l.bf16 %v719
        %v721 = vsel %vm690, %v720, 0.0
        %722 = vadd.xlane.f32.xlu0 %v721
        %v723 = vpop.xlane.xlu0 %722
        %v724 = vmul.f32 %v723, %v694
        %v725 = vsub.f32 %v720, %v724
        %v726 = vmul.f32 %v725, %v725
        %v727 = vsel %vm690, %v726, 0.0
        %728 = vadd.xlane.f32.xlu0 %v727
        %v729 = vpop.xlane.xlu0 %728
        %v730 = vmul.f32 %v729, %v694
        %v731 = vadd.f32 %v730, 1e-12
        %v732 = vrsqrt.pop %v731
        %v733 = vmul.f32 %v725, %v732
        %v734 = vmul.f32 %v733, %v708
        %v735 = vadd.f32 %v734, %v713
        %v736 = vpack.c.bf16 %v735, %v735
        %s737 = scalar_lea.vmem [#allocation2], 4
        %738 = vst.msk [vmem:[%s737] sm:$0xf] %vm716, %v736
      $region88: #{sent_bert_forward.1} parent=83 // pred_fallthru
        _
      %v739 = vld [vmem:[%s639] sm:$0xf]
      %v740 = vld [vmem:[%s639 + $0x4] sm:$0xf]
      %v741 = vld [vmem:[%s639 + $0x8] sm:$0xf]
      %v742 = vld [vmem:[%s639 + $0xc] sm:$0xf]
      %v743 = vld [vmem:[%s642] sm:$0x1]
      %v744 = vunpack.c.l.bf16 %v743
      %v745 = vld [vmem:[%s647] sm:$0xf]
      %v746 = vld [vmem:[%s647 + $0x4] sm:$0xf]
      %v747 = vld [vmem:[%s647 + $0x8] sm:$0xf]
      %v748 = vld [vmem:[%s647 + $0xc] sm:$0xf]
      %v749 = vld [vmem:[%s650] sm:$0x1]
      %v750 = vunpack.c.l.bf16 %v749
      %v751 = vld [vmem:[%s653] sm:$0x1]
      %v752 = vunpack.c.l.bf16 %v751
      %v753 = vld [vmem:[%s656] sm:$0x1]
      %v754 = vunpack.c.l.bf16 %v753
      %v755 = vld [vmem:[%s661] sm:$0xf]
      %v756 = vld [vmem:[%s661 + $0x4] sm:$0xf]
      %v757 = vld [vmem:[%s661 + $0x8] sm:$0xf]
      %v758 = vld [vmem:[%s661 + $0xc] sm:$0xf]
      %v759 = vld [vmem:[%s664] sm:$0x1]
      %v760 = vunpack.c.l.bf16 %v759
      %v761 = vld [vmem:[%s669] sm:$0xf]
      %v762 = vld [vmem:[%s669 + $0x4] sm:$0xf]
      %v763 = vld [vmem:[%s669 + $0x8] sm:$0xf]
      %v764 = vld [vmem:[%s669 + $0xc] sm:$0xf]
      %v765 = vld [vmem:[%s669 + $0x10] sm:$0xf]
      %v766 = vld [vmem:[%s669 + $0x14] sm:$0xf]
      %v767 = vld [vmem:[%s669 + $0x18] sm:$0xf]
      %v768 = vld [vmem:[%s669 + $0x1c] sm:$0xf]
      %v769 = vld [vmem:[%s672] sm:$0x1]
      %v770 = vunpack.c.l.bf16 %v769
      %v771 = vld [vmem:[%s675] sm:$0x1]
      %v772 = vunpack.c.l.bf16 %v771
      %v773 = vld [vmem:[%s678] sm:$0x1]
      %v774 = vunpack.c.l.bf16 %v773
      %v775 = vld [vmem:[#allocation2] sm:$0xf]
      %v776 = vld [vmem:[%s1] sm:$0x1]
      %v777 = vlaneseq
      %v778 = vshrl.u32 %v777, 7
      %v779 = vsub.s32 0, %v778
      %v780 = vrot.slane %v744, %v779
      %v785 = vunpack.c.l.b16 %v739
      %v786 = vunpack.c.l.b16 %v740
      %v787 = vunpack.c.l.b16 %v741
      %v788 = vunpack.c.l.b16 %v742
      %v789 = vpack.c.b16 %v786, %v785
      %v790 = vpack.c.b16 %v788, %v787
      %vm793 = vcmask 261120
      %v795 = vsel %vm793, %v775, 0
      %797 = vmatprep.subr.bf16.mxu0 0
      %798 = vmatpush1.bf16.msra.mxu0 %v789
      %799 = vmatprep.subr.bf16.mxu0 0
      %800 = vmatpush1.bf16.msra.mxu0 %v790
      %801 = vmatprep.subr.bf16.mxu0 0
      %802 = vmatpush1.bf16.msra.mxu0 0
      %803 = vmatprep.subr.bf16.mxu0 0
      %804 = vmatpush1.bf16.msra.mxu0 0
      %805 = vmatprep.subr.bf16.mxu0 0
      %806 = vmatpush1.bf16.msra.mxu0 0
      %807 = vmatprep.subr.bf16.mxu0 0
      %808 = vmatpush1.bf16.msra.mxu0 0
      %809 = vmatprep.subr.bf16.mxu0 0
      %810 = vmatpush1.bf16.msra.mxu0 0
      %811 = vmatprep.subr.bf16.mxu0 0
      %812 = vmatpush1.bf16.msra.mxu0 0
      %813 = vmatprep.subr.bf16.mxu0 0
      %814 = vmatpush1.bf16.msra.mxu0 0
      %815 = vmatprep.subr.bf16.mxu0 0
      %816 = vmatpush1.bf16.msra.mxu0 0
      %817 = vmatprep.subr.bf16.mxu0 0
      %818 = vmatpush1.bf16.msra.mxu0 0
      %819 = vmatprep.subr.bf16.mxu0 0
      %820 = vmatpush1.bf16.msra.mxu0 0
      %821 = vmatprep.subr.bf16.mxu0 0
      %822 = vmatpush1.bf16.msra.mxu0 0
      %823 = vmatprep.subr.bf16.mxu0 0
      %824 = vmatpush1.bf16.msra.mxu0 0
      %825 = vmatprep.subr.bf16.mxu0 0
      %826 = vmatpush1.bf16.msra.mxu0 0
      %827 = vmatprep.subr.bf16.mxu0 0
      %828 = vmatpush1.bf16.msra.mxu0 0
      %829 = vmatprep.mubr.bf16.mxu0 0
      %830 = vmatmul.mubr.bf16.gmra.mrb[0].mxu0 %v795
      %v831 = vpop.f32.mrb[0].mxu0
      %v832 = vadd.f32 %v780, %v831
      %v833 = vpop.f32.mrb[0].mxu0
      %v834 = vpop.f32.mrb[0].mxu0
      %v835 = vpop.f32.mrb[0].mxu0
      %836 = vdwg.mxu0
      %v837 = vpack.c.bf16 %v832, %v832
      %v839 = vlaneseq
      %v840 = vshrl.u32 %v839, 7
      %v841 = vsub.s32 0, %v840
      %v842 = vrot.slane %v776, %v841
      %845 = vrot.lane.b32.xlu0 %v837, 96
      %v846 = vpop.permute.xlu0 %845
      %vm847 = vcmask 64512
      %v849 = vsel %vm847, %v837, 0
      %v852 = vsel %vm847, %v846, 0
      %854 = vmatprep.subr.bf16.mxu0 0
      %855 = vmatpush1.bf16.xpose.msra.mxu0 %v852
      %856 = vmatprep.subr.bf16.mxu0 0
      %857 = vmatpush1.bf16.xpose.msra.mxu0 0
      %858 = vmatprep.subr.bf16.mxu0 0
      %859 = vmatpush1.bf16.xpose.msra.mxu0 0
      %860 = vmatprep.subr.bf16.mxu0 0
      %861 = vmatpush1.bf16.xpose.msra.mxu0 0
      %862 = vmatprep.subr.bf16.mxu0 0
      %863 = vmatpush1.bf16.xpose.msra.mxu0 0
      %864 = vmatprep.subr.bf16.mxu0 0
      %865 = vmatpush1.bf16.xpose.msra.mxu0 0
      %866 = vmatprep.subr.bf16.mxu0 0
      %867 = vmatpush1.bf16.xpose.msra.mxu0 0
      %868 = vmatprep.subr.bf16.mxu0 0
      %869 = vmatpush1.bf16.xpose.msra.mxu0 0
      %870 = vmatprep.subr.bf16.mxu0 0
      %871 = vmatpush1.bf16.xpose.msra.mxu0 0
      %872 = vmatprep.subr.bf16.mxu0 0
      %873 = vmatpush1.bf16.xpose.msra.mxu0 0
      %874 = vmatprep.subr.bf16.mxu0 0
      %875 = vmatpush1.bf16.xpose.msra.mxu0 0
      %876 = vmatprep.subr.bf16.mxu0 0
      %877 = vmatpush1.bf16.xpose.msra.mxu0 0
      %878 = vmatprep.subr.bf16.mxu0 0
      %879 = vmatpush1.bf16.xpose.msra.mxu0 0
      %880 = vmatprep.subr.bf16.mxu0 0
      %881 = vmatpush1.bf16.xpose.msra.mxu0 0
      %882 = vmatprep.subr.bf16.mxu0 0
      %883 = vmatpush1.bf16.xpose.msra.mxu0 0
      %884 = vmatprep.subr.bf16.mxu0 0
      %885 = vmatpush1.bf16.xpose.msra.mxu0 0
      %886 = vmatprep.mubr.bf16.mxu0 0
      %887 = vmatmul.mubr.bf16.gmra.mrb[0].mxu0 %v849
      %v888 = vpop.f32.mrb[0].mxu0
      %v889 = vadd.f32 %v842, %v888
      %v890 = vpop.f32.mrb[0].mxu0
      %v891 = vpop.f32.mrb[0].mxu0
      %v892 = vpop.f32.mrb[0].mxu0
      %893 = vdwg.mxu0
      %v894 = vsel %vm847, %v889, -inf
      %895 = vmax.xlane.f32.xlu0 %v894
      %v896 = vpop.xlane.xlu0 %895
      %v897 = vsub.f32 %v889, %v896
      %v898 = vmul.f32 %v897, 1.442695
      %v899 = vpow.pop %v898
      %v900 = vsel %vm847, %v899, 0.0
      %901 = vadd.xlane.f32.xlu0 %v900
      %v902 = vpop.xlane.xlu0 %901
      %v903 = vrcp.pop %v902
      %v904 = vmul.f32 %v899, %v903
      %v905 = vpack.c.bf16 %v904, %v904
      %906 = vrot.lane.b32.xlu0 %v837, 64
      %v907 = vpop.permute.xlu0 %906
      %v909 = vsel %vm847, %v905, 0
      %vm911 = vcmask 1043456
      %v913 = vsel %vm911, %v907, 0
      %915 = vmatprep.subr.bf16.mxu0 0
      %916 = vmatpush1.bf16.msra.mxu0 %v913
      %917 = vmatprep.subr.bf16.mxu0 0
      %918 = vmatpush1.bf16.msra.mxu0 0
      %919 = vmatprep.subr.bf16.mxu0 0
      %920 = vmatpush1.bf16.msra.mxu0 0
      %921 = vmatprep.subr.bf16.mxu0 0
      %922 = vmatpush1.bf16.msra.mxu0 0
      %923 = vmatprep.subr.bf16.mxu0 0
      %924 = vmatpush1.bf16.msra.mxu0 0
      %925 = vmatprep.subr.bf16.mxu0 0
      %926 = vmatpush1.bf16.msra.mxu0 0
      %927 = vmatprep.subr.bf16.mxu0 0
      %928 = vmatpush1.bf16.msra.mxu0 0
      %929 = vmatprep.subr.bf16.mxu0 0
      %930 = vmatpush1.bf16.msra.mxu0 0
      %931 = vmatprep.subr.bf16.mxu0 0
      %932 = vmatpush1.bf16.msra.mxu0 0
      %933 = vmatprep.subr.bf16.mxu0 0
      %934 = vmatpush1.bf16.msra.mxu0 0
      %935 = vmatprep.subr.bf16.mxu0 0
      %936 = vmatpush1.bf16.msra.mxu0 0
      %937 = vmatprep.subr.bf16.mxu0 0
      %938 = vmatpush1.bf16.msra.mxu0 0
      %939 = vmatprep.subr.bf16.mxu0 0
      %940 = vmatpush1.bf16.msra.mxu0 0
      %941 = vmatprep.subr.bf16.mxu0 0
      %942 = vmatpush1.bf16.msra.mxu0 0
      %943 = vmatprep.subr.bf16.mxu0 0
      %944 = vmatpush1.bf16.msra.mxu0 0
      %945 = vmatprep.subr.bf16.mxu0 0
      %946 = vmatpush1.bf16.msra.mxu0 0
      %947 = vmatprep.mubr.bf16.mxu0 0
      %948 = vmatmul.mubr.bf16.gmra.mrb[0].mxu0 %v909
      %v949 = vpop.f32.mrb[0].mxu0
      %v950 = vadd.f32 0.0, %v949
      %v951 = vpop.f32.mrb[0].mxu0
      %v952 = vpop.f32.mrb[0].mxu0
      %v953 = vpop.f32.mrb[0].mxu0
      %954 = vdwg.mxu0
      %v955 = vpack.c.bf16 %v950, %v950
      %vm956 = vcmask 60416
      %957 = vst.msk [vmem:[#allocation3] sm:$0xf] %vm956, %v955
      %958 = vrot.lane.b32.xlu0 %v837, 120
      %v959 = vpop.permute.xlu0 %958
      %960 = vrot.lane.b32.xlu0 %v837, 88
      %v961 = vpop.permute.xlu0 %960
      %v963 = vsel %vm847, %v959, 0
      %v966 = vsel %vm847, %v961, 0
      %968 = vmatprep.subr.bf16.mxu0 0
      %969 = vmatpush1.bf16.xpose.msra.mxu0 %v966
      %970 = vmatprep.subr.bf16.mxu0 0
      %971 = vmatpush1.bf16.xpose.msra.mxu0 0
      %972 = vmatprep.subr.bf16.mxu0 0
      %973 = vmatpush1.bf16.xpose.msra.mxu0 0
      %974 = vmatprep.subr.bf16.mxu0 0
      %975 = vmatpush1.bf16.xpose.msra.mxu0 0
      %976 = vmatprep.subr.bf16.mxu0 0
      %977 = vmatpush1.bf16.xpose.msra.mxu0 0
      %978 = vmatprep.subr.bf16.mxu0 0
      %979 = vmatpush1.bf16.xpose.msra.mxu0 0
      %980 = vmatprep.subr.bf16.mxu0 0
      %981 = vmatpush1.bf16.xpose.msra.mxu0 0
      %982 = vmatprep.subr.bf16.mxu0 0
      %983 = vmatpush1.bf16.xpose.msra.mxu0 0
      %984 = vmatprep.subr.bf16.mxu0 0
      %985 = vmatpush1.bf16.xpose.msra.mxu0 0
      %986 = vmatprep.subr.bf16.mxu0 0
      %987 = vmatpush1.bf16.xpose.msra.mxu0 0
      %988 = vmatprep.subr.bf16.mxu0 0
      %989 = vmatpush1.bf16.xpose.msra.mxu0 0
      %990 = vmatprep.subr.bf16.mxu0 0
      %991 = vmatpush1.bf16.xpose.msra.mxu0 0
      %992 = vmatprep.subr.bf16.mxu0 0
      %993 = vmatpush1.bf16.xpose.msra.mxu0 0
      %994 = vmatprep.subr.bf16.mxu0 0
      %995 = vmatpush1.bf16.xpose.msra.mxu0 0
      %996 = vmatprep.subr.bf16.mxu0 0
      %997 = vmatpush1.bf16.xpose.msra.mxu0 0
      %998 = vmatprep.subr.bf16.mxu0 0
      %999 = vmatpush1.bf16.xpose.msra.mxu0 0
      %1000 = vmatprep.mubr.bf16.mxu0 0
      %1001 = vmatmul.mubr.bf16.gmra.mrb[0].mxu0 %v963
      %v1002 = vpop.f32.mrb[0].mxu0
      %v1003 = vadd.f32 %v842, %v1002
      %v1004 = vpop.f32.mrb[0].mxu0
      %v1005 = vpop.f32.mrb[0].mxu0
      %v1006 = vpop.f32.mrb[0].mxu0
      %1007 = vdwg.mxu0
      %v1008 = vsel %vm847, %v1003, -inf
      %1009 = vmax.xlane.f32.xlu0 %v1008
      %v1010 = vpop.xlane.xlu0 %1009
      %v1011 = vsub.f32 %v1003, %v1010
      %v1012 = vmul.f32 %v1011, 1.442695
      %v1013 = vpow.pop %v1012
      %v1014 = vsel %vm847, %v1013, 0.0
      %1015 = vadd.xlane.f32.xlu0 %v1014
      %v1016 = vpop.xlane.xlu0 %1015
      %v1017 = vrcp.pop %v1016
      %v1018 = vmul.f32 %v1013, %v1017
      %v1019 = vpack.c.bf16 %v1018, %v1018
      %1020 = vrot.lane.b32.xlu0 %v837, 56
      %v1021 = vpop.permute.xlu0 %1020
      %v1023 = vsel %vm847, %v1019, 0
      %v1026 = vsel %vm911, %v1021, 0
      %1028 = vmatprep.subr.bf16.mxu0 0
      %1029 = vmatpush1.bf16.msra.mxu0 %v1026
      %1030 = vmatprep.subr.bf16.mxu0 0
      %1031 = vmatpush1.bf16.msra.mxu0 0
      %1032 = vmatprep.subr.bf16.mxu0 0
      %1033 = vmatpush1.bf16.msra.mxu0 0
      %1034 = vmatprep.subr.bf16.mxu0 0
      %1035 = vmatpush1.bf16.msra.mxu0 0
      %1036 = vmatprep.subr.bf16.mxu0 0
      %1037 = vmatpush1.bf16.msra.mxu0 0
      %1038 = vmatprep.subr.bf16.mxu0 0
      %1039 = vmatpush1.bf16.msra.mxu0 0
      %1040 = vmatprep.subr.bf16.mxu0 0
      %1041 = vmatpush1.bf16.msra.mxu0 0
      %1042 = vmatprep.subr.bf16.mxu0 0
      %1043 = vmatpush1.bf16.msra.mxu0 0
      %1044 = vmatprep.subr.bf16.mxu0 0
      %1045 = vmatpush1.bf16.msra.mxu0 0
      %1046 = vmatprep.subr.bf16.mxu0 0
      %1047 = vmatpush1.bf16.msra.mxu0 0
      %1048 = vmatprep.subr.bf16.mxu0 0
      %1049 = vmatpush1.bf16.msra.mxu0 0
      %1050 = vmatprep.subr.bf16.mxu0 0
      %1051 = vmatpush1.bf16.msra.mxu0 0
      %1052 = vmatprep.subr.bf16.mxu0 0
      %1053 = vmatpush1.bf16.msra.mxu0 0
      %1054 = vmatprep.subr.bf16.mxu0 0
      %1055 = vmatpush1.bf16.msra.mxu0 0
      %1056 = vmatprep.subr.bf16.mxu0 0
      %1057 = vmatpush1.bf16.msra.mxu0 0
      %1058 = vmatprep.subr.bf16.mxu0 0
      %1059 = vmatpush1.bf16.msra.mxu0 0
      %1060 = vmatprep.mubr.bf16.mxu0 0
      %1061 = vmatmul.mubr.bf16.gmra.mrb[0].mxu0 %v1023
      %v1062 = vpop.f32.mrb[0].mxu0
      %v1063 = vadd.f32 0.0, %v1062
      %v1064 = vpop.f32.mrb[0].mxu0
      %v1065 = vpop.f32.mrb[0].mxu0
      %v1066 = vpop.f32.mrb[0].mxu0
      %1067 = vdwg.mxu0
      %v1068 = vpack.c.bf16 %v1063, %v1063
      %v1070 = vunpack.c.l.b16 %v1068
      %v1071 = vpack.c.b16 %v1070, %v1070
      %1072 = vrot.lane.b32.xlu0 %v1071, 8
      %v1073 = vpop.permute.xlu0 %1072
      %vm1075 = vcmask 126016
      %1076 = vst.msk [vmem:[#allocation3] sm:$0xf] %vm1075, %v1073
      %1077 = vrot.lane.b32.xlu0 %v837, 112
      %v1078 = vpop.permute.xlu0 %1077
      %1079 = vrot.lane.b32.xlu0 %v837, 80
      %v1080 = vpop.permute.xlu0 %1079
      %v1082 = vsel %vm847, %v1078, 0
      %v1085 = vsel %vm847, %v1080, 0
      %1087 = vmatprep.subr.bf16.mxu0 0
      %1088 = vmatpush1.bf16.xpose.msra.mxu0 %v1085
      %1089 = vmatprep.subr.bf16.mxu0 0
      %1090 = vmatpush1.bf16.xpose.msra.mxu0 0
      %1091 = vmatprep.subr.bf16.mxu0 0
      %1092 = vmatpush1.bf16.xpose.msra.mxu0 0
      %1093 = vmatprep.subr.bf16.mxu0 0
      %1094 = vmatpush1.bf16.xpose.msra.mxu0 0
      %1095 = vmatprep.subr.bf16.mxu0 0
      %1096 = vmatpush1.bf16.xpose.msra.mxu0 0
      %1097 = vmatprep.subr.bf16.mxu0 0
      %1098 = vmatpush1.bf16.xpose.msra.mxu0 0
      %1099 = vmatprep.subr.bf16.mxu0 0
      %1100 = vmatpush1.bf16.xpose.msra.mxu0 0
      %1101 = vmatprep.subr.bf16.mxu0 0
      %1102 = vmatpush1.bf16.xpose.msra.mxu0 0
      %1103 = vmatprep.subr.bf16.mxu0 0
      %1104 = vmatpush1.bf16.xpose.msra.mxu0 0
      %1105 = vmatprep.subr.bf16.mxu0 0
      %1106 = vmatpush1.bf16.xpose.msra.mxu0 0
      %1107 = vmatprep.subr.bf16.mxu0 0
      %1108 = vmatpush1.bf16.xpose.msra.mxu0 0
      %1109 = vmatprep.subr.bf16.mxu0 0
      %1110 = vmatpush1.bf16.xpose.msra.mxu0 0
      %1111 = vmatprep.subr.bf16.mxu0 0
      %1112 = vmatpush1.bf16.xpose.msra.mxu0 0
      %1113 = vmatprep.subr.bf16.mxu0 0
      %1114 = vmatpush1.bf16.xpose.msra.mxu0 0
      %1115 = vmatprep.subr.bf16.mxu0 0
      %1116 = vmatpush1.bf16.xpose.msra.mxu0 0
      %1117 = vmatprep.subr.bf16.mxu0 0
      %1118 = vmatpush1.bf16.xpose.msra.mxu0 0
      %1119 = vmatprep.mubr.bf16.mxu0 0
      %1120 = vmatmul.mubr.bf16.gmra.mrb[0].mxu0 %v1082
      %v1121 = vpop.f32.mrb[0].mxu0
      %v1122 = vadd.f32 %v842, %v1121
      %v1123 = vpop.f32.mrb[0].mxu0
      %v1124 = vpop.f32.mrb[0].mxu0
      %v1125 = vpop.f32.mrb[0].mxu0
      %1126 = vdwg.mxu0
      %v1127 = vsel %vm847, %v1122, -inf
      %1128 = vmax.xlane.f32.xlu0 %v1127
      %v1129 = vpop.xlane.xlu0 %1128
      %v1130 = vsub.f32 %v1122, %v1129
      %v1131 = vmul.f32 %v1130, 1.442695
      %v1132 = vpow.pop %v1131
      %v1133 = vsel %vm847, %v1132, 0.0
      %1134 = vadd.xlane.f32.xlu0 %v1133
      %v1135 = vpop.xlane.xlu0 %1134
      %v1136 = vrcp.pop %v1135
      %v1137 = vmul.f32 %v1132, %v1136
      %v1138 = vpack.c.bf16 %v1137, %v1137
      %1139 = vrot.lane.b32.xlu0 %v837, 48
      %v1140 = vpop.permute.xlu0 %1139
      %v1142 = vsel %vm847, %v1138, 0
      %v1145 = vsel %vm911, %v1140, 0
      %1147 = vmatprep.subr.bf16.mxu0 0
      %1148 = vmatpush1.bf16.msra.mxu0 %v1145
      %1149 = vmatprep.subr.bf16.mxu0 0
      %1150 = vmatpush1.bf16.msra.mxu0 0
      %1151 = vmatprep.subr.bf16.mxu0 0
      %1152 = vmatpush1.bf16.msra.mxu0 0
      %1153 = vmatprep.subr.bf16.mxu0 0
      %1154 = vmatpush1.bf16.msra.mxu0 0
      %1155 = vmatprep.subr.bf16.mxu0 0
      %1156 = vmatpush1.bf16.msra.mxu0 0
      %1157 = vmatprep.subr.bf16.mxu0 0
      %1158 = vmatpush1.bf16.msra.mxu0 0
      %1159 = vmatprep.subr.bf16.mxu0 0
      %1160 = vmatpush1.bf16.msra.mxu0 0
      %1161 = vmatprep.subr.bf16.mxu0 0
      %1162 = vmatpush1.bf16.msra.mxu0 0
      %1163 = vmatprep.subr.bf16.mxu0 0
      %1164 = vmatpush1.bf16.msra.mxu0 0
      %1165 = vmatprep.subr.bf16.mxu0 0
      %1166 = vmatpush1.bf16.msra.mxu0 0
      %1167 = vmatprep.subr.bf16.mxu0 0
      %1168 = vmatpush1.bf16.msra.mxu0 0
      %1169 = vmatprep.subr.bf16.mxu0 0
      %1170 = vmatpush1.bf16.msra.mxu0 0
      %1171 = vmatprep.subr.bf16.mxu0 0
      %1172 = vmatpush1.bf16.msra.mxu0 0
      %1173 = vmatprep.subr.bf16.mxu0 0
      %1174 = vmatpush1.bf16.msra.mxu0 0
      %1175 = vmatprep.subr.bf16.mxu0 0
      %1176 = vmatpush1.bf16.msra.mxu0 0
      %1177 = vmatprep.subr.bf16.mxu0 0
      %1178 = vmatpush1.bf16.msra.mxu0 0
      %1179 = vmatprep.mubr.bf16.mxu0 0
      %1180 = vmatmul.mubr.bf16.gmra.mrb[0].mxu0 %v1142
      %v1181 = vpop.f32.mrb[0].mxu0
      %v1182 = vadd.f32 0.0, %v1181
      %v1183 = vpop.f32.mrb[0].mxu0
      %v1184 = vpop.f32.mrb[0].mxu0
      %v1185 = vpop.f32.mrb[0].mxu0
      %1186 = vdwg.mxu0
      %v1187 = vpack.c.bf16 %v1182, %v1182
      %v1189 = vunpack.c.l.b16 %v1187
      %v1190 = vpack.c.b16 %v1189, %v1189
      %1191 = vrot.lane.b32.xlu0 %v1190, 16
      %v1192 = vpop.permute.xlu0 %1191
      %vm1194 = vcmask 191616
      %1195 = vst.msk [vmem:[#allocation3] sm:$0xf] %vm1194, %v1192
      %1196 = vrot.lane.b32.xlu0 %v837, 104
      %v1197 = vpop.permute.xlu0 %1196
      %1198 = vrot.lane.b32.xlu0 %v837, 72
      %v1199 = vpop.permute.xlu0 %1198
      %v1201 = vsel %vm847, %v1197, 0
      %v1204 = vsel %vm847, %v1199, 0
      %1206 = vmatprep.subr.bf16.mxu0 0
      %1207 = vmatpush1.bf16.xpose.msra.mxu0 %v1204
      %1208 = vmatprep.subr.bf16.mxu0 0
      %1209 = vmatpush1.bf16.xpose.msra.mxu0 0
      %1210 = vmatprep.subr.bf16.mxu0 0
      %1211 = vmatpush1.bf16.xpose.msra.mxu0 0
      %1212 = vmatprep.subr.bf16.mxu0 0
      %1213 = vmatpush1.bf16.xpose.msra.mxu0 0
      %1214 = vmatprep.subr.bf16.mxu0 0
      %1215 = vmatpush1.bf16.xpose.msra.mxu0 0
      %1216 = vmatprep.subr.bf16.mxu0 0
      %1217 = vmatpush1.bf16.xpose.msra.mxu0 0
      %1218 = vmatprep.subr.bf16.mxu0 0
      %1219 = vmatpush1.bf16.xpose.msra.mxu0 0
      %1220 = vmatprep.subr.bf16.mxu0 0
      %1221 = vmatpush1.bf16.xpose.msra.mxu0 0
      %1222 = vmatprep.subr.bf16.mxu0 0
      %1223 = vmatpush1.bf16.xpose.msra.mxu0 0
      %1224 = vmatprep.subr.bf16.mxu0 0
      %1225 = vmatpush1.bf16.xpose.msra.mxu0 0
      %1226 = vmatprep.subr.bf16.mxu0 0
      %1227 = vmatpush1.bf16.xpose.msra.mxu0 0
      %1228 = vmatprep.subr.bf16.mxu0 0
      %1229 = vmatpush1.bf16.xpose.msra.mxu0 0
      %1230 = vmatprep.subr.bf16.mxu0 0
      %1231 = vmatpush1.bf16.xpose.msra.mxu0 0
      %1232 = vmatprep.subr.bf16.mxu0 0
      %1233 = vmatpush1.bf16.xpose.msra.mxu0 0
      %1234 = vmatprep.subr.bf16.mxu0 0
      %1235 = vmatpush1.bf16.xpose.msra.mxu0 0
      %1236 = vmatprep.subr.bf16.mxu0 0
      %1237 = vmatpush1.bf16.xpose.msra.mxu0 0
      %1238 = vmatprep.mubr.bf16.mxu0 0
      %1239 = vmatmul.mubr.bf16.gmra.mrb[0].mxu0 %v1201
      %v1240 = vpop.f32.mrb[0].mxu0
      %v1241 = vadd.f32 %v842, %v1240
      %v1242 = vpop.f32.mrb[0].mxu0
      %v1243 = vpop.f32.mrb[0].mxu0
      %v1244 = vpop.f32.mrb[0].mxu0
      %1245 = vdwg.mxu0
      %v1246 = vsel %vm847, %v1241, -inf
      %1247 = vmax.xlane.f32.xlu0 %v1246
      %v1248 = vpop.xlane.xlu0 %1247
      %v1249 = vsub.f32 %v1241, %v1248
      %v1250 = vmul.f32 %v1249, 1.442695
      %v1251 = vpow.pop %v1250
      %v1252 = vsel %vm847, %v1251, 0.0
      %1253 = vadd.xlane.f32.xlu0 %v1252
      %v1254 = vpop.xlane.xlu0 %1253
      %v1255 = vrcp.pop %v1254
      %v1256 = vmul.f32 %v1251, %v1255
      %v1257 = vpack.c.bf16 %v1256, %v1256
      %1258 = vrot.lane.b32.xlu0 %v837, 40
      %v1259 = vpop.permute.xlu0 %1258
      %v1261 = vsel %vm847, %v1257, 0
      %v1264 = vsel %vm911, %v1259, 0
      %1266 = vmatprep.subr.bf16.mxu0 0
      %1267 = vmatpush1.bf16.msra.mxu0 %v1264
      %1268 = vmatprep.subr.bf16.mxu0 0
      %1269 = vmatpush1.bf16.msra.mxu0 0
      %1270 = vmatprep.subr.bf16.mxu0 0
      %1271 = vmatpush1.bf16.msra.mxu0 0
      %1272 = vmatprep.subr.bf16.mxu0 0
      %1273 = vmatpush1.bf16.msra.mxu0 0
      %1274 = vmatprep.subr.bf16.mxu0 0
      %1275 = vmatpush1.bf16.msra.mxu0 0
      %1276 = vmatprep.subr.bf16.mxu0 0
      %1277 = vmatpush1.bf16.msra.mxu0 0
      %1278 = vmatprep.subr.bf16.mxu0 0
      %1279 = vmatpush1.bf16.msra.mxu0 0
      %1280 = vmatprep.subr.bf16.mxu0 0
      %1281 = vmatpush1.bf16.msra.mxu0 0
      %1282 = vmatprep.subr.bf16.mxu0 0
      %1283 = vmatpush1.bf16.msra.mxu0 0
      %1284 = vmatprep.subr.bf16.mxu0 0
      %1285 = vmatpush1.bf16.msra.mxu0 0
      %1286 = vmatprep.subr.bf16.mxu0 0
      %1287 = vmatpush1.bf16.msra.mxu0 0
      %1288 = vmatprep.subr.bf16.mxu0 0
      %1289 = vmatpush1.bf16.msra.mxu0 0
      %1290 = vmatprep.subr.bf16.mxu0 0
      %1291 = vmatpush1.bf16.msra.mxu0 0
      %1292 = vmatprep.subr.bf16.mxu0 0
      %1293 = vmatpush1.bf16.msra.mxu0 0
      %1294 = vmatprep.subr.bf16.mxu0 0
      %1295 = vmatpush1.bf16.msra.mxu0 0
      %1296 = vmatprep.subr.bf16.mxu0 0
      %1297 = vmatpush1.bf16.msra.mxu0 0
      %1298 = vmatprep.mubr.bf16.mxu0 0
      %1299 = vmatmul.mubr.bf16.gmra.mrb[0].mxu0 %v1261
      %v1300 = vpop.f32.mrb[0].mxu0
      %v1301 = vadd.f32 0.0, %v1300
      %v1302 = vpop.f32.mrb[0].mxu0
      %v1303 = vpop.f32.mrb[0].mxu0
      %v1304 = vpop.f32.mrb[0].mxu0
      %1305 = vdwg.mxu0
      %v1306 = vpack.c.bf16 %v1301, %v1301
      %v1308 = vunpack.c.l.b16 %v1306
      %v1309 = vpack.c.b16 %v1308, %v1308
      %1310 = vrot.lane.b32.xlu0 %v1309, 24
      %v1311 = vpop.permute.xlu0 %1310
      %vm1313 = vcmask 257216
      %1314 = vst.msk [vmem:[#allocation3] sm:$0xf] %vm1313, %v1311
      %v1315 = vld [vmem:[#allocation3] sm:$0xf]
      %v1316 = vlaneseq
      %v1317 = vshrl.u32 %v1316, 7
      %v1318 = vsub.s32 0, %v1317
      %v1319 = vrot.slane %v750, %v1318
      %v1324 = vunpack.c.l.b16 %v745
      %v1325 = vunpack.c.l.b16 %v746
      %v1326 = vunpack.c.l.b16 %v747
      %v1327 = vunpack.c.l.b16 %v748
      %v1328 = vpack.c.b16 %v1325, %v1324
      %v1329 = vpack.c.b16 %v1327, %v1326
      %v1333 = vsel %vm793, %v1315, 0
      %1335 = vmatprep.subr.bf16.mxu0 0
      %1336 = vmatpush1.bf16.msra.mxu0 %v1328
      %1337 = vmatprep.subr.bf16.mxu0 0
      %1338 = vmatpush1.bf16.msra.mxu0 %v1329
      %1339 = vmatprep.subr.bf16.mxu0 0
      %1340 = vmatpush1.bf16.msra.mxu0 0
      %1341 = vmatprep.subr.bf16.mxu0 0
      %1342 = vmatpush1.bf16.msra.mxu0 0
      %1343 = vmatprep.subr.bf16.mxu0 0
      %1344 = vmatpush1.bf16.msra.mxu0 0
      %1345 = vmatprep.subr.bf16.mxu0 0
      %1346 = vmatpush1.bf16.msra.mxu0 0
      %1347 = vmatprep.subr.bf16.mxu0 0
      %1348 = vmatpush1.bf16.msra.mxu0 0
      %1349 = vmatprep.subr.bf16.mxu0 0
      %1350 = vmatpush1.bf16.msra.mxu0 0
      %1351 = vmatprep.subr.bf16.mxu0 0
      %1352 = vmatpush1.bf16.msra.mxu0 0
      %1353 = vmatprep.subr.bf16.mxu0 0
      %1354 = vmatpush1.bf16.msra.mxu0 0
      %1355 = vmatprep.subr.bf16.mxu0 0
      %1356 = vmatpush1.bf16.msra.mxu0 0
      %1357 = vmatprep.subr.bf16.mxu0 0
      %1358 = vmatpush1.bf16.msra.mxu0 0
      %1359 = vmatprep.subr.bf16.mxu0 0
      %1360 = vmatpush1.bf16.msra.mxu0 0
      %1361 = vmatprep.subr.bf16.mxu0 0
      %1362 = vmatpush1.bf16.msra.mxu0 0
      %1363 = vmatprep.subr.bf16.mxu0 0
      %1364 = vmatpush1.bf16.msra.mxu0 0
      %1365 = vmatprep.subr.bf16.mxu0 0
      %1366 = vmatpush1.bf16.msra.mxu0 0
      %1367 = vmatprep.mubr.bf16.mxu0 0
      %1368 = vmatmul.mubr.bf16.gmra.mrb[0].mxu0 %v1333
      %v1369 = vpop.f32.mrb[0].mxu0
      %v1370 = vadd.f32 %v1319, %v1369
      %v1371 = vpop.f32.mrb[0].mxu0
      %v1372 = vpop.f32.mrb[0].mxu0
      %v1373 = vpop.f32.mrb[0].mxu0
      %1374 = vdwg.mxu0
      %v1375 = vunpack.c.l.bf16 %v775
      %v1376 = vadd.f32 %v1370, %v1375
      %v1377 = vsel %vm793, %v1376, 0.0
      %1378 = vadd.xlane.f32.xlu0 %v1377
      %v1379 = vpop.xlane.xlu0 %1378
      %v1380 = vrcp.pop 32.0
      %v1381 = vmul.f32 %v1379, %v1380
      %v1382 = vsub.f32 %v1376, %v1381
      %v1383 = vmul.f32 %v1382, %v1382
      %v1384 = vsel %vm793, %v1383, 0.0
      %1385 = vadd.xlane.f32.xlu0 %v1384
      %v1386 = vpop.xlane.xlu0 %1385
      %v1387 = vmul.f32 %v1386, %v1380
      %v1388 = vadd.f32 %v1387, 1e-12
      %v1389 = vrsqrt.pop %v1388
      %v1390 = vmul.f32 %v1382, %v1389
      %v1391 = vlaneseq
      %v1392 = vshrl.u32 %v1391, 7
      %v1393 = vsub.s32 0, %v1392
      %v1394 = vrot.slane %v752, %v1393
      %v1395 = vmul.f32 %v1390, %v1394
      %v1396 = vlaneseq
      %v1397 = vshrl.u32 %v1396, 7
      %v1398 = vsub.s32 0, %v1397
      %v1399 = vrot.slane %v754, %v1398
      %v1400 = vadd.f32 %v1395, %v1399
      %v1401 = vpack.c.bf16 %v1400, %v1400
      %v1402 = vlaneseq
      %v1403 = vshrl.u32 %v1402, 7
      %v1404 = vsub.s32 0, %v1403
      %v1405 = vrot.slane %v760, %v1404
      %v1410 = vunpack.c.l.b16 %v755
      %v1411 = vunpack.c.l.b16 %v756
      %v1412 = vunpack.c.l.b16 %v757
      %v1413 = vunpack.c.l.b16 %v758
      %v1414 = vpack.c.b16 %v1411, %v1410
      %v1415 = vpack.c.b16 %v1413, %v1412
      %v1419 = vsel %vm793, %v1401, 0
      %1421 = vmatprep.subr.bf16.mxu0 0
      %1422 = vmatpush1.bf16.msra.mxu0 %v1414
      %1423 = vmatprep.subr.bf16.mxu0 0
      %1424 = vmatpush1.bf16.msra.mxu0 %v1415
      %1425 = vmatprep.subr.bf16.mxu0 0
      %1426 = vmatpush1.bf16.msra.mxu0 0
      %1427 = vmatprep.subr.bf16.mxu0 0
      %1428 = vmatpush1.bf16.msra.mxu0 0
      %1429 = vmatprep.subr.bf16.mxu0 0
      %1430 = vmatpush1.bf16.msra.mxu0 0
      %1431 = vmatprep.subr.bf16.mxu0 0
      %1432 = vmatpush1.bf16.msra.mxu0 0
      %1433 = vmatprep.subr.bf16.mxu0 0
      %1434 = vmatpush1.bf16.msra.mxu0 0
      %1435 = vmatprep.subr.bf16.mxu0 0
      %1436 = vmatpush1.bf16.msra.mxu0 0
      %1437 = vmatprep.subr.bf16.mxu0 0
      %1438 = vmatpush1.bf16.msra.mxu0 0
      %1439 = vmatprep.subr.bf16.mxu0 0
      %1440 = vmatpush1.bf16.msra.mxu0 0
      %1441 = vmatprep.subr.bf16.mxu0 0
      %1442 = vmatpush1.bf16.msra.mxu0 0
      %1443 = vmatprep.subr.bf16.mxu0 0
      %1444 = vmatpush1.bf16.msra.mxu0 0
      %1445 = vmatprep.subr.bf16.mxu0 0
      %1446 = vmatpush1.bf16.msra.mxu0 0
      %1447 = vmatprep.subr.bf16.mxu0 0
      %1448 = vmatpush1.bf16.msra.mxu0 0
      %1449 = vmatprep.subr.bf16.mxu0 0
      %1450 = vmatpush1.bf16.msra.mxu0 0
      %1451 = vmatprep.subr.bf16.mxu0 0
      %1452 = vmatpush1.bf16.msra.mxu0 0
      %1453 = vmatprep.mubr.bf16.mxu0 0
      %1454 = vmatmul.mubr.bf16.gmra.mrb[0].mxu0 %v1419
      %v1455 = vpop.f32.mrb[0].mxu0
      %v1456 = vadd.f32 %v1405, %v1455
      %v1457 = vpop.f32.mrb[0].mxu0
      %v1458 = vpop.f32.mrb[0].mxu0
      %v1459 = vpop.f32.mrb[0].mxu0
      %1460 = vdwg.mxu0
      %v1461 = vmul.f32 %v1456, %v1456
      %v1462 = vmul.f32 %v1456, %v1461
      %v1463 = vmul.f32 %v1462, 0.044715
      %v1464 = vadd.f32 %v1456, %v1463
      %v1465 = vmul.f32 %v1464, 0.7978846
      %v1466 = vtanh.pop %v1465
      %v1467 = vadd.f32 %v1466, 1.0
      %v1468 = vmul.f32 %v1467, 0.5
      %v1469 = vmul.f32 %v1456, %v1468
      %v1470 = vpack.c.bf16 %v1469, %v1469
      %v1471 = vlaneseq
      %v1472 = vshrl.u32 %v1471, 7
      %v1473 = vsub.s32 0, %v1472
      %v1474 = vrot.slane %v770, %v1473
      %v1483 = vunpack.c.l.b16 %v761
      %v1484 = vunpack.c.l.b16 %v762
      %v1485 = vunpack.c.l.b16 %v763
      %v1486 = vunpack.c.l.b16 %v764
      %v1487 = vunpack.c.l.b16 %v765
      %v1488 = vunpack.c.l.b16 %v766
      %v1489 = vunpack.c.l.b16 %v767
      %v1490 = vunpack.c.l.b16 %v768
      %v1491 = vpack.c.b16 %v1484, %v1483
      %v1492 = vpack.c.b16 %v1486, %v1485
      %v1493 = vpack.c.b16 %v1488, %v1487
      %v1494 = vpack.c.b16 %v1490, %v1489
      %vm1499 = vcmask 523264
      %v1501 = vsel %vm1499, %v1470, 0
      %1503 = vmatprep.subr.bf16.mxu0 0
      %1504 = vmatpush1.bf16.msra.mxu0 %v1491
      %1505 = vmatprep.subr.bf16.mxu0 0
      %1506 = vmatpush1.bf16.msra.mxu0 %v1492
      %1507 = vmatprep.subr.bf16.mxu0 0
      %1508 = vmatpush1.bf16.msra.mxu0 %v1493
      %1509 = vmatprep.subr.bf16.mxu0 0
      %1510 = vmatpush1.bf16.msra.mxu0 %v1494
      %1511 = vmatprep.subr.bf16.mxu0 0
      %1512 = vmatpush1.bf16.msra.mxu0 0
      %1513 = vmatprep.subr.bf16.mxu0 0
      %1514 = vmatpush1.bf16.msra.mxu0 0
      %1515 = vmatprep.subr.bf16.mxu0 0
      %1516 = vmatpush1.bf16.msra.mxu0 0
      %1517 = vmatprep.subr.bf16.mxu0 0
      %1518 = vmatpush1.bf16.msra.mxu0 0
      %1519 = vmatprep.subr.bf16.mxu0 0
      %1520 = vmatpush1.bf16.msra.mxu0 0
      %1521 = vmatprep.subr.bf16.mxu0 0
      %1522 = vmatpush1.bf16.msra.mxu0 0
      %1523 = vmatprep.subr.bf16.mxu0 0
      %1524 = vmatpush1.bf16.msra.mxu0 0
      %1525 = vmatprep.subr.bf16.mxu0 0
      %1526 = vmatpush1.bf16.msra.mxu0 0
      %1527 = vmatprep.subr.bf16.mxu0 0
      %1528 = vmatpush1.bf16.msra.mxu0 0
      %1529 = vmatprep.subr.bf16.mxu0 0
      %1530 = vmatpush1.bf16.msra.mxu0 0
      %1531 = vmatprep.subr.bf16.mxu0 0
      %1532 = vmatpush1.bf16.msra.mxu0 0
      %1533 = vmatprep.subr.bf16.mxu0 0
      %1534 = vmatpush1.bf16.msra.mxu0 0
      %1535 = vmatprep.mubr.bf16.mxu0 0
      %1536 = vmatmul.mubr.bf16.gmra.mrb[0].mxu0 %v1501
      %v1537 = vpop.f32.mrb[0].mxu0
      %v1538 = vadd.f32 %v1474, %v1537
      %v1539 = vpop.f32.mrb[0].mxu0
      %v1540 = vpop.f32.mrb[0].mxu0
      %v1541 = vpop.f32.mrb[0].mxu0
      %1542 = vdwg.mxu0
      %v1543 = vadd.f32 %v1538, %v1400
      %v1544 = vsel %vm793, %v1543, 0.0
      %1545 = vadd.xlane.f32.xlu0 %v1544
      %v1546 = vpop.xlane.xlu0 %1545
      %v1547 = vmul.f32 %v1546, %v1380
      %v1548 = vsub.f32 %v1543, %v1547
      %v1549 = vmul.f32 %v1548, %v1548
      %v1550 = vsel %vm793, %v1549, 0.0
      %1551 = vadd.xlane.f32.xlu0 %v1550
      %v1552 = vpop.xlane.xlu0 %1551
      %v1553 = vmul.f32 %v1552, %v1380
      %v1554 = vadd.f32 %v1553, 1e-12
      %v1555 = vrsqrt.pop %v1554
      %v1556 = vmul.f32 %v1548, %v1555
      %v1557 = vlaneseq
      %v1558 = vshrl.u32 %v1557, 7
      %v1559 = vsub.s32 0, %v1558
      %v1560 = vrot.slane %v772, %v1559
      %v1561 = vmul.f32 %v1556, %v1560
      %v1562 = vlaneseq
      %v1563 = vshrl.u32 %v1562, 7
      %v1564 = vsub.s32 0, %v1563
      %v1565 = vrot.slane %v774, %v1564
      %v1566 = vadd.f32 %v1561, %v1565
      %v1567 = vpack.c.bf16 %v1566, %v1566
      %vm1568 = vcmask 257024
      %1569 = vst.msk [vmem:[#allocation2] sm:$0xf] %vm1568, %v1567
      %s1570 = scalar_lea.vmem [#allocation2], 4
      %v1571 = vld [vmem:[%s1570] sm:$0xf]
      %s1572 = scalar_lea.vmem %s1, 1
      %v1573 = vld [vmem:[%s1572] sm:$0x1]
      %v1575 = vsel %vm793, %v1571, 0
      %1577 = vmatprep.subr.bf16.mxu0 0
      %1578 = vmatpush1.bf16.msra.mxu0 %v789
      %1579 = vmatprep.subr.bf16.mxu0 0
      %1580 = vmatpush1.bf16.msra.mxu0 %v790
      %1581 = vmatprep.subr.bf16.mxu0 0
      %1582 = vmatpush1.bf16.msra.mxu0 0
      %1583 = vmatprep.subr.bf16.mxu0 0
      %1584 = vmatpush1.bf16.msra.mxu0 0
      %1585 = vmatprep.subr.bf16.mxu0 0
      %1586 = vmatpush1.bf16.msra.mxu0 0
      %1587 = vmatprep.subr.bf16.mxu0 0
      %1588 = vmatpush1.bf16.msra.mxu0 0
      %1589 = vmatprep.subr.bf16.mxu0 0
      %1590 = vmatpush1.bf16.msra.mxu0 0
      %1591 = vmatprep.subr.bf16.mxu0 0
      %1592 = vmatpush1.bf16.msra.mxu0 0
      %1593 = vmatprep.subr.bf16.mxu0 0
      %1594 = vmatpush1.bf16.msra.mxu0 0
      %1595 = vmatprep.subr.bf16.mxu0 0
      %1596 = vmatpush1.bf16.msra.mxu0 0
      %1597 = vmatprep.subr.bf16.mxu0 0
      %1598 = vmatpush1.bf16.msra.mxu0 0
      %1599 = vmatprep.subr.bf16.mxu0 0
      %1600 = vmatpush1.bf16.msra.mxu0 0
      %1601 = vmatprep.subr.bf16.mxu0 0
      %1602 = vmatpush1.bf16.msra.mxu0 0
      %1603 = vmatprep.subr.bf16.mxu0 0
      %1604 = vmatpush1.bf16.msra.mxu0 0
      %1605 = vmatprep.subr.bf16.mxu0 0
      %1606 = vmatpush1.bf16.msra.mxu0 0
      %1607 = vmatprep.subr.bf16.mxu0 0
      %1608 = vmatpush1.bf16.msra.mxu0 0
      %1609 = vmatprep.mubr.bf16.mxu0 0
      %1610 = vmatmul.mubr.bf16.gmra.mrb[0].mxu0 %v1575
      %v1611 = vpop.f32.mrb[0].mxu0
      %v1612 = vadd.f32 %v780, %v1611
      %v1613 = vpop.f32.mrb[0].mxu0
      %v1614 = vpop.f32.mrb[0].mxu0
      %v1615 = vpop.f32.mrb[0].mxu0
      %1616 = vdwg.mxu0
      %v1617 = vpack.c.bf16 %v1612, %v1612
      %v1619 = vlaneseq
      %v1620 = vshrl.u32 %v1619, 7
      %v1621 = vsub.s32 0, %v1620
      %v1622 = vrot.slane %v1573, %v1621
      %1625 = vrot.lane.b32.xlu0 %v1617, 96
      %v1626 = vpop.permute.xlu0 %1625
      %v1628 = vsel %vm847, %v1617, 0
      %v1631 = vsel %vm847, %v1626, 0
      %1633 = vmatprep.subr.bf16.mxu0 0
      %1634 = vmatpush1.bf16.xpose.msra.mxu0 %v1631
      %1635 = vmatprep.subr.bf16.mxu0 0
      %1636 = vmatpush1.bf16.xpose.msra.mxu0 0
      %1637 = vmatprep.subr.bf16.mxu0 0
      %1638 = vmatpush1.bf16.xpose.msra.mxu0 0
      %1639 = vmatprep.subr.bf16.mxu0 0
      %1640 = vmatpush1.bf16.xpose.msra.mxu0 0
      %1641 = vmatprep.subr.bf16.mxu0 0
      %1642 = vmatpush1.bf16.xpose.msra.mxu0 0
      %1643 = vmatprep.subr.bf16.mxu0 0
      %1644 = vmatpush1.bf16.xpose.msra.mxu0 0
      %1645 = vmatprep.subr.bf16.mxu0 0
      %1646 = vmatpush1.bf16.xpose.msra.mxu0 0
      %1647 = vmatprep.subr.bf16.mxu0 0
      %1648 = vmatpush1.bf16.xpose.msra.mxu0 0
      %1649 = vmatprep.subr.bf16.mxu0 0
      %1650 = vmatpush1.bf16.xpose.msra.mxu0 0
      %1651 = vmatprep.subr.bf16.mxu0 0
      %1652 = vmatpush1.bf16.xpose.msra.mxu0 0
      %1653 = vmatprep.subr.bf16.mxu0 0
      %1654 = vmatpush1.bf16.xpose.msra.mxu0 0
      %1655 = vmatprep.subr.bf16.mxu0 0
      %1656 = vmatpush1.bf16.xpose.msra.mxu0 0
      %1657 = vmatprep.subr.bf16.mxu0 0
      %1658 = vmatpush1.bf16.xpose.msra.mxu0 0
      %1659 = vmatprep.subr.bf16.mxu0 0
      %1660 = vmatpush1.bf16.xpose.msra.mxu0 0
      %1661 = vmatprep.subr.bf16.mxu0 0
      %1662 = vmatpush1.bf16.xpose.msra.mxu0 0
      %1663 = vmatprep.subr.bf16.mxu0 0
      %1664 = vmatpush1.bf16.xpose.msra.mxu0 0
      %1665 = vmatprep.mubr.bf16.mxu0 0
      %1666 = vmatmul.mubr.bf16.gmra.mrb[0].mxu0 %v1628
      %v1667 = vpop.f32.mrb[0].mxu0
      %v1668 = vadd.f32 %v1622, %v1667
      %v1669 = vpop.f32.mrb[0].mxu0
      %v1670 = vpop.f32.mrb[0].mxu0
      %v1671 = vpop.f32.mrb[0].mxu0
      %1672 = vdwg.mxu0
      %v1673 = vsel %vm847, %v1668, -inf
      %1674 = vmax.xlane.f32.xlu0 %v1673
      %v1675 = vpop.xlane.xlu0 %1674
      %v1676 = vsub.f32 %v1668, %v1675
      %v1677 = vmul.f32 %v1676, 1.442695
      %v1678 = vpow.pop %v1677
      %v1679 = vsel %vm847, %v1678, 0.0
      %1680 = vadd.xlane.f32.xlu0 %v1679
      %v1681 = vpop.xlane.xlu0 %1680
      %v1682 = vrcp.pop %v1681
      %v1683 = vmul.f32 %v1678, %v1682
      %v1684 = vpack.c.bf16 %v1683, %v1683
      %1685 = vrot.lane.b32.xlu0 %v1617, 64
      %v1686 = vpop.permute.xlu0 %1685
      %v1688 = vsel %vm847, %v1684, 0
      %v1691 = vsel %vm911, %v1686, 0
      %1693 = vmatprep.subr.bf16.mxu0 0
      %1694 = vmatpush1.bf16.msra.mxu0 %v1691
      %1695 = vmatprep.subr.bf16.mxu0 0
      %1696 = vmatpush1.bf16.msra.mxu0 0
      %1697 = vmatprep.subr.bf16.mxu0 0
      %1698 = vmatpush1.bf16.msra.mxu0 0
      %1699 = vmatprep.subr.bf16.mxu0 0
      %1700 = vmatpush1.bf16.msra.mxu0 0
      %1701 = vmatprep.subr.bf16.mxu0 0
      %1702 = vmatpush1.bf16.msra.mxu0 0
      %1703 = vmatprep.subr.bf16.mxu0 0
      %1704 = vmatpush1.bf16.msra.mxu0 0
      %1705 = vmatprep.subr.bf16.mxu0 0
      %1706 = vmatpush1.bf16.msra.mxu0 0
      %1707 = vmatprep.subr.bf16.mxu0 0
      %1708 = vmatpush1.bf16.msra.mxu0 0
      %1709 = vmatprep.subr.bf16.mxu0 0
      %1710 = vmatpush1.bf16.msra.mxu0 0
      %1711 = vmatprep.subr.bf16.mxu0 0
      %1712 = vmatpush1.bf16.msra.mxu0 0
      %1713 = vmatprep.subr.bf16.mxu0 0
      %1714 = vmatpush1.bf16.msra.mxu0 0
      %1715 = vmatprep.subr.bf16.mxu0 0
      %1716 = vmatpush1.bf16.msra.mxu0 0
      %1717 = vmatprep.subr.bf16.mxu0 0
      %1718 = vmatpush1.bf16.msra.mxu0 0
      %1719 = vmatprep.subr.bf16.mxu0 0
      %1720 = vmatpush1.bf16.msra.mxu0 0
      %1721 = vmatprep.subr.bf16.mxu0 0
      %1722 = vmatpush1.bf16.msra.mxu0 0
      %1723 = vmatprep.subr.bf16.mxu0 0
      %1724 = vmatpush1.bf16.msra.mxu0 0
      %1725 = vmatprep.mubr.bf16.mxu0 0
      %1726 = vmatmul.mubr.bf16.gmra.mrb[0].mxu0 %v1688
      %v1727 = vpop.f32.mrb[0].mxu0
      %v1728 = vadd.f32 0.0, %v1727
      %v1729 = vpop.f32.mrb[0].mxu0
      %v1730 = vpop.f32.mrb[0].mxu0
      %v1731 = vpop.f32.mrb[0].mxu0
      %1732 = vdwg.mxu0
      %v1733 = vpack.c.bf16 %v1728, %v1728
      %1734 = vst.msk [vmem:[#allocation3] sm:$0xf] %vm956, %v1733
      %1735 = vrot.lane.b32.xlu0 %v1617, 120
      %v1736 = vpop.permute.xlu0 %1735
      %1737 = vrot.lane.b32.xlu0 %v1617, 88
      %v1738 = vpop.permute.xlu0 %1737
      %v1740 = vsel %vm847, %v1736, 0
      %v1743 = vsel %vm847, %v1738, 0
      %1745 = vmatprep.subr.bf16.mxu0 0
      %1746 = vmatpush1.bf16.xpose.msra.mxu0 %v1743
      %1747 = vmatprep.subr.bf16.mxu0 0
      %1748 = vmatpush1.bf16.xpose.msra.mxu0 0
      %1749 = vmatprep.subr.bf16.mxu0 0
      %1750 = vmatpush1.bf16.xpose.msra.mxu0 0
      %1751 = vmatprep.subr.bf16.mxu0 0
      %1752 = vmatpush1.bf16.xpose.msra.mxu0 0
      %1753 = vmatprep.subr.bf16.mxu0 0
      %1754 = vmatpush1.bf16.xpose.msra.mxu0 0
      %1755 = vmatprep.subr.bf16.mxu0 0
      %1756 = vmatpush1.bf16.xpose.msra.mxu0 0
      %1757 = vmatprep.subr.bf16.mxu0 0
      %1758 = vmatpush1.bf16.xpose.msra.mxu0 0
      %1759 = vmatprep.subr.bf16.mxu0 0
      %1760 = vmatpush1.bf16.xpose.msra.mxu0 0
      %1761 = vmatprep.subr.bf16.mxu0 0
      %1762 = vmatpush1.bf16.xpose.msra.mxu0 0
      %1763 = vmatprep.subr.bf16.mxu0 0
      %1764 = vmatpush1.bf16.xpose.msra.mxu0 0
      %1765 = vmatprep.subr.bf16.mxu0 0
      %1766 = vmatpush1.bf16.xpose.msra.mxu0 0
      %1767 = vmatprep.subr.bf16.mxu0 0
      %1768 = vmatpush1.bf16.xpose.msra.mxu0 0
      %1769 = vmatprep.subr.bf16.mxu0 0
      %1770 = vmatpush1.bf16.xpose.msra.mxu0 0
      %1771 = vmatprep.subr.bf16.mxu0 0
      %1772 = vmatpush1.bf16.xpose.msra.mxu0 0
      %1773 = vmatprep.subr.bf16.mxu0 0
      %1774 = vmatpush1.bf16.xpose.msra.mxu0 0
      %1775 = vmatprep.subr.bf16.mxu0 0
      %1776 = vmatpush1.bf16.xpose.msra.mxu0 0
      %1777 = vmatprep.mubr.bf16.mxu0 0
      %1778 = vmatmul.mubr.bf16.gmra.mrb[0].mxu0 %v1740
      %v1779 = vpop.f32.mrb[0].mxu0
      %v1780 = vadd.f32 %v1622, %v1779
      %v1781 = vpop.f32.mrb[0].mxu0
      %v1782 = vpop.f32.mrb[0].mxu0
      %v1783 = vpop.f32.mrb[0].mxu0
      %1784 = vdwg.mxu0
      %v1785 = vsel %vm847, %v1780, -inf
      %1786 = vmax.xlane.f32.xlu0 %v1785
      %v1787 = vpop.xlane.xlu0 %1786
      %v1788 = vsub.f32 %v1780, %v1787
      %v1789 = vmul.f32 %v1788, 1.442695
      %v1790 = vpow.pop %v1789
      %v1791 = vsel %vm847, %v1790, 0.0
      %1792 = vadd.xlane.f32.xlu0 %v1791
      %v1793 = vpop.xlane.xlu0 %1792
      %v1794 = vrcp.pop %v1793
      %v1795 = vmul.f32 %v1790, %v1794
      %v1796 = vpack.c.bf16 %v1795, %v1795
      %1797 = vrot.lane.b32.xlu0 %v1617, 56
      %v1798 = vpop.permute.xlu0 %1797
      %v1800 = vsel %vm847, %v1796, 0
      %v1803 = vsel %vm911, %v1798, 0
      %1805 = vmatprep.subr.bf16.mxu0 0
      %1806 = vmatpush1.bf16.msra.mxu0 %v1803
      %1807 = vmatprep.subr.bf16.mxu0 0
      %1808 = vmatpush1.bf16.msra.mxu0 0
      %1809 = vmatprep.subr.bf16.mxu0 0
      %1810 = vmatpush1.bf16.msra.mxu0 0
      %1811 = vmatprep.subr.bf16.mxu0 0
      %1812 = vmatpush1.bf16.msra.mxu0 0
      %1813 = vmatprep.subr.bf16.mxu0 0
      %1814 = vmatpush1.bf16.msra.mxu0 0
      %1815 = vmatprep.subr.bf16.mxu0 0
      %1816 = vmatpush1.bf16.msra.mxu0 0
      %1817 = vmatprep.subr.bf16.mxu0 0
      %1818 = vmatpush1.bf16.msra.mxu0 0
      %1819 = vmatprep.subr.bf16.mxu0 0
      %1820 = vmatpush1.bf16.msra.mxu0 0
      %1821 = vmatprep.subr.bf16.mxu0 0
      %1822 = vmatpush1.bf16.msra.mxu0 0
      %1823 = vmatprep.subr.bf16.mxu0 0
      %1824 = vmatpush1.bf16.msra.mxu0 0
      %1825 = vmatprep.subr.bf16.mxu0 0
      %1826 = vmatpush1.bf16.msra.mxu0 0
      %1827 = vmatprep.subr.bf16.mxu0 0
      %1828 = vmatpush1.bf16.msra.mxu0 0
      %1829 = vmatprep.subr.bf16.mxu0 0
      %1830 = vmatpush1.bf16.msra.mxu0 0
      %1831 = vmatprep.subr.bf16.mxu0 0
      %1832 = vmatpush1.bf16.msra.mxu0 0
      %1833 = vmatprep.subr.bf16.mxu0 0
      %1834 = vmatpush1.bf16.msra.mxu0 0
      %1835 = vmatprep.subr.bf16.mxu0 0
      %1836 = vmatpush1.bf16.msra.mxu0 0
      %1837 = vmatprep.mubr.bf16.mxu0 0
      %1838 = vmatmul.mubr.bf16.gmra.mrb[0].mxu0 %v1800
      %v1839 = vpop.f32.mrb[0].mxu0
      %v1840 = vadd.f32 0.0, %v1839
      %v1841 = vpop.f32.mrb[0].mxu0
      %v1842 = vpop.f32.mrb[0].mxu0
      %v1843 = vpop.f32.mrb[0].mxu0
      %1844 = vdwg.mxu0
      %v1845 = vpack.c.bf16 %v1840, %v1840
      %v1847 = vunpack.c.l.b16 %v1845
      %v1848 = vpack.c.b16 %v1847, %v1847
      %1849 = vrot.lane.b32.xlu0 %v1848, 8
      %v1850 = vpop.permute.xlu0 %1849
      %1852 = vst.msk [vmem:[#allocation3] sm:$0xf] %vm1075, %v1850
      %1853 = vrot.lane.b32.xlu0 %v1617, 112
      %v1854 = vpop.permute.xlu0 %1853
      %1855 = vrot.lane.b32.xlu0 %v1617, 80
      %v1856 = vpop.permute.xlu0 %1855
      %v1858 = vsel %vm847, %v1854, 0
      %v1861 = vsel %vm847, %v1856, 0
      %1863 = vmatprep.subr.bf16.mxu0 0
      %1864 = vmatpush1.bf16.xpose.msra.mxu0 %v1861
      %1865 = vmatprep.subr.bf16.mxu0 0
      %1866 = vmatpush1.bf16.xpose.msra.mxu0 0
      %1867 = vmatprep.subr.bf16.mxu0 0
      %1868 = vmatpush1.bf16.xpose.msra.mxu0 0
      %1869 = vmatprep.subr.bf16.mxu0 0
      %1870 = vmatpush1.bf16.xpose.msra.mxu0 0
      %1871 = vmatprep.subr.bf16.mxu0 0
      %1872 = vmatpush1.bf16.xpose.msra.mxu0 0
      %1873 = vmatprep.subr.bf16.mxu0 0
      %1874 = vmatpush1.bf16.xpose.msra.mxu0 0
      %1875 = vmatprep.subr.bf16.mxu0 0
      %1876 = vmatpush1.bf16.xpose.msra.mxu0 0
      %1877 = vmatprep.subr.bf16.mxu0 0
      %1878 = vmatpush1.bf16.xpose.msra.mxu0 0
      %1879 = vmatprep.subr.bf16.mxu0 0
      %1880 = vmatpush1.bf16.xpose.msra.mxu0 0
      %1881 = vmatprep.subr.bf16.mxu0 0
      %1882 = vmatpush1.bf16.xpose.msra.mxu0 0
      %1883 = vmatprep.subr.bf16.mxu0 0
      %1884 = vmatpush1.bf16.xpose.msra.mxu0 0
      %1885 = vmatprep.subr.bf16.mxu0 0
      %1886 = vmatpush1.bf16.xpose.msra.mxu0 0
      %1887 = vmatprep.subr.bf16.mxu0 0
      %1888 = vmatpush1.bf16.xpose.msra.mxu0 0
      %1889 = vmatprep.subr.bf16.mxu0 0
      %1890 = vmatpush1.bf16.xpose.msra.mxu0 0
      %1891 = vmatprep.subr.bf16.mxu0 0
      %1892 = vmatpush1.bf16.xpose.msra.mxu0 0
      %1893 = vmatprep.subr.bf16.mxu0 0
      %1894 = vmatpush1.bf16.xpose.msra.mxu0 0
      %1895 = vmatprep.mubr.bf16.mxu0 0
      %1896 = vmatmul.mubr.bf16.gmra.mrb[0].mxu0 %v1858
      %v1897 = vpop.f32.mrb[0].mxu0
      %v1898 = vadd.f32 %v1622, %v1897
      %v1899 = vpop.f32.mrb[0].mxu0
      %v1900 = vpop.f32.mrb[0].mxu0
      %v1901 = vpop.f32.mrb[0].mxu0
      %1902 = vdwg.mxu0
      %v1903 = vsel %vm847, %v1898, -inf
      %1904 = vmax.xlane.f32.xlu0 %v1903
      %v1905 = vpop.xlane.xlu0 %1904
      %v1906 = vsub.f32 %v1898, %v1905
      %v1907 = vmul.f32 %v1906, 1.442695
      %v1908 = vpow.pop %v1907
      %v1909 = vsel %vm847, %v1908, 0.0
      %1910 = vadd.xlane.f32.xlu0 %v1909
      %v1911 = vpop.xlane.xlu0 %1910
      %v1912 = vrcp.pop %v1911
      %v1913 = vmul.f32 %v1908, %v1912
      %v1914 = vpack.c.bf16 %v1913, %v1913
      %1915 = vrot.lane.b32.xlu0 %v1617, 48
      %v1916 = vpop.permute.xlu0 %1915
      %v1918 = vsel %vm847, %v1914, 0
      %v1921 = vsel %vm911, %v1916, 0
      %1923 = vmatprep.subr.bf16.mxu0 0
      %1924 = vmatpush1.bf16.msra.mxu0 %v1921
      %1925 = vmatprep.subr.bf16.mxu0 0
      %1926 = vmatpush1.bf16.msra.mxu0 0
      %1927 = vmatprep.subr.bf16.mxu0 0
      %1928 = vmatpush1.bf16.msra.mxu0 0
      %1929 = vmatprep.subr.bf16.mxu0 0
      %1930 = vmatpush1.bf16.msra.mxu0 0
      %1931 = vmatprep.subr.bf16.mxu0 0
      %1932 = vmatpush1.bf16.msra.mxu0 0
      %1933 = vmatprep.subr.bf16.mxu0 0
      %1934 = vmatpush1.bf16.msra.mxu0 0
      %1935 = vmatprep.subr.bf16.mxu0 0
      %1936 = vmatpush1.bf16.msra.mxu0 0
      %1937 = vmatprep.subr.bf16.mxu0 0
      %1938 = vmatpush1.bf16.msra.mxu0 0
      %1939 = vmatprep.subr.bf16.mxu0 0
      %1940 = vmatpush1.bf16.msra.mxu0 0
      %1941 = vmatprep.subr.bf16.mxu0 0
      %1942 = vmatpush1.bf16.msra.mxu0 0
      %1943 = vmatprep.subr.bf16.mxu0 0
      %1944 = vmatpush1.bf16.msra.mxu0 0
      %1945 = vmatprep.subr.bf16.mxu0 0
      %1946 = vmatpush1.bf16.msra.mxu0 0
      %1947 = vmatprep.subr.bf16.mxu0 0
      %1948 = vmatpush1.bf16.msra.mxu0 0
      %1949 = vmatprep.subr.bf16.mxu0 0
      %1950 = vmatpush1.bf16.msra.mxu0 0
      %1951 = vmatprep.subr.bf16.mxu0 0
      %1952 = vmatpush1.bf16.msra.mxu0 0
      %1953 = vmatprep.subr.bf16.mxu0 0
      %1954 = vmatpush1.bf16.msra.mxu0 0
      %1955 = vmatprep.mubr.bf16.mxu0 0
      %1956 = vmatmul.mubr.bf16.gmra.mrb[0].mxu0 %v1918
      %v1957 = vpop.f32.mrb[0].mxu0
      %v1958 = vadd.f32 0.0, %v1957
      %v1959 = vpop.f32.mrb[0].mxu0
      %v1960 = vpop.f32.mrb[0].mxu0
      %v1961 = vpop.f32.mrb[0].mxu0
      %1962 = vdwg.mxu0
      %v1963 = vpack.c.bf16 %v1958, %v1958
      %v1965 = vunpack.c.l.b16 %v1963
      %v1966 = vpack.c.b16 %v1965, %v1965
      %1967 = vrot.lane.b32.xlu0 %v1966, 16
      %v1968 = vpop.permute.xlu0 %1967
      %1970 = vst.msk [vmem:[#allocation3] sm:$0xf] %vm1194, %v1968
      %1971 = vrot.lane.b32.xlu0 %v1617, 104
      %v1972 = vpop.permute.xlu0 %1971
      %1973 = vrot.lane.b32.xlu0 %v1617, 72
      %v1974 = vpop.permute.xlu0 %1973
      %v1976 = vsel %vm847, %v1972, 0
      %v1979 = vsel %vm847, %v1974, 0
      %1981 = vmatprep.subr.bf16.mxu0 0
      %1982 = vmatpush1.bf16.xpose.msra.mxu0 %v1979
      %1983 = vmatprep.subr.bf16.mxu0 0
      %1984 = vmatpush1.bf16.xpose.msra.mxu0 0
      %1985 = vmatprep.subr.bf16.mxu0 0
      %1986 = vmatpush1.bf16.xpose.msra.mxu0 0
      %1987 = vmatprep.subr.bf16.mxu0 0
      %1988 = vmatpush1.bf16.xpose.msra.mxu0 0
      %1989 = vmatprep.subr.bf16.mxu0 0
      %1990 = vmatpush1.bf16.xpose.msra.mxu0 0
      %1991 = vmatprep.subr.bf16.mxu0 0
      %1992 = vmatpush1.bf16.xpose.msra.mxu0 0
      %1993 = vmatprep.subr.bf16.mxu0 0
      %1994 = vmatpush1.bf16.xpose.msra.mxu0 0
      %1995 = vmatprep.subr.bf16.mxu0 0
      %1996 = vmatpush1.bf16.xpose.msra.mxu0 0
      %1997 = vmatprep.subr.bf16.mxu0 0
      %1998 = vmatpush1.bf16.xpose.msra.mxu0 0
      %1999 = vmatprep.subr.bf16.mxu0 0
      %2000 = vmatpush1.bf16.xpose.msra.mxu0 0
      %2001 = vmatprep.subr.bf16.mxu0 0
      %2002 = vmatpush1.bf16.xpose.msra.mxu0 0
      %2003 = vmatprep.subr.bf16.mxu0 0
      %2004 = vmatpush1.bf16.xpose.msra.mxu0 0
      %2005 = vmatprep.subr.bf16.mxu0 0
      %2006 = vmatpush1.bf16.xpose.msra.mxu0 0
      %2007 = vmatprep.subr.bf16.mxu0 0
      %2008 = vmatpush1.bf16.xpose.msra.mxu0 0
      %2009 = vmatprep.subr.bf16.mxu0 0
      %2010 = vmatpush1.bf16.xpose.msra.mxu0 0
      %2011 = vmatprep.subr.bf16.mxu0 0
      %2012 = vmatpush1.bf16.xpose.msra.mxu0 0
      %2013 = vmatprep.mubr.bf16.mxu0 0
      %2014 = vmatmul.mubr.bf16.gmra.mrb[0].mxu0 %v1976
      %v2015 = vpop.f32.mrb[0].mxu0
      %v2016 = vadd.f32 %v1622, %v2015
      %v2017 = vpop.f32.mrb[0].mxu0
      %v2018 = vpop.f32.mrb[0].mxu0
      %v2019 = vpop.f32.mrb[0].mxu0
      %2020 = vdwg.mxu0
      %v2021 = vsel %vm847, %v2016, -inf
      %2022 = vmax.xlane.f32.xlu0 %v2021
      %v2023 = vpop.xlane.xlu0 %2022
      %v2024 = vsub.f32 %v2016, %v2023
      %v2025 = vmul.f32 %v2024, 1.442695
      %v2026 = vpow.pop %v2025
      %v2027 = vsel %vm847, %v2026, 0.0
      %2028 = vadd.xlane.f32.xlu0 %v2027
      %v2029 = vpop.xlane.xlu0 %2028
      %v2030 = vrcp.pop %v2029
      %v2031 = vmul.f32 %v2026, %v2030
      %v2032 = vpack.c.bf16 %v2031, %v2031
      %2033 = vrot.lane.b32.xlu0 %v1617, 40
      %v2034 = vpop.permute.xlu0 %2033
      %v2036 = vsel %vm847, %v2032, 0
      %v2039 = vsel %vm911, %v2034, 0
      %2041 = vmatprep.subr.bf16.mxu0 0
      %2042 = vmatpush1.bf16.msra.mxu0 %v2039
      %2043 = vmatprep.subr.bf16.mxu0 0
      %2044 = vmatpush1.bf16.msra.mxu0 0
      %2045 = vmatprep.subr.bf16.mxu0 0
      %2046 = vmatpush1.bf16.msra.mxu0 0
      %2047 = vmatprep.subr.bf16.mxu0 0
      %2048 = vmatpush1.bf16.msra.mxu0 0
      %2049 = vmatprep.subr.bf16.mxu0 0
      %2050 = vmatpush1.bf16.msra.mxu0 0
      %2051 = vmatprep.subr.bf16.mxu0 0
      %2052 = vmatpush1.bf16.msra.mxu0 0
      %2053 = vmatprep.subr.bf16.mxu0 0
      %2054 = vmatpush1.bf16.msra.mxu0 0
      %2055 = vmatprep.subr.bf16.mxu0 0
      %2056 = vmatpush1.bf16.msra.mxu0 0
      %2057 = vmatprep.subr.bf16.mxu0 0
      %2058 = vmatpush1.bf16.msra.mxu0 0
      %2059 = vmatprep.subr.bf16.mxu0 0
      %2060 = vmatpush1.bf16.msra.mxu0 0
      %2061 = vmatprep.subr.bf16.mxu0 0
      %2062 = vmatpush1.bf16.msra.mxu0 0
      %2063 = vmatprep.subr.bf16.mxu0 0
      %2064 = vmatpush1.bf16.msra.mxu0 0
      %2065 = vmatprep.subr.bf16.mxu0 0
      %2066 = vmatpush1.bf16.msra.mxu0 0
      %2067 = vmatprep.subr.bf16.mxu0 0
      %2068 = vmatpush1.bf16.msra.mxu0 0
      %2069 = vmatprep.subr.bf16.mxu0 0
      %2070 = vmatpush1.bf16.msra.mxu0 0
      %2071 = vmatprep.subr.bf16.mxu0 0
      %2072 = vmatpush1.bf16.msra.mxu0 0
      %2073 = vmatprep.mubr.bf16.mxu0 0
      %2074 = vmatmul.mubr.bf16.gmra.mrb[0].mxu0 %v2036
      %v2075 = vpop.f32.mrb[0].mxu0
      %v2076 = vadd.f32 0.0, %v2075
      %v2077 = vpop.f32.mrb[0].mxu0
      %v2078 = vpop.f32.mrb[0].mxu0
      %v2079 = vpop.f32.mrb[0].mxu0
      %2080 = vdwg.mxu0
      %v2081 = vpack.c.bf16 %v2076, %v2076
      %v2083 = vunpack.c.l.b16 %v2081
      %v2084 = vpack.c.b16 %v2083, %v2083
      %2085 = vrot.lane.b32.xlu0 %v2084, 24
      %v2086 = vpop.permute.xlu0 %2085
      %2088 = vst.msk [vmem:[#allocation3] sm:$0xf] %vm1313, %v2086
      %v2089 = vld [vmem:[#allocation3] sm:$0xf]
      %v2091 = vsel %vm793, %v2089, 0
      %2093 = vmatprep.subr.bf16.mxu0 0
      %2094 = vmatpush1.bf16.msra.mxu0 %v1328
      %2095 = vmatprep.subr.bf16.mxu0 0
      %2096 = vmatpush1.bf16.msra.mxu0 %v1329
      %2097 = vmatprep.subr.bf16.mxu0 0
      %2098 = vmatpush1.bf16.msra.mxu0 0
      %2099 = vmatprep.subr.bf16.mxu0 0
      %2100 = vmatpush1.bf16.msra.mxu0 0
      %2101 = vmatprep.subr.bf16.mxu0 0
      %2102 = vmatpush1.bf16.msra.mxu0 0
      %2103 = vmatprep.subr.bf16.mxu0 0
      %2104 = vmatpush1.bf16.msra.mxu0 0
      %2105 = vmatprep.subr.bf16.mxu0 0
      %2106 = vmatpush1.bf16.msra.mxu0 0
      %2107 = vmatprep.subr.bf16.mxu0 0
      %2108 = vmatpush1.bf16.msra.mxu0 0
      %2109 = vmatprep.subr.bf16.mxu0 0
      %2110 = vmatpush1.bf16.msra.mxu0 0
      %2111 = vmatprep.subr.bf16.mxu0 0
      %2112 = vmatpush1.bf16.msra.mxu0 0
      %2113 = vmatprep.subr.bf16.mxu0 0
      %2114 = vmatpush1.bf16.msra.mxu0 0
      %2115 = vmatprep.subr.bf16.mxu0 0
      %2116 = vmatpush1.bf16.msra.mxu0 0
      %2117 = vmatprep.subr.bf16.mxu0 0
      %2118 = vmatpush1.bf16.msra.mxu0 0
      %2119 = vmatprep.subr.bf16.mxu0 0
      %2120 = vmatpush1.bf16.msra.mxu0 0
      %2121 = vmatprep.subr.bf16.mxu0 0
      %2122 = vmatpush1.bf16.msra.mxu0 0
      %2123 = vmatprep.subr.bf16.mxu0 0
      %2124 = vmatpush1.bf16.msra.mxu0 0
      %2125 = vmatprep.mubr.bf16.mxu0 0
      %2126 = vmatmul.mubr.bf16.gmra.mrb[0].mxu0 %v2091
      %v2127 = vpop.f32.mrb[0].mxu0
      %v2128 = vadd.f32 %v1319, %v2127
      %v2129 = vpop.f32.mrb[0].mxu0
      %v2130 = vpop.f32.mrb[0].mxu0
      %v2131 = vpop.f32.mrb[0].mxu0
      %2132 = vdwg.mxu0
      %v2133 = vunpack.c.l.bf16 %v1571
      %v2134 = vadd.f32 %v2128, %v2133
      %v2135 = vsel %vm793, %v2134, 0.0
      %2136 = vadd.xlane.f32.xlu0 %v2135
      %v2137 = vpop.xlane.xlu0 %2136
      %v2138 = vmul.f32 %v2137, %v1380
      %v2139 = vsub.f32 %v2134, %v2138
      %v2140 = vmul.f32 %v2139, %v2139
      %v2141 = vsel %vm793, %v2140, 0.0
      %2142 = vadd.xlane.f32.xlu0 %v2141
      %v2143 = vpop.xlane.xlu0 %2142
      %v2144 = vmul.f32 %v2143, %v1380
      %v2145 = vadd.f32 %v2144, 1e-12
      %v2146 = vrsqrt.pop %v2145
      %v2147 = vmul.f32 %v2139, %v2146
      %v2148 = vmul.f32 %v2147, %v1394
      %v2149 = vadd.f32 %v2148, %v1399
      %v2150 = vpack.c.bf16 %v2149, %v2149
      %v2152 = vsel %vm793, %v2150, 0
      %2154 = vmatprep.subr.bf16.mxu0 0
      %2155 = vmatpush1.bf16.msra.mxu0 %v1414
      %2156 = vmatprep.subr.bf16.mxu0 0
      %2157 = vmatpush1.bf16.msra.mxu0 %v1415
      %2158 = vmatprep.subr.bf16.mxu0 0
      %2159 = vmatpush1.bf16.msra.mxu0 0
      %2160 = vmatprep.subr.bf16.mxu0 0
      %2161 = vmatpush1.bf16.msra.mxu0 0
      %2162 = vmatprep.subr.bf16.mxu0 0
      %2163 = vmatpush1.bf16.msra.mxu0 0
      %2164 = vmatprep.subr.bf16.mxu0 0
      %2165 = vmatpush1.bf16.msra.mxu0 0
      %2166 = vmatprep.subr.bf16.mxu0 0
      %2167 = vmatpush1.bf16.msra.mxu0 0
      %2168 = vmatprep.subr.bf16.mxu0 0
      %2169 = vmatpush1.bf16.msra.mxu0 0
      %2170 = vmatprep.subr.bf16.mxu0 0
      %2171 = vmatpush1.bf16.msra.mxu0 0
      %2172 = vmatprep.subr.bf16.mxu0 0
      %2173 = vmatpush1.bf16.msra.mxu0 0
      %2174 = vmatprep.subr.bf16.mxu0 0
      %2175 = vmatpush1.bf16.msra.mxu0 0
      %2176 = vmatprep.subr.bf16.mxu0 0
      %2177 = vmatpush1.bf16.msra.mxu0 0
      %2178 = vmatprep.subr.bf16.mxu0 0
      %2179 = vmatpush1.bf16.msra.mxu0 0
      %2180 = vmatprep.subr.bf16.mxu0 0
      %2181 = vmatpush1.bf16.msra.mxu0 0
      %2182 = vmatprep.subr.bf16.mxu0 0
      %2183 = vmatpush1.bf16.msra.mxu0 0
      %2184 = vmatprep.subr.bf16.mxu0 0
      %2185 = vmatpush1.bf16.msra.mxu0 0
      %2186 = vmatprep.mubr.bf16.mxu0 0
      %2187 = vmatmul.mubr.bf16.gmra.mrb[0].mxu0 %v2152
      %v2188 = vpop.f32.mrb[0].mxu0
      %v2189 = vadd.f32 %v1405, %v2188
      %v2190 = vpop.f32.mrb[0].mxu0
      %v2191 = vpop.f32.mrb[0].mxu0
      %v2192 = vpop.f32.mrb[0].mxu0
      %2193 = vdwg.mxu0
      %v2194 = vmul.f32 %v2189, %v2189
      %v2195 = vmul.f32 %v2189, %v2194
      %v2196 = vmul.f32 %v2195, 0.044715
      %v2197 = vadd.f32 %v2189, %v2196
      %v2198 = vmul.f32 %v2197, 0.7978846
      %v2199 = vtanh.pop %v2198
      %v2200 = vadd.f32 %v2199, 1.0
      %v2201 = vmul.f32 %v2200, 0.5
      %v2202 = vmul.f32 %v2189, %v2201
      %v2203 = vpack.c.bf16 %v2202, %v2202
      %v2205 = vsel %vm1499, %v2203, 0
      %2207 = vmatprep.subr.bf16.mxu0 0
      %2208 = vmatpush1.bf16.msra.mxu0 %v1491
      %2209 = vmatprep.subr.bf16.mxu0 0
      %2210 = vmatpush1.bf16.msra.mxu0 %v1492
      %2211 = vmatprep.subr.bf16.mxu0 0
      %2212 = vmatpush1.bf16.msra.mxu0 %v1493
      %2213 = vmatprep.subr.bf16.mxu0 0
      %2214 = vmatpush1.bf16.msra.mxu0 %v1494
      %2215 = vmatprep.subr.bf16.mxu0 0
      %2216 = vmatpush1.bf16.msra.mxu0 0
      %2217 = vmatprep.subr.bf16.mxu0 0
      %2218 = vmatpush1.bf16.msra.mxu0 0
      %2219 = vmatprep.subr.bf16.mxu0 0
      %2220 = vmatpush1.bf16.msra.mxu0 0
      %2221 = vmatprep.subr.bf16.mxu0 0
      %2222 = vmatpush1.bf16.msra.mxu0 0
      %2223 = vmatprep.subr.bf16.mxu0 0
      %2224 = vmatpush1.bf16.msra.mxu0 0
      %2225 = vmatprep.subr.bf16.mxu0 0
      %2226 = vmatpush1.bf16.msra.mxu0 0
      %2227 = vmatprep.subr.bf16.mxu0 0
      %2228 = vmatpush1.bf16.msra.mxu0 0
      %2229 = vmatprep.subr.bf16.mxu0 0
      %2230 = vmatpush1.bf16.msra.mxu0 0
      %2231 = vmatprep.subr.bf16.mxu0 0
      %2232 = vmatpush1.bf16.msra.mxu0 0
      %2233 = vmatprep.subr.bf16.mxu0 0
      %2234 = vmatpush1.bf16.msra.mxu0 0
      %2235 = vmatprep.subr.bf16.mxu0 0
      %2236 = vmatpush1.bf16.msra.mxu0 0
      %2237 = vmatprep.subr.bf16.mxu0 0
      %2238 = vmatpush1.bf16.msra.mxu0 0
      %2239 = vmatprep.mubr.bf16.mxu0 0
      %2240 = vmatmul.mubr.bf16.gmra.mrb[0].mxu0 %v2205
      %v2241 = vpop.f32.mrb[0].mxu0
      %v2242 = vadd.f32 %v1474, %v2241
      %v2243 = vpop.f32.mrb[0].mxu0
      %v2244 = vpop.f32.mrb[0].mxu0
      %v2245 = vpop.f32.mrb[0].mxu0
      %2246 = vdwg.mxu0
      %v2247 = vadd.f32 %v2242, %v2149
      %v2248 = vsel %vm793, %v2247, 0.0
      %2249 = vadd.xlane.f32.xlu0 %v2248
      %v2250 = vpop.xlane.xlu0 %2249
      %v2251 = vmul.f32 %v2250, %v1380
      %v2252 = vsub.f32 %v2247, %v2251
      %v2253 = vmul.f32 %v2252, %v2252
      %v2254 = vsel %vm793, %v2253, 0.0
      %2255 = vadd.xlane.f32.xlu0 %v2254
      %v2256 = vpop.xlane.xlu0 %2255
      %v2257 = vmul.f32 %v2256, %v1380
      %v2258 = vadd.f32 %v2257, 1e-12
      %v2259 = vrsqrt.pop %v2258
      %v2260 = vmul.f32 %v2252, %v2259
      %v2261 = vmul.f32 %v2260, %v1560
      %v2262 = vadd.f32 %v2261, %v1565
      %v2263 = vpack.c.bf16 %v2262, %v2262
      %2264 = vst.msk [vmem:[%s1570] sm:$0xf] %vm1568, %v2263
      %p2265 = scmp.eq.s32.totalorder %s27, 1
      // Predicated region
      $region89: #{sent_bert_forward.1} parent=83 // pred_check
        %p2266 = pneg %p2265
      $region90: #{sent_bert_forward.1} parent=83 // pred_check_branch
        %2268 = sbr.rel (%p2266) target = $region92
      $region91: #{sent_bert_forward.1} parent=83 // pred_region
        %v2269 = vld [vmem:[#allocation2] sm:$0xf]
        %v2270 = vld [vmem:[#allocation2 + $0x4] sm:$0xf]
        %2271 = vst.msk [vmem:[%s16] sm:$0xf] %vm1568, %v2269
        %2272 = vst.msk [vmem:[%s16 + $0x4] sm:$0xf] %vm1568, %v2270
      $region92: #{sent_bert_forward.1} parent=83 // pred_fallthru
        _
      // Predicated region
      $region93: #{sent_bert_forward.1} parent=83 // pred_check
        %p2273 = pneg %p436
      $region94: #{sent_bert_forward.1} parent=83 // pred_check_branch
        %2275 = sbr.rel (%p2273) target = $region96
      $region95: #{sent_bert_forward.1} parent=83 // pred_region
        _
      $region96: #{sent_bert_forward.1} parent=83 // pred_fallthru
        _
      // Predicated region
      $region97: #{sent_bert_forward.1} parent=83 // pred_check
        %p2276 = pneg %p436
      $region98: #{sent_bert_forward.1} parent=83 // pred_check_branch
        %2278 = sbr.rel (%p2276) target = $region100
      $region99: #{sent_bert_forward.1} parent=83 // pred_region
        _
      $region100: #{sent_bert_forward.1} parent=83 // pred_fallthru
        _
    $region84: #{sent_bert_forward.1} parent=5 // pred_fallthru
      _
    %p2279 = scmp.le.s32.totalorder 2, %s22
    // Predicated region
    $region101: #{sent_bert_forward.1} parent=5 // pred_check
      %p2280 = pneg %p2279
    $region102: #{sent_bert_forward.1} parent=5 // pred_check_branch
      %2282 = sbr.rel (%p2280) target = $region104
    $region103: #{sent_bert_forward.1} parent=5 // pred_region
      %s2283 = ssub.s32 %s22, 2
    $region104: #{sent_bert_forward.1} parent=5 // pred_fallthru
      _
  $region6: #{sent_bert_forward.1} parent=0 // loop_footer
    %s26 = sadd.s32 1, %s22
  $region7: #{sent_bert_forward.1} parent=0 // loop_footer_branch
    %21 = sbr.rel target = $region3
  $region8: #{sent_bert_forward.1} parent=0 // loop_exit
    _

</llo_original>
